<compile_context>
chip_gen: v7x
topology: tpu7x:2x2x1
jax: 0.10.0
libtpu: 0.0.40
codegen_flags: <defaults>
</compile_context>

<pallas_src>
import functools

import jax
import jax.numpy as jnp
import numpy as np
from jax import lax
from jax.experimental import pallas as pl
from jax.experimental.pallas import tpu as pltpu

EPS = 1e-5


def senet_block_kernel(x_ref, wa_ref, wb_hbm, ps_ref, o_ref,
                       wb_ref, sc_ref, dma_sem, *, n, h, w, planes, cout):
    f32, bf16 = jnp.float32, jnp.bfloat16
    R = n * h                              # rows in the wide (N*H, W*C) layout
    wp = w * planes                        # lane width of planes-wide activations
    wc = w * cout                          # lane width of cout-wide activations
    m2cols = 3 * wp
    inv_count = 1.0 / float(n * h * w)     # 1 / (elements per channel) for BN
    inv_hw = 1.0 / float(h * w)            # SE global average pool

    # ---- start streaming the conv2 / conv3 weights while conv1 runs ----
    cp_m2 = pltpu.make_async_copy(wb_hbm.at[:, 0:m2cols],
                                  wb_ref.at[:, 0:m2cols], dma_sem.at[0])
    cp_w3 = pltpu.make_async_copy(wb_hbm.at[:, m2cols:m2cols + wc],
                                  wb_ref.at[:, m2cols:m2cols + wc], dma_sem.at[1])
    cp_m2.start()
    cp_w3.start()

    # structural 0/1 group-sum operators, generated in-kernel (no DMA), exact in bf16
    def gsum(c):                        # (w*c, c):  [i, j] = 1  iff  i % c == j
        r = lax.broadcasted_iota(jnp.int32, (w * c, c), 0) % c
        col = lax.broadcasted_iota(jnp.int32, (w * c, c), 1)
        return (r == col).astype(bf16)

    def gsum_t(c):                      # (c, w*c):  [r, j] = 1  iff  j % c == r
        r = lax.broadcasted_iota(jnp.int32, (c, w * c), 0)
        col = lax.broadcasted_iota(jnp.int32, (c, w * c), 1) % c
        return (col == r).astype(bf16)

    def bn_relu_planes(t, gamma, beta):
        # Training-mode BN over (N,H,W) per channel, width = planes.
        # One stats matmul on [sum; sum_sq], scale/shift at (1, planes) width,
        # one broadcast matmul back to (1, W*planes).
        s = jnp.concatenate([jnp.sum(t, axis=0, keepdims=True),
                             jnp.sum(t * t, axis=0, keepdims=True)], axis=0)
        st = jnp.dot(s.astype(bf16), gsum(planes),
                     preferred_element_type=f32) * inv_count          # (2, planes)
        mean = st[0:1, :]
        var = st[1:2, :] - mean * mean
        scale = gamma * lax.rsqrt(var + EPS)
        shift = beta - mean * scale
        ssw = jnp.dot(jnp.concatenate([scale, shift], axis=0).astype(bf16),
                      gsum_t(planes), preferred_element_type=f32)     # (2, W*planes)
        return jnp.maximum(t * ssw[0:1, :] + ssw[1:2, :], 0.0)

    # ---- conv1 (1x1) and the shortcut 1x1 conv: one merged MXU pass over x ----
    big = jnp.dot(x_ref[...].astype(bf16), wa_ref[...],
                  preferred_element_type=f32)                          # (R, wp + wc)
    h1_raw = big[:, 0:wp]
    sc_raw = big[:, wp:]
    # take shortcut-BN statistics now, then park sc_raw in VMEM (frees ~16 vregs)
    sc_sums = jnp.concatenate([jnp.sum(sc_raw, axis=0, keepdims=True),
                               jnp.sum(sc_raw * sc_raw, axis=0, keepdims=True)],
                              axis=0)                                  # (2, wc)
    sc_ref[...] = sc_raw

    # bn1 + relu
    h1 = bn_relu_planes(h1_raw, ps_ref[0:1, 0:planes], ps_ref[1:2, 0:planes])

    # ---- conv2 (3x3, pad=1, stride=1) ----
    # Banded matmul handles the dx taps + channel mixing per kernel row; the dy taps
    # are a +/-1 sublane roll on the XLU plus an image-boundary mask (zero padding).
    cp_m2.wait()
    h2all = jnp.dot(h1.astype(bf16), wb_ref[:, 0:m2cols],
                    preferred_element_type=f32)                        # (R, 3*wp)
    row_in_img = lax.broadcasted_iota(jnp.int32, (R, wp), 0) % h
    up = jnp.where(row_in_img != 0,
                   pltpu.roll(h2all[:, 0:wp], shift=1, axis=0), 0.0)
    dn = jnp.where(row_in_img != (h - 1),
                   pltpu.roll(h2all[:, 2 * wp:3 * wp], shift=R - 1, axis=0), 0.0)
    h2_raw = up + h2all[:, wp:2 * wp] + dn

    # bn2 + relu
    h2 = bn_relu_planes(h2_raw, ps_ref[2:3, 0:planes], ps_ref[3:4, 0:planes])

    # ---- conv3 (1x1) ----
    cp_w3.wait()
    h3_raw = jnp.dot(h2.astype(bf16), wb_ref[:, m2cols:m2cols + wc],
                     preferred_element_type=f32)                       # (R, wc)

    # ---- bn3 + shortcut BN: stats and broadcast fused into single matmuls ----
    gc_m = gsum(cout)
    gct_m = gsum_t(cout)
    h3_sums = jnp.concatenate([jnp.sum(h3_raw, axis=0, keepdims=True),
                               jnp.sum(h3_raw * h3_raw, axis=0, keepdims=True)],
                              axis=0)                                  # (2, wc)
    stacked = jnp.concatenate([h3_sums[0:1], sc_sums[0:1],
                               h3_sums[1:2], sc_sums[1:2]], axis=0)    # (4, wc)
    st = jnp.dot(stacked.astype(bf16), gc_m,
                 preferred_element_type=f32) * inv_count               # (4, cout)
    mean = st[0:2, :]                                                  # [mean3; meanS]
    var = st[2:4, :] - mean * mean
    gamma = ps_ref[4:6, :]                                             # [g3; gs]
    beta = ps_ref[6:8, :]                                              # [b3; bs]
    scale = gamma * lax.rsqrt(var + EPS)
    shift = beta - mean * scale
    bc = jnp.dot(jnp.concatenate([scale, shift], axis=0).astype(bf16),
                 gct_m, preferred_element_type=f32)                    # (4, wc)
    # bc rows: [scale3_w, scaleS_w, shift3_w, shiftS_w]
    h3a = jnp.maximum(h3_raw * bc[0:1, :] + bc[2:3, :], 0.0)           # relu(bn3)

    # ---- squeeze & excite: global avg pool -> fc1 -> relu -> fc2 -> sigmoid ----
    pools = [jnp.sum(h3a[i * h:(i + 1) * h, :], axis=0, keepdims=True)
             for i in range(n)]
    pool_wide = jnp.concatenate(pools, axis=0)                         # (n, wc)
    pooled = jnp.dot(pool_wide.astype(bf16), gc_m,
                     preferred_element_type=f32) * inv_hw              # (n, cout)
    fc1w = ps_ref[8:8 + cout, :]
    fc2w = ps_ref[8 + cout:8 + 2 * cout, :]
    fc1b = ps_ref[8 + 2 * cout:9 + 2 * cout, :]
    fc2b = ps_ref[9 + 2 * cout:10 + 2 * cout, :]
    z = jnp.maximum(jnp.dot(pooled, fc1w, preferred_element_type=f32) + fc1b, 0.0)
    w_se = jax.nn.sigmoid(jnp.dot(z, fc2w, preferred_element_type=f32) + fc2b)
    w_wide = jnp.dot(w_se.astype(bf16), gct_m, preferred_element_type=f32)  # (n, wc)

    # ---- SE scale + shortcut BN + residual + relu: lane-dense per-image stores ----
    for img in range(n):
        r0 = img * h
        sc_img = sc_ref[pl.ds(r0, h), :] * bc[1:2, :] + bc[3:4, :]
        o_ref[pl.ds(r0, h), :] = jnp.maximum(
            h3a[r0:r0 + h, :] * w_wide[img:img + 1, :] + sc_img, 0.0)


# ------------------------- host-side parameter preparation -------------------------

def _block_diag(wm, w):
    # (Cin_blk, Cout_blk) -> (w*Cin_blk, w*Cout_blk) block-diagonal replication.
    cin_b, cout_b = wm.shape
    return jnp.einsum('ab,ij->aibj', jnp.eye(w, dtype=wm.dtype),
                      wm).reshape(w * cin_b, w * cout_b)


def _shift_eye(w, d):
    # (w, w) with S[i, j] = 1 iff i == j + d  (out-of-range entries dropped -> zero pad)
    m = np.zeros((w, w), np.float32)
    for j in range(w):
        i = j + d
        if 0 <= i < w:
            m[i, j] = 1.0
    return jnp.asarray(m)


def _band_matrix(w2_oihw, ky, w):
    # (W*planes_in, W*planes_out) operator applying kernel row `ky` of a 3x3 conv
    # (pad=1, stride=1) in the wide (.., w*C + c) lane layout.
    p_out, p_in = w2_oihw.shape[0], w2_oihw.shape[1]
    m = jnp.zeros((w * p_in, w * p_out), jnp.float32)
    for kx in range(3):
        blk = w2_oihw[:, :, ky, kx].T                         # (ci, co)
        m = m + jnp.einsum('ab,ij->aibj', _shift_eye(w, kx - 1),
                           blk).reshape(w * p_in, w * p_out)
    return m


def prepare_params(raw, n, h, w):
    planes = raw["w1"].shape[0]
    cout = raw["w3"].shape[0]
    hidden = raw["fc1w"].shape[0]

    w1m = raw["w1"][:, :, 0, 0].T            # (Cin, planes)
    wsm = raw["ws"][:, :, 0, 0].T            # (Cin, cout)
    w3m = raw["w3"][:, :, 0, 0].T            # (planes, cout)

    # slab A: conv1 + shortcut conv share the LHS -> one merged block-diagonal weight
    # (needed immediately, so it rides the normal auto-VMEM input DMA).
    wa = jnp.concatenate([_block_diag(w1m, w), _block_diag(wsm, w)],
                         axis=1).astype(jnp.bfloat16)          # (w*Cin, w*(planes+cout))
    # slab B: conv2 band matrices | conv3 weight, streamed into VMEM inside the kernel.
    m2s = jnp.concatenate([_band_matrix(raw["w2"], ky, w) for ky in range(3)], axis=1)
    wb = jnp.concatenate([m2s, _block_diag(w3m, w)],
                         axis=1).astype(jnp.bfloat16)          # (w*planes, 3*w*p + w*cout)

    def row(v):
        v = jnp.asarray(v, jnp.float32).reshape(1, -1)
        return jnp.pad(v, ((0, 0), (0, cout - v.shape[1])))

    # fc1/fc2 padded to square (cout, cout) so no sub-lane slicing is needed.
    fc1m = jnp.pad(raw["fc1w"].T, ((0, 0), (0, cout - hidden)))
    fc2m = jnp.pad(raw["fc2w"].T, ((0, cout - hidden), (0, 0)))
    pslab = jnp.concatenate(
        [row(raw["g1"]), row(raw["b1"]), row(raw["g2"]), row(raw["b2"]),
         row(raw["g3"]), row(raw["gs"]), row(raw["b3"]), row(raw["bs"]),
         fc1m, fc2m, row(raw["fc1b"]), row(raw["fc2b"])],
        axis=0).astype(jnp.float32)                            # (10 + 2*cout, cout)

    return dict(wa=wa, wb=wb, pslab=pslab, planes=planes, cout=cout)


def senet_bottleneck(x_nchw, params):
    # TODO(synk): only the stride=1 configuration is implemented; stride=2 would need
    # strided band matrices / row shifts and a strided shortcut.
    # TODO(synk): at realistic sizes add a row-tile grid axis with
    # dimension_semantics=("parallel",...) (v7x megacore) and a two-pass BN; and keep
    # chained blocks in the wide (N*H, W*C) layout instead of transposing back to NCHW.
    N, Cin, H, W = x_nchw.shape
    planes, cout = params["planes"], params["cout"]

    # wide, lane-dense layout: (N*H, W*C)
    x_wide = jnp.transpose(x_nchw, (0, 2, 3, 1)).reshape(N * H, W * Cin)

    vmem = pl.BlockSpec(memory_space=pltpu.MemorySpace.VMEM)
    kernel = functools.partial(senet_block_kernel, n=N, h=H, w=W,
                               planes=planes, cout=cout)
    out_wide = pl.pallas_call(
        kernel,
        out_shape=jax.ShapeDtypeStruct((N * H, W * cout), jnp.float32),
        in_specs=[vmem,                                  # x_wide
                  vmem,                                  # wa (needed immediately)
                  pl.BlockSpec(memory_space=pl.ANY),     # wb (streamed in-kernel)
                  vmem],                                 # pslab
        out_specs=vmem,
        scratch_shapes=[pltpu.VMEM(params["wb"].shape, jnp.bfloat16),   # wb landing buf
                        pltpu.VMEM((N * H, W * cout), jnp.float32),     # parked sc_raw
                        pltpu.SemaphoreType.DMA((2,))],
    )(x_wide, params["wa"], params["wb"], params["pslab"])

    # layout plumbing back to NCHW (only for the standalone test)
    return jnp.transpose(out_wide.reshape(N, H, W, cout), (0, 3, 1, 2))


# -------------------------------- reference & test ---------------------------------

def init_raw_params(key, in_planes, planes, r):
    """Deterministic synthetic parameters in PyTorch layouts."""
    exp = 4
    cout = planes * exp
    hidden = cout // r
    ks = jax.random.split(key, 16)

    def nrm(k, shape, scale=0.2):
        return scale * jax.random.normal(k, shape, jnp.float32)

    return dict(
        w1=nrm(ks[0], (planes, in_planes, 1, 1)),
        w2=nrm(ks[1], (planes, planes, 3, 3)),
        w3=nrm(ks[2], (cout, planes, 1, 1)),
        ws=nrm(ks[3], (cout, in_planes, 1, 1)),
        g1=1.0 + nrm(ks[4], (planes,)), b1=nrm(ks[5], (planes,)),
        g2=1.0 + nrm(ks[6], (planes,)), b2=nrm(ks[7], (planes,)),
        g3=1.0 + nrm(ks[8], (cout,)), b3=nrm(ks[9], (cout,)),
        gs=1.0 + nrm(ks[10], (cout,)), bs=nrm(ks[11], (cout,)),
        fc1w=nrm(ks[12], (hidden, cout)), fc1b=nrm(ks[13], (hidden,)),
        fc2w=nrm(ks[14], (cout, hidden)), fc2b=nrm(ks[15], (cout,)),
    )


def ref_forward(x, raw):
    """Pure-JAX NCHW reference mirroring the torch forward (training-mode BN)."""
    def conv(x, w, stride=1, pad=0):
        return lax.conv_general_dilated(
            x, w, (stride, stride), [(pad, pad), (pad, pad)],
            dimension_numbers=("NCHW", "OIHW", "NCHW"))

    def bn(x, g, b):
        mean = jnp.mean(x, axis=(0, 2, 3), keepdims=True)
        var = jnp.mean((x - mean) ** 2, axis=(0, 2, 3), keepdims=True)
        return (x - mean) / jnp.sqrt(var + EPS) * g[None, :, None, None] + b[None, :, None, None]

    relu = jax.nn.relu
    sc = bn(conv(x, raw["ws"]), raw["gs"], raw["bs"])
    out = relu(bn(conv(x, raw["w1"]), raw["g1"], raw["b1"]))
    out = relu(bn(conv(out, raw["w2"], pad=1), raw["g2"], raw["b2"]))
    out = relu(bn(conv(out, raw["w3"]), raw["g3"], raw["b3"]))
    w = jnp.mean(out, axis=(2, 3))
    w = relu(w @ raw["fc1w"].T + raw["fc1b"])
    w = jax.nn.sigmoid(w @ raw["fc2w"].T + raw["fc2b"])
    return relu(out * w[:, :, None, None] + sc)


if __name__ == "__main__":
    key = jax.random.PRNGKey(0)
    kx, kp = jax.random.split(key)

    N, in_planes, planes, H, W, r = 2, 8, 8, 16, 16, 4
    x = jax.random.normal(kx, (N, in_planes, H, W), jnp.float32)
    raw = init_raw_params(kp, in_planes, planes, r)
    params = prepare_params(raw, N, H, W)

    out = jax.block_until_ready(senet_bottleneck(x, params))
    ref = jax.block_until_ready(ref_forward(x, raw))

    # conv matmuls + BN stats/broadcast matmuls use bf16 operands (f32 accumulate)
    # -> slightly loosened tolerance vs. a pure-f32 reference.
    np.testing.assert_allclose(np.asarray(out), np.asarray(ref), rtol=4e-2, atol=4e-2)
    print("KERNEL_OK")
</pallas_src>

<mosaic_0001>
module attributes {stable_mosaic.version = 11 : i64} {
  func.func @senet_block_kernel(%arg0: memref<32x128xf32, #tpu.memory_space<vmem>>, %arg1: memref<128x640xbf16, #tpu.memory_space<vmem>>, %arg2: memref<128x896xbf16, #tpu.memory_space<any>>, %arg3: memref<74x32xf32, #tpu.memory_space<vmem>>, %arg4: memref<32x512xf32, #tpu.memory_space<vmem>>, %arg5: memref<128x896xbf16, #tpu.memory_space<vmem>>, %arg6: memref<32x512xf32, #tpu.memory_space<vmem>>, %arg7: memref<2x!tpu.dma_semaphore, #tpu.memory_space<semaphore_mem>>) attributes {dimension_semantics = [], scalar_prefetch = 0 : i64, scratch_operands = 3 : i64, tpu.core_type = #tpu.core_type<tc>} {
    %c0_i32 = arith.constant 0 : i32
    %c0_i32_0 = arith.constant 0 : i32
    %c0_i32_1 = arith.constant 0 : i32
    %0 = tpu.memref_slice %arg2[%c0_i32_0, %c0_i32_1] : memref<128x896xbf16, #tpu.memory_space<any>> -> memref<128x384xbf16, #tpu.memory_space<any>>
    %c0_i32_2 = arith.constant 0 : i32
    %c0_i32_3 = arith.constant 0 : i32
    %1 = tpu.memref_slice %arg5[%c0_i32_2, %c0_i32_3] : memref<128x896xbf16, #tpu.memory_space<vmem>> -> memref<128x384xbf16, #tpu.memory_space<vmem>>
    %2 = tpu.memref_slice %arg7[%c0_i32] : memref<2x!tpu.dma_semaphore, #tpu.memory_space<semaphore_mem>> -> memref<1x!tpu.dma_semaphore, #tpu.memory_space<semaphore_mem>>
    %3 = tpu.memref_squeeze %2 : memref<1x!tpu.dma_semaphore, #tpu.memory_space<semaphore_mem>> -> memref<!tpu.dma_semaphore, #tpu.memory_space<semaphore_mem>>
    tpu.enqueue_dma source(%0 : memref<128x384xbf16, #tpu.memory_space<any>>) target(%1 : memref<128x384xbf16, #tpu.memory_space<vmem>>) target_semaphore(%3 : memref<!tpu.dma_semaphore, #tpu.memory_space<semaphore_mem>>)
    %c1_i32 = arith.constant 1 : i32
    %c0_i32_4 = arith.constant 0 : i32
    %c384_i32 = arith.constant 384 : i32
    %4 = tpu.memref_slice %arg2[%c0_i32_4, %c384_i32] : memref<128x896xbf16, #tpu.memory_space<any>> -> memref<128x512xbf16, #tpu.memory_space<any>>
    %c0_i32_5 = arith.constant 0 : i32
    %c384_i32_6 = arith.constant 384 : i32
    %5 = tpu.memref_slice %arg5[%c0_i32_5, %c384_i32_6] : memref<128x896xbf16, #tpu.memory_space<vmem>> -> memref<128x512xbf16, #tpu.memory_space<vmem>>
    %6 = tpu.memref_slice %arg7[%c1_i32] : memref<2x!tpu.dma_semaphore, #tpu.memory_space<semaphore_mem>> -> memref<1x!tpu.dma_semaphore, #tpu.memory_space<semaphore_mem>>
    %7 = tpu.memref_squeeze %6 : memref<1x!tpu.dma_semaphore, #tpu.memory_space<semaphore_mem>> -> memref<!tpu.dma_semaphore, #tpu.memory_space<semaphore_mem>>
    tpu.enqueue_dma source(%4 : memref<128x512xbf16, #tpu.memory_space<any>>) target(%5 : memref<128x512xbf16, #tpu.memory_space<vmem>>) target_semaphore(%7 : memref<!tpu.dma_semaphore, #tpu.memory_space<semaphore_mem>>)
    %c0 = arith.constant 0 : index
    %c0_7 = arith.constant 0 : index
    %8 = vector.load %arg0[%c0, %c0_7] : memref<32x128xf32, #tpu.memory_space<vmem>>, vector<32x128xf32>
    %9 = arith.truncf %8 : vector<32x128xf32> to vector<32x128xbf16>
    %c0_8 = arith.constant 0 : index
    %c0_9 = arith.constant 0 : index
    %10 = vector.load %arg1[%c0_8, %c0_9] : memref<128x640xbf16, #tpu.memory_space<vmem>>, vector<128x640xbf16>
    %cst = arith.constant dense<0.000000e+00> : vector<32x640xf32>
    %11 = tpu.matmul %9, %10, %cst {dimension_numbers = #tpu.dot_dimension_numbers<[1], [0], [0], [1], [0, 0, 1, 1], [], []>} : vector<32x128xbf16>, vector<128x640xbf16>, vector<32x640xf32> -> vector<32x640xf32>
    %12 = vector.extract_strided_slice %11 {offsets = [0, 0], sizes = [32, 128], strides = [1, 1]} : vector<32x640xf32> to vector<32x128xf32>
    %13 = vector.extract_strided_slice %11 {offsets = [0, 128], sizes = [32, 512], strides = [1, 1]} : vector<32x640xf32> to vector<32x512xf32>
    %cst_10 = arith.constant dense<0.000000e+00> : vector<512xf32>
    %14 = vector.multi_reduction <add>, %13, %cst_10 [0] : vector<32x512xf32> to vector<512xf32>
    %15 = vector.shape_cast %14 : vector<512xf32> to vector<1x512xf32>
    %16 = arith.mulf %13, %13 : vector<32x512xf32>
    %cst_11 = arith.constant dense<0.000000e+00> : vector<512xf32>
    %17 = vector.multi_reduction <add>, %16, %cst_11 [0] : vector<32x512xf32> to vector<512xf32>
    %18 = vector.shape_cast %17 : vector<512xf32> to vector<1x512xf32>
    %19 = tpu.concatenate %15, %18 in 0 : vector<1x512xf32>, vector<1x512xf32> -> vector<2x512xf32>
    %c0_12 = arith.constant 0 : index
    %c0_13 = arith.constant 0 : index
    %20 = vector.load %arg6[%c0_12, %c0_13] : memref<32x512xf32, #tpu.memory_space<vmem>>, vector<32x512xf32>
    tpu.vector_store %arg6[%c0_12, %c0_13], %13 {strides = array<i32>} : memref<32x512xf32, #tpu.memory_space<vmem>>, vector<32x512xf32>,
    %c0_14 = arith.constant 0 : index
    %c0_15 = arith.constant 0 : index
    %21 = vector.load %arg3[%c0_14, %c0_15] : memref<74x32xf32, #tpu.memory_space<vmem>>, vector<1x8xf32>
    %c1 = arith.constant 1 : index
    %c0_16 = arith.constant 0 : index
    %22 = vector.load %arg3[%c1, %c0_16] : memref<74x32xf32, #tpu.memory_space<vmem>>, vector<1x8xf32>
    %cst_17 = arith.constant dense<0.000000e+00> : vector<128xf32>
    %23 = vector.multi_reduction <add>, %12, %cst_17 [0] : vector<32x128xf32> to vector<128xf32>
    %24 = vector.shape_cast %23 : vector<128xf32> to vector<1x128xf32>
    %25 = arith.mulf %12, %12 : vector<32x128xf32>
    %cst_18 = arith.constant dense<0.000000e+00> : vector<128xf32>
    %26 = vector.multi_reduction <add>, %25, %cst_18 [0] : vector<32x128xf32> to vector<128xf32>
    %27 = vector.shape_cast %26 : vector<128xf32> to vector<1x128xf32>
    %28 = tpu.concatenate %24, %27 in 0 : vector<1x128xf32>, vector<1x128xf32> -> vector<2x128xf32>
    %29 = arith.truncf %28 : vector<2x128xf32> to vector<2x128xbf16>
    %30 = tpu.iota {dimensions = array<i32: 0>} : vector<128x8xi32>
    %c8_i32 = arith.constant 8 : i32
    %c0_i32_19 = arith.constant 0 : i32
    %31 = arith.cmpi eq, %c8_i32, %c0_i32_19 : i32
    %c1_i32_20 = arith.constant 1 : i32
    %32 = arith.select %31, %c1_i32_20, %c8_i32 : i32
    %33 = vector.broadcast %32 : i32 to vector<128x8xi32>
    %34 = arith.remsi %30, %33 : vector<128x8xi32>
    %c0_i32_21 = arith.constant 0 : i32
    %35 = vector.broadcast %c0_i32_21 : i32 to vector<128x8xi32>
    %36 = arith.cmpi ne, %34, %35 : vector<128x8xi32>
    %c0_i32_22 = arith.constant 0 : i32
    %37 = vector.broadcast %c0_i32_22 : i32 to vector<128x8xi32>
    %38 = arith.cmpi slt, %34, %37 : vector<128x8xi32>
    %c0_i32_23 = arith.constant 0 : i32
    %39 = arith.cmpi slt, %32, %c0_i32_23 : i32
    %40 = vector.broadcast %39 : i1 to vector<128x8xi1>
    %41 = vector.broadcast %40 : vector<128x8xi1> to vector<128x8xi1>
    %42 = arith.xori %38, %41 : vector<128x8xi1>
    %43 = arith.andi %42, %36 : vector<128x8xi1>
    %44 = vector.broadcast %32 : i32 to vector<128x8xi32>
    %45 = arith.addi %34, %44 : vector<128x8xi32>
    %46 = arith.select %43, %45, %34 : vector<128x8xi1>, vector<128x8xi32>
    %47 = tpu.iota {dimensions = array<i32: 1>} : vector<128x8xi32>
    %48 = arith.cmpi eq, %46, %47 : vector<128x8xi32>
    %49 = arith.extui %48 : vector<128x8xi1> to vector<128x8xi32>
    %50 = arith.sitofp %49 : vector<128x8xi32> to vector<128x8xf32>
    %51 = arith.truncf %50 : vector<128x8xf32> to vector<128x8xbf16>
    %cst_24 = arith.constant dense<0.000000e+00> : vector<2x8xf32>
    %52 = tpu.matmul %29, %51, %cst_24 {dimension_numbers = #tpu.dot_dimension_numbers<[1], [0], [0], [1], [0, 0, 1, 1], [], []>} : vector<2x128xbf16>, vector<128x8xbf16>, vector<2x8xf32> -> vector<2x8xf32>
    %cst_25 = arith.constant 0.001953125 : f32
    %53 = vector.broadcast %cst_25 : f32 to vector<2x8xf32>
    %54 = arith.mulf %52, %53 : vector<2x8xf32>
    %55 = vector.extract_strided_slice %54 {offsets = [0, 0], sizes = [1, 8], strides = [1, 1]} : vector<2x8xf32> to vector<1x8xf32>
    %56 = vector.extract_strided_slice %54 {offsets = [1, 0], sizes = [1, 8], strides = [1, 1]} : vector<2x8xf32> to vector<1x8xf32>
    %57 = arith.mulf %55, %55 : vector<1x8xf32>
    %58 = arith.subf %56, %57 : vector<1x8xf32>
    %cst_26 = arith.constant 9.99999974E-6 : f32
    %59 = vector.broadcast %cst_26 : f32 to vector<1x8xf32>
    %60 = arith.addf %58, %59 : vector<1x8xf32>
    %61 = math.rsqrt %60 : vector<1x8xf32>
    %62 = arith.mulf %21, %61 : vector<1x8xf32>
    %63 = arith.mulf %55, %62 : vector<1x8xf32>
    %64 = arith.subf %22, %63 : vector<1x8xf32>
    %65 = tpu.concatenate %62, %64 in 0 : vector<1x8xf32>, vector<1x8xf32> -> vector<2x8xf32>
    %66 = arith.truncf %65 : vector<2x8xf32> to vector<2x8xbf16>
    %67 = tpu.iota {dimensions = array<i32: 0>} : vector<8x128xi32>
    %68 = tpu.iota {dimensions = array<i32: 1>} : vector<8x128xi32>
    %c8_i32_27 = arith.constant 8 : i32
    %c0_i32_28 = arith.constant 0 : i32
    %69 = arith.cmpi eq, %c8_i32_27, %c0_i32_28 : i32
    %c1_i32_29 = arith.constant 1 : i32
    %70 = arith.select %69, %c1_i32_29, %c8_i32_27 : i32
    %71 = vector.broadcast %70 : i32 to vector<8x128xi32>
    %72 = arith.remsi %68, %71 : vector<8x128xi32>
    %c0_i32_30 = arith.constant 0 : i32
    %73 = vector.broadcast %c0_i32_30 : i32 to vector<8x128xi32>
    %74 = arith.cmpi ne, %72, %73 : vector<8x128xi32>
    %c0_i32_31 = arith.constant 0 : i32
    %75 = vector.broadcast %c0_i32_31 : i32 to vector<8x128xi32>
    %76 = arith.cmpi slt, %72, %75 : vector<8x128xi32>
    %c0_i32_32 = arith.constant 0 : i32
    %77 = arith.cmpi slt, %70, %c0_i32_32 : i32
    %78 = vector.broadcast %77 : i1 to vector<8x128xi1>
    %79 = vector.broadcast %78 : vector<8x128xi1> to vector<8x128xi1>
    %80 = arith.xori %76, %79 : vector<8x128xi1>
    %81 = arith.andi %80, %74 : vector<8x128xi1>
    %82 = vector.broadcast %70 : i32 to vector<8x128xi32>
    %83 = arith.addi %72, %82 : vector<8x128xi32>
    %84 = arith.select %81, %83, %72 : vector<8x128xi1>, vector<8x128xi32>
    %85 = arith.cmpi eq, %84, %67 : vector<8x128xi32>
    %86 = arith.extui %85 : vector<8x128xi1> to vector<8x128xi32>
    %87 = arith.sitofp %86 : vector<8x128xi32> to vector<8x128xf32>
    %88 = arith.truncf %87 : vector<8x128xf32> to vector<8x128xbf16>
    %cst_33 = arith.constant dense<0.000000e+00> : vector<2x128xf32>
    %89 = tpu.matmul %66, %88, %cst_33 {dimension_numbers = #tpu.dot_dimension_numbers<[1], [0], [0], [1], [0, 0, 1, 1], [], []>} : vector<2x8xbf16>, vector<8x128xbf16>, vector<2x128xf32> -> vector<2x128xf32>
    %90 = vector.extract_strided_slice %89 {offsets = [0, 0], sizes = [1, 128], strides = [1, 1]} : vector<2x128xf32> to vector<1x128xf32>
    %91 = vector.broadcast %90 : vector<1x128xf32> to vector<32x128xf32>
    %92 = arith.mulf %12, %91 : vector<32x128xf32>
    %93 = vector.extract_strided_slice %89 {offsets = [1, 0], sizes = [1, 128], strides = [1, 1]} : vector<2x128xf32> to vector<1x128xf32>
    %94 = vector.broadcast %93 : vector<1x128xf32> to vector<32x128xf32>
    %95 = arith.addf %92, %94 : vector<32x128xf32>
    %cst_34 = arith.constant 0.000000e+00 : f32
    %96 = vector.broadcast %cst_34 : f32 to vector<32x128xf32>
    %97 = arith.maximumf %95, %96 : vector<32x128xf32>
    %c0_i32_35 = arith.constant 0 : i32
    %c0_i32_36 = arith.constant 0 : i32
    %c0_i32_37 = arith.constant 0 : i32
    %98 = tpu.memref_slice %arg2[%c0_i32_36, %c0_i32_37] : memref<128x896xbf16, #tpu.memory_space<any>> -> memref<128x384xbf16, #tpu.memory_space<any>>
    %c0_i32_38 = arith.constant 0 : i32
    %c0_i32_39 = arith.constant 0 : i32
    %99 = tpu.memref_slice %arg5[%c0_i32_38, %c0_i32_39] : memref<128x896xbf16, #tpu.memory_space<vmem>> -> memref<128x384xbf16, #tpu.memory_space<vmem>>
    %100 = tpu.memref_slice %arg7[%c0_i32_35] : memref<2x!tpu.dma_semaphore, #tpu.memory_space<semaphore_mem>> -> memref<1x!tpu.dma_semaphore, #tpu.memory_space<semaphore_mem>>
    %101 = tpu.memref_squeeze %100 : memref<1x!tpu.dma_semaphore, #tpu.memory_space<semaphore_mem>> -> memref<!tpu.dma_semaphore, #tpu.memory_space<semaphore_mem>>
    tpu.wait_dma2 semaphore(%101 : memref<!tpu.dma_semaphore, #tpu.memory_space<semaphore_mem>>) src(%98 : memref<128x384xbf16, #tpu.memory_space<any>>) dst(%99 : memref<128x384xbf16, #tpu.memory_space<vmem>>)
    %102 = arith.truncf %97 : vector<32x128xf32> to vector<32x128xbf16>
    %c0_40 = arith.constant 0 : index
    %c0_41 = arith.constant 0 : index
    %103 = vector.load %arg5[%c0_40, %c0_41] : memref<128x896xbf16, #tpu.memory_space<vmem>>, vector<128x384xbf16>
    %cst_42 = arith.constant dense<0.000000e+00> : vector<32x384xf32>
    %104 = tpu.matmul %102, %103, %cst_42 {dimension_numbers = #tpu.dot_dimension_numbers<[1], [0], [0], [1], [0, 0, 1, 1], [], []>} : vector<32x128xbf16>, vector<128x384xbf16>, vector<32x384xf32> -> vector<32x384xf32>
    %105 = tpu.iota {dimensions = array<i32: 0>} : vector<32x128xi32>
    %c16_i32 = arith.constant 16 : i32
    %c0_i32_43 = arith.constant 0 : i32
    %106 = arith.cmpi eq, %c16_i32, %c0_i32_43 : i32
    %c1_i32_44 = arith.constant 1 : i32
    %107 = arith.select %106, %c1_i32_44, %c16_i32 : i32
    %108 = vector.broadcast %107 : i32 to vector<32x128xi32>
    %109 = arith.remsi %105, %108 : vector<32x128xi32>
    %c0_i32_45 = arith.constant 0 : i32
    %110 = vector.broadcast %c0_i32_45 : i32 to vector<32x128xi32>
    %111 = arith.cmpi ne, %109, %110 : vector<32x128xi32>
    %c0_i32_46 = arith.constant 0 : i32
    %112 = vector.broadcast %c0_i32_46 : i32 to vector<32x128xi32>
    %113 = arith.cmpi slt, %109, %112 : vector<32x128xi32>
    %c0_i32_47 = arith.constant 0 : i32
    %114 = arith.cmpi slt, %107, %c0_i32_47 : i32
    %115 = vector.broadcast %114 : i1 to vector<32x128xi1>
    %116 = vector.broadcast %115 : vector<32x128xi1> to vector<32x128xi1>
    %117 = arith.xori %113, %116 : vector<32x128xi1>
    %118 = arith.andi %117, %111 : vector<32x128xi1>
    %119 = vector.broadcast %107 : i32 to vector<32x128xi32>
    %120 = arith.addi %109, %119 : vector<32x128xi32>
    %121 = arith.select %118, %120, %109 : vector<32x128xi1>, vector<32x128xi32>
    %c0_i32_48 = arith.constant 0 : i32
    %122 = vector.broadcast %c0_i32_48 : i32 to vector<32x128xi32>
    %123 = arith.cmpi ne, %121, %122 : vector<32x128xi32>
    %124 = vector.extract_strided_slice %104 {offsets = [0, 0], sizes = [32, 128], strides = [1, 1]} : vector<32x384xf32> to vector<32x128xf32>
    %c1_i32_49 = arith.constant 1 : i32
    %125 = tpu.dynamic_rotate %124 by %c1_i32_49 dim 0 : vector<32x128xf32>, i32 -> vector<32x128xf32>
    %cst_50 = arith.constant 0.000000e+00 : f32
    %126 = vector.broadcast %cst_50 : f32 to vector<32x128xf32>
    %127 = arith.select %123, %125, %126 : vector<32x128xi1>, vector<32x128xf32>
    %c15_i32 = arith.constant 15 : i32
    %128 = vector.broadcast %c15_i32 : i32 to vector<32x128xi32>
    %129 = arith.cmpi ne, %121, %128 : vector<32x128xi32>
    %130 = vector.extract_strided_slice %104 {offsets = [0, 256], sizes = [32, 128], strides = [1, 1]} : vector<32x384xf32> to vector<32x128xf32>
    %c31_i32 = arith.constant 31 : i32
    %131 = tpu.dynamic_rotate %130 by %c31_i32 dim 0 : vector<32x128xf32>, i32 -> vector<32x128xf32>
    %cst_51 = arith.constant 0.000000e+00 : f32
    %132 = vector.broadcast %cst_51 : f32 to vector<32x128xf32>
    %133 = arith.select %129, %131, %132 : vector<32x128xi1>, vector<32x128xf32>
    %134 = vector.extract_strided_slice %104 {offsets = [0, 128], sizes = [32, 128], strides = [1, 1]} : vector<32x384xf32> to vector<32x128xf32>
    %135 = arith.addf %127, %134 : vector<32x128xf32>
    %136 = arith.addf %135, %133 : vector<32x128xf32>
    %c2 = arith.constant 2 : index
    %c0_52 = arith.constant 0 : index
    %137 = vector.load %arg3[%c2, %c0_52] : memref<74x32xf32, #tpu.memory_space<vmem>>, vector<1x8xf32>
    %c3 = arith.constant 3 : index
    %c0_53 = arith.constant 0 : index
    %138 = vector.load %arg3[%c3, %c0_53] : memref<74x32xf32, #tpu.memory_space<vmem>>, vector<1x8xf32>
    %cst_54 = arith.constant dense<0.000000e+00> : vector<128xf32>
    %139 = vector.multi_reduction <add>, %136, %cst_54 [0] : vector<32x128xf32> to vector<128xf32>
    %140 = vector.shape_cast %139 : vector<128xf32> to vector<1x128xf32>
    %141 = arith.mulf %136, %136 : vector<32x128xf32>
    %cst_55 = arith.constant dense<0.000000e+00> : vector<128xf32>
    %142 = vector.multi_reduction <add>, %141, %cst_55 [0] : vector<32x128xf32> to vector<128xf32>
    %143 = vector.shape_cast %142 : vector<128xf32> to vector<1x128xf32>
    %144 = tpu.concatenate %140, %143 in 0 : vector<1x128xf32>, vector<1x128xf32> -> vector<2x128xf32>
    %145 = arith.truncf %144 : vector<2x128xf32> to vector<2x128xbf16>
    %146 = tpu.iota {dimensions = array<i32: 0>} : vector<128x8xi32>
    %c8_i32_56 = arith.constant 8 : i32
    %c0_i32_57 = arith.constant 0 : i32
    %147 = arith.cmpi eq, %c8_i32_56, %c0_i32_57 : i32
    %c1_i32_58 = arith.constant 1 : i32
    %148 = arith.select %147, %c1_i32_58, %c8_i32_56 : i32
    %149 = vector.broadcast %148 : i32 to vector<128x8xi32>
    %150 = arith.remsi %146, %149 : vector<128x8xi32>
    %c0_i32_59 = arith.constant 0 : i32
    %151 = vector.broadcast %c0_i32_59 : i32 to vector<128x8xi32>
    %152 = arith.cmpi ne, %150, %151 : vector<128x8xi32>
    %c0_i32_60 = arith.constant 0 : i32
    %153 = vector.broadcast %c0_i32_60 : i32 to vector<128x8xi32>
    %154 = arith.cmpi slt, %150, %153 : vector<128x8xi32>
    %c0_i32_61 = arith.constant 0 : i32
    %155 = arith.cmpi slt, %148, %c0_i32_61 : i32
    %156 = vector.broadcast %155 : i1 to vector<128x8xi1>
    %157 = vector.broadcast %156 : vector<128x8xi1> to vector<128x8xi1>
    %158 = arith.xori %154, %157 : vector<128x8xi1>
    %159 = arith.andi %158, %152 : vector<128x8xi1>
    %160 = vector.broadcast %148 : i32 to vector<128x8xi32>
    %161 = arith.addi %150, %160 : vector<128x8xi32>
    %162 = arith.select %159, %161, %150 : vector<128x8xi1>, vector<128x8xi32>
    %163 = tpu.iota {dimensions = array<i32: 1>} : vector<128x8xi32>
    %164 = arith.cmpi eq, %162, %163 : vector<128x8xi32>
    %165 = arith.extui %164 : vector<128x8xi1> to vector<128x8xi32>
    %166 = arith.sitofp %165 : vector<128x8xi32> to vector<128x8xf32>
    %167 = arith.truncf %166 : vector<128x8xf32> to vector<128x8xbf16>
    %cst_62 = arith.constant dense<0.000000e+00> : vector<2x8xf32>
    %168 = tpu.matmul %145, %167, %cst_62 {dimension_numbers = #tpu.dot_dimension_numbers<[1], [0], [0], [1], [0, 0, 1, 1], [], []>} : vector<2x128xbf16>, vector<128x8xbf16>, vector<2x8xf32> -> vector<2x8xf32>
    %cst_63 = arith.constant 0.001953125 : f32
    %169 = vector.broadcast %cst_63 : f32 to vector<2x8xf32>
    %170 = arith.mulf %168, %169 : vector<2x8xf32>
    %171 = vector.extract_strided_slice %170 {offsets = [0, 0], sizes = [1, 8], strides = [1, 1]} : vector<2x8xf32> to vector<1x8xf32>
    %172 = vector.extract_strided_slice %170 {offsets = [1, 0], sizes = [1, 8], strides = [1, 1]} : vector<2x8xf32> to vector<1x8xf32>
    %173 = arith.mulf %171, %171 : vector<1x8xf32>
    %174 = arith.subf %172, %173 : vector<1x8xf32>
    %cst_64 = arith.constant 9.99999974E-6 : f32
    %175 = vector.broadcast %cst_64 : f32 to vector<1x8xf32>
    %176 = arith.addf %174, %175 : vector<1x8xf32>
    %177 = math.rsqrt %176 : vector<1x8xf32>
    %178 = arith.mulf %137, %177 : vector<1x8xf32>
    %179 = arith.mulf %171, %178 : vector<1x8xf32>
    %180 = arith.subf %138, %179 : vector<1x8xf32>
    %181 = tpu.concatenate %178, %180 in 0 : vector<1x8xf32>, vector<1x8xf32> -> vector<2x8xf32>
    %182 = arith.truncf %181 : vector<2x8xf32> to vector<2x8xbf16>
    %183 = tpu.iota {dimensions = array<i32: 0>} : vector<8x128xi32>
    %184 = tpu.iota {dimensions = array<i32: 1>} : vector<8x128xi32>
    %c8_i32_65 = arith.constant 8 : i32
    %c0_i32_66 = arith.constant 0 : i32
    %185 = arith.cmpi eq, %c8_i32_65, %c0_i32_66 : i32
    %c1_i32_67 = arith.constant 1 : i32
    %186 = arith.select %185, %c1_i32_67, %c8_i32_65 : i32
    %187 = vector.broadcast %186 : i32 to vector<8x128xi32>
    %188 = arith.remsi %184, %187 : vector<8x128xi32>
    %c0_i32_68 = arith.constant 0 : i32
    %189 = vector.broadcast %c0_i32_68 : i32 to vector<8x128xi32>
    %190 = arith.cmpi ne, %188, %189 : vector<8x128xi32>
    %c0_i32_69 = arith.constant 0 : i32
    %191 = vector.broadcast %c0_i32_69 : i32 to vector<8x128xi32>
    %192 = arith.cmpi slt, %188, %191 : vector<8x128xi32>
    %c0_i32_70 = arith.constant 0 : i32
    %193 = arith.cmpi slt, %186, %c0_i32_70 : i32
    %194 = vector.broadcast %193 : i1 to vector<8x128xi1>
    %195 = vector.broadcast %194 : vector<8x128xi1> to vector<8x128xi1>
    %196 = arith.xori %192, %195 : vector<8x128xi1>
    %197 = arith.andi %196, %190 : vector<8x128xi1>
    %198 = vector.broadcast %186 : i32 to vector<8x128xi32>
    %199 = arith.addi %188, %198 : vector<8x128xi32>
    %200 = arith.select %197, %199, %188 : vector<8x128xi1>, vector<8x128xi32>
    %201 = arith.cmpi eq, %200, %183 : vector<8x128xi32>
    %202 = arith.extui %201 : vector<8x128xi1> to vector<8x128xi32>
    %203 = arith.sitofp %202 : vector<8x128xi32> to vector<8x128xf32>
    %204 = arith.truncf %203 : vector<8x128xf32> to vector<8x128xbf16>
    %cst_71 = arith.constant dense<0.000000e+00> : vector<2x128xf32>
    %205 = tpu.matmul %182, %204, %cst_71 {dimension_numbers = #tpu.dot_dimension_numbers<[1], [0], [0], [1], [0, 0, 1, 1], [], []>} : vector<2x8xbf16>, vector<8x128xbf16>, vector<2x128xf32> -> vector<2x128xf32>
    %206 = vector.extract_strided_slice %205 {offsets = [0, 0], sizes = [1, 128], strides = [1, 1]} : vector<2x128xf32> to vector<1x128xf32>
    %207 = vector.broadcast %206 : vector<1x128xf32> to vector<32x128xf32>
    %208 = arith.mulf %136, %207 : vector<32x128xf32>
    %209 = vector.extract_strided_slice %205 {offsets = [1, 0], sizes = [1, 128], strides = [1, 1]} : vector<2x128xf32> to vector<1x128xf32>
    %210 = vector.broadcast %209 : vector<1x128xf32> to vector<32x128xf32>
    %211 = arith.addf %208, %210 : vector<32x128xf32>
    %cst_72 = arith.constant 0.000000e+00 : f32
    %212 = vector.broadcast %cst_72 : f32 to vector<32x128xf32>
    %213 = arith.maximumf %211, %212 : vector<32x128xf32>
    %c1_i32_73 = arith.constant 1 : i32
    %c0_i32_74 = arith.constant 0 : i32
    %c384_i32_75 = arith.constant 384 : i32
    %214 = tpu.memref_slice %arg2[%c0_i32_74, %c384_i32_75] : memref<128x896xbf16, #tpu.memory_space<any>> -> memref<128x512xbf16, #tpu.memory_space<any>>
    %c0_i32_76 = arith.constant 0 : i32
    %c384_i32_77 = arith.constant 384 : i32
    %215 = tpu.memref_slice %arg5[%c0_i32_76, %c384_i32_77] : memref<128x896xbf16, #tpu.memory_space<vmem>> -> memref<128x512xbf16, #tpu.memory_space<vmem>>
    %216 = tpu.memref_slice %arg7[%c1_i32_73] : memref<2x!tpu.dma_semaphore, #tpu.memory_space<semaphore_mem>> -> memref<1x!tpu.dma_semaphore, #tpu.memory_space<semaphore_mem>>
    %217 = tpu.memref_squeeze %216 : memref<1x!tpu.dma_semaphore, #tpu.memory_space<semaphore_mem>> -> memref<!tpu.dma_semaphore, #tpu.memory_space<semaphore_mem>>
    tpu.wait_dma2 semaphore(%217 : memref<!tpu.dma_semaphore, #tpu.memory_space<semaphore_mem>>) src(%214 : memref<128x512xbf16, #tpu.memory_space<any>>) dst(%215 : memref<128x512xbf16, #tpu.memory_space<vmem>>)
    %218 = arith.truncf %213 : vector<32x128xf32> to vector<32x128xbf16>
    %c0_78 = arith.constant 0 : index
    %c384 = arith.constant 384 : index
    %219 = vector.load %arg5[%c0_78, %c384] : memref<128x896xbf16, #tpu.memory_space<vmem>>, vector<128x512xbf16>
    %cst_79 = arith.constant dense<0.000000e+00> : vector<32x512xf32>
    %220 = tpu.matmul %218, %219, %cst_79 {dimension_numbers = #tpu.dot_dimension_numbers<[1], [0], [0], [1], [0, 0, 1, 1], [], []>} : vector<32x128xbf16>, vector<128x512xbf16>, vector<32x512xf32> -> vector<32x512xf32>
    %221 = tpu.iota {dimensions = array<i32: 0>} : vector<512x32xi32>
    %c32_i32 = arith.constant 32 : i32
    %c0_i32_80 = arith.constant 0 : i32
    %222 = arith.cmpi eq, %c32_i32, %c0_i32_80 : i32
    %c1_i32_81 = arith.constant 1 : i32
    %223 = arith.select %222, %c1_i32_81, %c32_i32 : i32
    %224 = vector.broadcast %223 : i32 to vector<512x32xi32>
    %225 = arith.remsi %221, %224 : vector<512x32xi32>
    %c0_i32_82 = arith.constant 0 : i32
    %226 = vector.broadcast %c0_i32_82 : i32 to vector<512x32xi32>
    %227 = arith.cmpi ne, %225, %226 : vector<512x32xi32>
    %c0_i32_83 = arith.constant 0 : i32
    %228 = vector.broadcast %c0_i32_83 : i32 to vector<512x32xi32>
    %229 = arith.cmpi slt, %225, %228 : vector<512x32xi32>
    %c0_i32_84 = arith.constant 0 : i32
    %230 = arith.cmpi slt, %223, %c0_i32_84 : i32
    %231 = vector.broadcast %230 : i1 to vector<512x32xi1>
    %232 = vector.broadcast %231 : vector<512x32xi1> to vector<512x32xi1>
    %233 = arith.xori %229, %232 : vector<512x32xi1>
    %234 = arith.andi %233, %227 : vector<512x32xi1>
    %235 = vector.broadcast %223 : i32 to vector<512x32xi32>
    %236 = arith.addi %225, %235 : vector<512x32xi32>
    %237 = arith.select %234, %236, %225 : vector<512x32xi1>, vector<512x32xi32>
    %238 = tpu.iota {dimensions = array<i32: 1>} : vector<512x32xi32>
    %239 = arith.cmpi eq, %237, %238 : vector<512x32xi32>
    %240 = arith.extui %239 : vector<512x32xi1> to vector<512x32xi32>
    %241 = arith.sitofp %240 : vector<512x32xi32> to vector<512x32xf32>
    %242 = arith.truncf %241 : vector<512x32xf32> to vector<512x32xbf16>
    %243 = tpu.iota {dimensions = array<i32: 0>} : vector<32x512xi32>
    %244 = tpu.iota {dimensions = array<i32: 1>} : vector<32x512xi32>
    %c32_i32_85 = arith.constant 32 : i32
    %c0_i32_86 = arith.constant 0 : i32
    %245 = arith.cmpi eq, %c32_i32_85, %c0_i32_86 : i32
    %c1_i32_87 = arith.constant 1 : i32
    %246 = arith.select %245, %c1_i32_87, %c32_i32_85 : i32
    %247 = vector.broadcast %246 : i32 to vector<32x512xi32>
    %248 = arith.remsi %244, %247 : vector<32x512xi32>
    %c0_i32_88 = arith.constant 0 : i32
    %249 = vector.broadcast %c0_i32_88 : i32 to vector<32x512xi32>
    %250 = arith.cmpi ne, %248, %249 : vector<32x512xi32>
    %c0_i32_89 = arith.constant 0 : i32
    %251 = vector.broadcast %c0_i32_89 : i32 to vector<32x512xi32>
    %252 = arith.cmpi slt, %248, %251 : vector<32x512xi32>
    %c0_i32_90 = arith.constant 0 : i32
    %253 = arith.cmpi slt, %246, %c0_i32_90 : i32
    %254 = vector.broadcast %253 : i1 to vector<32x512xi1>
    %255 = vector.broadcast %254 : vector<32x512xi1> to vector<32x512xi1>
    %256 = arith.xori %252, %255 : vector<32x512xi1>
    %257 = arith.andi %256, %250 : vector<32x512xi1>
    %258 = vector.broadcast %246 : i32 to vector<32x512xi32>
    %259 = arith.addi %248, %258 : vector<32x512xi32>
    %260 = arith.select %257, %259, %248 : vector<32x512xi1>, vector<32x512xi32>
    %261 = arith.cmpi eq, %260, %243 : vector<32x512xi32>
    %262 = arith.extui %261 : vector<32x512xi1> to vector<32x512xi32>
    %263 = arith.sitofp %262 : vector<32x512xi32> to vector<32x512xf32>
    %264 = arith.truncf %263 : vector<32x512xf32> to vector<32x512xbf16>
    %cst_91 = arith.constant dense<0.000000e+00> : vector<512xf32>
    %265 = vector.multi_reduction <add>, %220, %cst_91 [0] : vector<32x512xf32> to vector<512xf32>
    %266 = vector.shape_cast %265 : vector<512xf32> to vector<1x512xf32>
    %267 = arith.mulf %220, %220 : vector<32x512xf32>
    %cst_92 = arith.constant dense<0.000000e+00> : vector<512xf32>
    %268 = vector.multi_reduction <add>, %267, %cst_92 [0] : vector<32x512xf32> to vector<512xf32>
    %269 = vector.shape_cast %268 : vector<512xf32> to vector<1x512xf32>
    %270 = tpu.concatenate %266, %269 in 0 : vector<1x512xf32>, vector<1x512xf32> -> vector<2x512xf32>
    %271 = vector.extract_strided_slice %270 {offsets = [0, 0], sizes = [1, 512], strides = [1, 1]} : vector<2x512xf32> to vector<1x512xf32>
    %272 = vector.extract_strided_slice %19 {offsets = [0, 0], sizes = [1, 512], strides = [1, 1]} : vector<2x512xf32> to vector<1x512xf32>
    %273 = vector.extract_strided_slice %270 {offsets = [1, 0], sizes = [1, 512], strides = [1, 1]} : vector<2x512xf32> to vector<1x512xf32>
    %274 = vector.extract_strided_slice %19 {offsets = [1, 0], sizes = [1, 512], strides = [1, 1]} : vector<2x512xf32> to vector<1x512xf32>
    %275 = tpu.concatenate %271, %272, %273, %274 in 0 : vector<1x512xf32>, vector<1x512xf32>, vector<1x512xf32>, vector<1x512xf32> -> vector<4x512xf32>
    %276 = arith.truncf %275 : vector<4x512xf32> to vector<4x512xbf16>
    %cst_93 = arith.constant dense<0.000000e+00> : vector<4x32xf32>
    %277 = tpu.matmul %276, %242, %cst_93 {dimension_numbers = #tpu.dot_dimension_numbers<[1], [0], [0], [1], [0, 0, 1, 1], [], []>} : vector<4x512xbf16>, vector<512x32xbf16>, vector<4x32xf32> -> vector<4x32xf32>
    %cst_94 = arith.constant 0.001953125 : f32
    %278 = vector.broadcast %cst_94 : f32 to vector<4x32xf32>
    %279 = arith.mulf %277, %278 : vector<4x32xf32>
    %280 = vector.extract_strided_slice %279 {offsets = [0, 0], sizes = [2, 32], strides = [1, 1]} : vector<4x32xf32> to vector<2x32xf32>
    %281 = vector.extract_strided_slice %279 {offsets = [2, 0], sizes = [2, 32], strides = [1, 1]} : vector<4x32xf32> to vector<2x32xf32>
    %282 = arith.mulf %280, %280 : vector<2x32xf32>
    %283 = arith.subf %281, %282 : vector<2x32xf32>
    %c4 = arith.constant 4 : index
    %c0_95 = arith.constant 0 : index
    %284 = vector.load %arg3[%c4, %c0_95] : memref<74x32xf32, #tpu.memory_space<vmem>>, vector<2x32xf32>
    %c6 = arith.constant 6 : index
    %c0_96 = arith.constant 0 : index
    %285 = vector.load %arg3[%c6, %c0_96] : memref<74x32xf32, #tpu.memory_space<vmem>>, vector<2x32xf32>
    %cst_97 = arith.constant 9.99999974E-6 : f32
    %286 = vector.broadcast %cst_97 : f32 to vector<2x32xf32>
    %287 = arith.addf %283, %286 : vector<2x32xf32>
    %288 = math.rsqrt %287 : vector<2x32xf32>
    %289 = arith.mulf %284, %288 : vector<2x32xf32>
    %290 = arith.mulf %280, %289 : vector<2x32xf32>
    %291 = arith.subf %285, %290 : vector<2x32xf32>
    %292 = tpu.concatenate %289, %291 in 0 : vector<2x32xf32>, vector<2x32xf32> -> vector<4x32xf32>
    %293 = arith.truncf %292 : vector<4x32xf32> to vector<4x32xbf16>
    %cst_98 = arith.constant dense<0.000000e+00> : vector<4x512xf32>
    %294 = tpu.matmul %293, %264, %cst_98 {dimension_numbers = #tpu.dot_dimension_numbers<[1], [0], [0], [1], [0, 0, 1, 1], [], []>} : vector<4x32xbf16>, vector<32x512xbf16>, vector<4x512xf32> -> vector<4x512xf32>
    %295 = vector.extract_strided_slice %294 {offsets = [0, 0], sizes = [1, 512], strides = [1, 1]} : vector<4x512xf32> to vector<1x512xf32>
    %296 = vector.broadcast %295 : vector<1x512xf32> to vector<32x512xf32>
    %297 = arith.mulf %220, %296 : vector<32x512xf32>
    %298 = vector.extract_strided_slice %294 {offsets = [2, 0], sizes = [1, 512], strides = [1, 1]} : vector<4x512xf32> to vector<1x512xf32>
    %299 = vector.broadcast %298 : vector<1x512xf32> to vector<32x512xf32>
    %300 = arith.addf %297, %299 : vector<32x512xf32>
    %cst_99 = arith.constant 0.000000e+00 : f32
    %301 = vector.broadcast %cst_99 : f32 to vector<32x512xf32>
    %302 = arith.maximumf %300, %301 : vector<32x512xf32>
    %303 = vector.extract_strided_slice %302 {offsets = [0, 0], sizes = [16, 512], strides = [1, 1]} : vector<32x512xf32> to vector<16x512xf32>
    %cst_100 = arith.constant dense<0.000000e+00> : vector<512xf32>
    %304 = vector.multi_reduction <add>, %303, %cst_100 [0] : vector<16x512xf32> to vector<512xf32>
    %305 = vector.shape_cast %304 : vector<512xf32> to vector<1x512xf32>
    %306 = vector.extract_strided_slice %302 {offsets = [16, 0], sizes = [16, 512], strides = [1, 1]} : vector<32x512xf32> to vector<16x512xf32>
    %cst_101 = arith.constant dense<0.000000e+00> : vector<512xf32>
    %307 = vector.multi_reduction <add>, %306, %cst_101 [0] : vector<16x512xf32> to vector<512xf32>
    %308 = vector.shape_cast %307 : vector<512xf32> to vector<1x512xf32>
    %309 = tpu.concatenate %305, %308 in 0 : vector<1x512xf32>, vector<1x512xf32> -> vector<2x512xf32>
    %310 = arith.truncf %309 : vector<2x512xf32> to vector<2x512xbf16>
    %cst_102 = arith.constant dense<0.000000e+00> : vector<2x32xf32>
    %311 = tpu.matmul %310, %242, %cst_102 {dimension_numbers = #tpu.dot_dimension_numbers<[1], [0], [0], [1], [0, 0, 1, 1], [], []>} : vector<2x512xbf16>, vector<512x32xbf16>, vector<2x32xf32> -> vector<2x32xf32>
    %cst_103 = arith.constant 3.906250e-03 : f32
    %312 = vector.broadcast %cst_103 : f32 to vector<2x32xf32>
    %313 = arith.mulf %311, %312 : vector<2x32xf32>
    %c8 = arith.constant 8 : index
    %c0_104 = arith.constant 0 : index
    %314 = vector.load %arg3[%c8, %c0_104] : memref<74x32xf32, #tpu.memory_space<vmem>>, vector<32x32xf32>
    %c40 = arith.constant 40 : index
    %c0_105 = arith.constant 0 : index
    %315 = vector.load %arg3[%c40, %c0_105] : memref<74x32xf32, #tpu.memory_space<vmem>>, vector<32x32xf32>
    %c72 = arith.constant 72 : index
    %c0_106 = arith.constant 0 : index
    %316 = vector.load %arg3[%c72, %c0_106] : memref<74x32xf32, #tpu.memory_space<vmem>>, vector<1x32xf32>
    %c73 = arith.constant 73 : index
    %c0_107 = arith.constant 0 : index
    %317 = vector.load %arg3[%c73, %c0_107] : memref<74x32xf32, #tpu.memory_space<vmem>>, vector<1x32xf32>
    %cst_108 = arith.constant dense<0.000000e+00> : vector<2x32xf32>
    %318 = tpu.matmul %313, %314, %cst_108 {dimension_numbers = #tpu.dot_dimension_numbers<[1], [0], [0], [1], [0, 0, 1, 1], [], []>} : vector<2x32xf32>, vector<32x32xf32>, vector<2x32xf32> -> vector<2x32xf32>
    %319 = vector.broadcast %316 : vector<1x32xf32> to vector<2x32xf32>
    %320 = arith.addf %318, %319 : vector<2x32xf32>
    %cst_109 = arith.constant 0.000000e+00 : f32
    %321 = vector.broadcast %cst_109 : f32 to vector<2x32xf32>
    %322 = arith.maximumf %320, %321 : vector<2x32xf32>
    %cst_110 = arith.constant dense<0.000000e+00> : vector<2x32xf32>
    %323 = tpu.matmul %322, %315, %cst_110 {dimension_numbers = #tpu.dot_dimension_numbers<[1], [0], [0], [1], [0, 0, 1, 1], [], []>} : vector<2x32xf32>, vector<32x32xf32>, vector<2x32xf32> -> vector<2x32xf32>
    %324 = vector.broadcast %317 : vector<1x32xf32> to vector<2x32xf32>
    %325 = arith.addf %323, %324 : vector<2x32xf32>
    %326 = arith.negf %325 : vector<2x32xf32>
    %327 = math.exp %326 : vector<2x32xf32>
    %cst_111 = arith.constant 1.000000e+00 : f32
    %328 = vector.broadcast %cst_111 : f32 to vector<2x32xf32>
    %329 = arith.addf %328, %327 : vector<2x32xf32>
    %330 = arith.divf %328, %329 : vector<2x32xf32>
    %331 = arith.truncf %330 : vector<2x32xf32> to vector<2x32xbf16>
    %cst_112 = arith.constant dense<0.000000e+00> : vector<2x512xf32>
    %332 = tpu.matmul %331, %264, %cst_112 {dimension_numbers = #tpu.dot_dimension_numbers<[1], [0], [0], [1], [0, 0, 1, 1], [], []>} : vector<2x32xbf16>, vector<32x512xbf16>, vector<2x512xf32> -> vector<2x512xf32>
    %c0_113 = arith.constant 0 : index
    %c0_114 = arith.constant 0 : index
    %333 = vector.load %arg6[%c0_113, %c0_114] : memref<32x512xf32, #tpu.memory_space<vmem>>, vector<16x512xf32>
    %334 = vector.extract_strided_slice %294 {offsets = [1, 0], sizes = [1, 512], strides = [1, 1]} : vector<4x512xf32> to vector<1x512xf32>
    %335 = vector.broadcast %334 : vector<1x512xf32> to vector<16x512xf32>
    %336 = arith.mulf %333, %335 : vector<16x512xf32>
    %337 = vector.extract_strided_slice %294 {offsets = [3, 0], sizes = [1, 512], strides = [1, 1]} : vector<4x512xf32> to vector<1x512xf32>
    %338 = vector.broadcast %337 : vector<1x512xf32> to vector<16x512xf32>
    %339 = arith.addf %336, %338 : vector<16x512xf32>
    %340 = vector.extract_strided_slice %302 {offsets = [0, 0], sizes = [16, 512], strides = [1, 1]} : vector<32x512xf32> to vector<16x512xf32>
    %341 = vector.extract_strided_slice %332 {offsets = [0, 0], sizes = [1, 512], strides = [1, 1]} : vector<2x512xf32> to vector<1x512xf32>
    %342 = vector.broadcast %341 : vector<1x512xf32> to vector<16x512xf32>
    %343 = arith.mulf %340, %342 : vector<16x512xf32>
    %344 = arith.addf %343, %339 : vector<16x512xf32>
    %cst_115 = arith.constant 0.000000e+00 : f32
    %345 = vector.broadcast %cst_115 : f32 to vector<16x512xf32>
    %346 = arith.maximumf %344, %345 : vector<16x512xf32>
    %c0_116 = arith.constant 0 : index
    %c0_117 = arith.constant 0 : index
    %347 = vector.load %arg4[%c0_116, %c0_117] : memref<32x512xf32, #tpu.memory_space<vmem>>, vector<16x512xf32>
    tpu.vector_store %arg4[%c0_116, %c0_117], %346 {strides = array<i32>} : memref<32x512xf32, #tpu.memory_space<vmem>>, vector<16x512xf32>,
    %c16 = arith.constant 16 : index
    %c0_118 = arith.constant 0 : index
    %348 = vector.load %arg6[%c16, %c0_118] : memref<32x512xf32, #tpu.memory_space<vmem>>, vector<16x512xf32>
    %349 = vector.extract_strided_slice %294 {offsets = [1, 0], sizes = [1, 512], strides = [1, 1]} : vector<4x512xf32> to vector<1x512xf32>
    %350 = vector.broadcast %349 : vector<1x512xf32> to vector<16x512xf32>
    %351 = arith.mulf %348, %350 : vector<16x512xf32>
    %352 = vector.extract_strided_slice %294 {offsets = [3, 0], sizes = [1, 512], strides = [1, 1]} : vector<4x512xf32> to vector<1x512xf32>
    %353 = vector.broadcast %352 : vector<1x512xf32> to vector<16x512xf32>
    %354 = arith.addf %351, %353 : vector<16x512xf32>
    %355 = vector.extract_strided_slice %302 {offsets = [16, 0], sizes = [16, 512], strides = [1, 1]} : vector<32x512xf32> to vector<16x512xf32>
    %356 = vector.extract_strided_slice %332 {offsets = [1, 0], sizes = [1, 512], strides = [1, 1]} : vector<2x512xf32> to vector<1x512xf32>
    %357 = vector.broadcast %356 : vector<1x512xf32> to vector<16x512xf32>
    %358 = arith.mulf %355, %357 : vector<16x512xf32>
    %359 = arith.addf %358, %354 : vector<16x512xf32>
    %cst_119 = arith.constant 0.000000e+00 : f32
    %360 = vector.broadcast %cst_119 : f32 to vector<16x512xf32>
    %361 = arith.maximumf %359, %360 : vector<16x512xf32>
    %c16_120 = arith.constant 16 : index
    %c0_121 = arith.constant 0 : index
    %362 = vector.load %arg4[%c16_120, %c0_121] : memref<32x512xf32, #tpu.memory_space<vmem>>, vector<16x512xf32>
    tpu.vector_store %arg4[%c16_120, %c0_121], %361 {strides = array<i32>} : memref<32x512xf32, #tpu.memory_space<vmem>>, vector<16x512xf32>,
    return
  }
}

</mosaic_0001>

<llo_original>
// kernel: tpu_custom_call.1
$region0: #{tpu_custom_call.1}
  #allocation0 [shape = 'u32[]', space=smem, size = 0x4, offset = 0x4, fixed_abs, tag = 'smem constant byte address 0x4 - core index']
  #allocation1 [shape = 'u32[144,128]{1,0:T(1,128)}', space=vmem, size = 0x12000, scoped, tag = 'internal scratch']
  #allocation2 [shape = 'bf16[128,896]{1,0:T(16,128)(2,1)}', space=vmem, size = 0x38000, scoped, tag = 'scratch operand']
  #allocation3 [shape = 'f32[32,512]{1,0:T(8,128)}', space=vmem, size = 0x10000, scoped, tag = 'scratch operand']
  #allocation4 [shape = 's32[2]{0}', space=sflag, size = 0x8, scoped, tag = 'scratch operand']
  #allocation9 [shape = 's32[]', space=sflag, size = 0x4, offset = 0, fixed_abs, tag = 'sflag constant byte address 0x0 - dummy sync flag']
  #allocation11 [shape = 's32[]', space=sflag, size = 0x4, offset = 0, fixed_abs, tag = 'sflag constant byte address 0x0 - dummy sync flag']
  %s0 = inlined_call_operand.vmem [shape: f32[32,128], index: 0, kind: input, shape index: {}]
  %s1 = inlined_call_operand.hbm [shape: bf16[128,640], index: 1, kind: input, shape index: {}]
  %s2 = inlined_call_operand.hbm [shape: bf16[128,896], index: 2, kind: input, shape index: {}]
  %s3 = inlined_call_operand.vmem [shape: f32[74,32], index: 3, kind: input, shape index: {}]
  %s4 = inlined_call_operand.hbm [shape: f32[32,512], index: 4, kind: output, shape index: {}]
  %s5 = sld [smem:[#allocation0]]
  $region26: #{tpu_custom_call.1} parent=0
    _
  %s7 = ssub.s32 1, %s5
  %s8 = scalar_select 0, %s7, %s5
  $region1: #{tpu_custom_call.1} parent=0
    #allocation5 [shape = 'u8[163840]{0}', space=vmem, size = 0x28000, scoped, tag = 'input window, operand 1, single buffered']
    #allocation6 [shape = 's32[1]{0}', space=sflag, size = 0x4, scoped, tag = 'scoped memory for tpu_custom_call.1']
    #allocation7 [shape = 's32[1]{0}', space=sflag, size = 0x4, scoped, tag = 'scoped memory for tpu_custom_call.1']
    #allocation8 [shape = 'u8[65536]{0}', space=vmem, size = 0x10000, scoped, tag = 'output window, operand 0, single buffered']
    #allocation10 [shape = 'u32[9]{0}', space=smem, size = 0x24, scoped, tag = 'DMA stride descriptor']
    #allocation12 [shape = 'u32[9]{0}', space=smem, size = 0x24, scoped, tag = 'DMA stride descriptor']
    %9 = vsyncpa [#allocation6], 0
    %10 = vsyncpa [#allocation7], 0
    // Predicated region
    $region2: #{tpu_custom_call.1} parent=1 // pred_check
      _
    $region3: #{tpu_custom_call.1} parent=1 // pred_check_branch
      %12 = sbr.rel (0) target = $region5
    $region4: #{tpu_custom_call.1} parent=1 // pred_region
      _
    $region5: #{tpu_custom_call.1} parent=1 // pred_fallthru
      _
    // Predicated region
    $region6: #{tpu_custom_call.1} parent=1 // pred_check
      _
    $region7: #{tpu_custom_call.1} parent=1 // pred_check_branch
      %14 = sbr.rel (0) target = $region9
    $region8: #{tpu_custom_call.1} parent=1 // pred_region
      %s16 = ssub.s32 5120, 5120
      %17 = vsyncadd [#allocation6], %s16
      %s18 = sshll.u32 [#allocation5], 4
      %s19 = int_to_ptr.vmem [resolvable:$true] %s18
      %24 = dma.hbm_to_vmem [thread:$0]  %s1, 5120, %s19, [#allocation6], 320, 320, 20
    $region9: #{tpu_custom_call.1} parent=1 // pred_fallthru
      _
    // Predicated region
    $region10: #{tpu_custom_call.1} parent=1 // pred_check
      _
    $region11: #{tpu_custom_call.1} parent=1 // pred_check_branch
      %26 = sbr.rel (0) target = $region13
    $region12: #{tpu_custom_call.1} parent=1 // pred_region
      _
    $region13: #{tpu_custom_call.1} parent=1 // pred_fallthru
      _
    // Predicated region
    $region14: #{tpu_custom_call.1} parent=1 // pred_check
      _
    $region15: #{tpu_custom_call.1} parent=1 // pred_check_branch
      %28 = sbr.rel (0) target = $region17
    $region16: #{tpu_custom_call.1} parent=1 // pred_region
      %29 = dma.done [#allocation6], 5120
    $region17: #{tpu_custom_call.1} parent=1 // pred_fallthru
      _
    %s32 = sshll.u32 1, 14
    %s33 = sxor.u32 4294967295, %s32
    %s35 = sld [smem:[#allocation0]]
    %s36 = sadd.s32 2, %s35
    %s38 = sshll.u32 7, 26
    %s39 = sxor.u32 4294967295, %s38
    %s40 = sand.u32 0, %s39
    %s41 = sshll.u32 %s36, 26
    %s42 = sor.u32 %s40, %s41
    %s43 = sshll.u32 [#allocation2], 4
    %s44 = int_to_ptr.vmem [resolvable:$true] %s43
    %47 = sst [smem:[#allocation10]] 896
    %s48 = scalar_lea.smem [#allocation10], 1
    %49 = sst [smem:[%s48]] 896
    %s50 = scalar_lea.smem [#allocation10], 2
    %51 = sst [smem:[%s50]] 3
    %s52 = scalar_lea.smem [#allocation10], 3
    %53 = sst [smem:[%s52]] 64
    %s54 = scalar_lea.smem [#allocation10], 4
    %55 = sst [smem:[%s54]] 128
    %s56 = scalar_lea.smem [#allocation10], 5
    %57 = sst [smem:[%s56]] 2
    %s58 = scalar_lea.smem [#allocation10], 6
    %59 = sst [smem:[%s58]] 448
    %s60 = scalar_lea.smem [#allocation10], 7
    %61 = sst [smem:[%s60]] 64
    %s62 = scalar_lea.smem [#allocation10], 8
    %63 = sst [smem:[%s62]] 4
    %65 = dma.general %s2, 3072, %s44, [#allocation4], [#allocation9], [#allocation10], %s42, 0
    %s66 = scalar_lea.hbm %s2, 192
    %s67 = scalar_lea.vmem [#allocation2], 24
    %s68 = scalar_lea.sflag [#allocation4], 1
    %s70 = sshll.u32 1, 14
    %s71 = sxor.u32 4294967295, %s70
    %s73 = sadd.s32 2, %s35
    %s75 = sshll.u32 7, 26
    %s76 = sxor.u32 4294967295, %s75
    %s77 = sand.u32 0, %s76
    %s78 = sshll.u32 %s73, 26
    %s79 = sor.u32 %s77, %s78
    %s80 = sshll.u32 %s67, 4
    %s81 = int_to_ptr.vmem [resolvable:$true] %s80
    %84 = sst [smem:[#allocation12]] 896
    %s85 = scalar_lea.smem [#allocation12], 1
    %86 = sst [smem:[%s85]] 896
    %s87 = scalar_lea.smem [#allocation12], 2
    %88 = sst [smem:[%s87]] 4
    %s89 = scalar_lea.smem [#allocation12], 3
    %90 = sst [smem:[%s89]] 64
    %s91 = scalar_lea.smem [#allocation12], 4
    %92 = sst [smem:[%s91]] 128
    %s93 = scalar_lea.smem [#allocation12], 5
    %94 = sst [smem:[%s93]] 2
    %s95 = scalar_lea.smem [#allocation12], 6
    %96 = sst [smem:[%s95]] 448
    %s97 = scalar_lea.smem [#allocation12], 7
    %98 = sst [smem:[%s97]] 64
    %s99 = scalar_lea.smem [#allocation12], 8
    %100 = sst [smem:[%s99]] 4
    %102 = dma.general %s66, 4096, %s81, %s68, [#allocation11], [#allocation12], %s79, 0
    %v103 = vld [vmem:[%s0] sm:$0xff]
    %v104 = vld [vmem:[%s0 + $0x8] sm:$0xff]
    %v105 = vld [vmem:[%s0 + $0x10] sm:$0xff]
    %v106 = vld [vmem:[%s0 + $0x18] sm:$0xff]
    %v107 = vpack.c.bf16 %v104, %v103
    %v108 = vpack.c.bf16 %v106, %v105
    %v109 = vld [vmem:[#allocation5] sm:$0xff]
    %v110 = vld [vmem:[#allocation5 + $0x8] sm:$0xff]
    %v111 = vld [vmem:[#allocation5 + $0x10] sm:$0xf]
    %v112 = vld [vmem:[#allocation5 + $0x14] sm:$0xff]
    %v113 = vld [vmem:[#allocation5 + $0x1c] sm:$0xff]
    %v114 = vld [vmem:[#allocation5 + $0x24] sm:$0xf]
    %v115 = vld [vmem:[#allocation5 + $0x28] sm:$0xff]
    %v116 = vld [vmem:[#allocation5 + $0x30] sm:$0xff]
    %v117 = vld [vmem:[#allocation5 + $0x38] sm:$0xf]
    %v118 = vld [vmem:[#allocation5 + $0x3c] sm:$0xff]
    %v119 = vld [vmem:[#allocation5 + $0x44] sm:$0xff]
    %v120 = vld [vmem:[#allocation5 + $0x4c] sm:$0xf]
    %v121 = vld [vmem:[#allocation5 + $0x50] sm:$0xff]
    %v122 = vld [vmem:[#allocation5 + $0x58] sm:$0xff]
    %v123 = vld [vmem:[#allocation5 + $0x60] sm:$0xf]
    %v124 = vld [vmem:[#allocation5 + $0x64] sm:$0xff]
    %v125 = vld [vmem:[#allocation5 + $0x6c] sm:$0xff]
    %v126 = vld [vmem:[#allocation5 + $0x74] sm:$0xf]
    %v127 = vld [vmem:[#allocation5 + $0x78] sm:$0xff]
    %v128 = vld [vmem:[#allocation5 + $0x80] sm:$0xff]
    %v129 = vld [vmem:[#allocation5 + $0x88] sm:$0xf]
    %v130 = vld [vmem:[#allocation5 + $0x8c] sm:$0xff]
    %v131 = vld [vmem:[#allocation5 + $0x94] sm:$0xff]
    %v132 = vld [vmem:[#allocation5 + $0x9c] sm:$0xf]
    %v133 = vld [vmem:[#allocation5 + $0xa0] sm:$0xff]
    %v134 = vld [vmem:[#allocation5 + $0xa8] sm:$0xff]
    %v135 = vld [vmem:[#allocation5 + $0xb0] sm:$0xf]
    %v136 = vld [vmem:[#allocation5 + $0xb4] sm:$0xff]
    %v137 = vld [vmem:[#allocation5 + $0xbc] sm:$0xff]
    %v138 = vld [vmem:[#allocation5 + $0xc4] sm:$0xf]
    %v139 = vld [vmem:[#allocation5 + $0xc8] sm:$0xff]
    %v140 = vld [vmem:[#allocation5 + $0xd0] sm:$0xff]
    %v141 = vld [vmem:[#allocation5 + $0xd8] sm:$0xf]
    %v142 = vld [vmem:[#allocation5 + $0xdc] sm:$0xff]
    %v143 = vld [vmem:[#allocation5 + $0xe4] sm:$0xff]
    %v144 = vld [vmem:[#allocation5 + $0xec] sm:$0xf]
    %v145 = vld [vmem:[#allocation5 + $0xf0] sm:$0xff]
    %v146 = vld [vmem:[#allocation5 + $0xf8] sm:$0xff]
    %v147 = vld [vmem:[#allocation5 + $0x100] sm:$0xf]
    %v148 = vld [vmem:[#allocation5 + $0x104] sm:$0xff]
    %v149 = vld [vmem:[#allocation5 + $0x10c] sm:$0xff]
    %v150 = vld [vmem:[#allocation5 + $0x114] sm:$0xf]
    %v151 = vld [vmem:[#allocation5 + $0x118] sm:$0xff]
    %v152 = vld [vmem:[#allocation5 + $0x120] sm:$0xff]
    %v153 = vld [vmem:[#allocation5 + $0x128] sm:$0xf]
    %v154 = vld [vmem:[#allocation5 + $0x12c] sm:$0xff]
    %v155 = vld [vmem:[#allocation5 + $0x134] sm:$0xff]
    %v156 = vld [vmem:[#allocation5 + $0x13c] sm:$0xf]
    %v205 = vunpack.c.l.b16 %v109
    %v206 = vunpack.c.h.b16 %v109
    %v207 = vunpack.c.l.b16 %v110
    %v208 = vunpack.c.h.b16 %v110
    %v209 = vunpack.c.l.b16 %v111
    %v210 = vunpack.c.l.b16 %v112
    %v211 = vunpack.c.h.b16 %v112
    %v212 = vunpack.c.l.b16 %v113
    %v213 = vunpack.c.h.b16 %v113
    %v214 = vunpack.c.l.b16 %v114
    %v215 = vunpack.c.l.b16 %v115
    %v216 = vunpack.c.h.b16 %v115
    %v217 = vunpack.c.l.b16 %v116
    %v218 = vunpack.c.h.b16 %v116
    %v219 = vunpack.c.l.b16 %v117
    %v220 = vunpack.c.l.b16 %v118
    %v221 = vunpack.c.h.b16 %v118
    %v222 = vunpack.c.l.b16 %v119
    %v223 = vunpack.c.h.b16 %v119
    %v224 = vunpack.c.l.b16 %v120
    %v225 = vunpack.c.l.b16 %v121
    %v226 = vunpack.c.h.b16 %v121
    %v227 = vunpack.c.l.b16 %v122
    %v228 = vunpack.c.h.b16 %v122
    %v229 = vunpack.c.l.b16 %v123
    %v230 = vunpack.c.l.b16 %v124
    %v231 = vunpack.c.h.b16 %v124
    %v232 = vunpack.c.l.b16 %v125
    %v233 = vunpack.c.h.b16 %v125
    %v234 = vunpack.c.l.b16 %v126
    %v235 = vunpack.c.l.b16 %v127
    %v236 = vunpack.c.h.b16 %v127
    %v237 = vunpack.c.l.b16 %v128
    %v238 = vunpack.c.h.b16 %v128
    %v239 = vunpack.c.l.b16 %v129
    %v240 = vunpack.c.l.b16 %v130
    %v241 = vunpack.c.h.b16 %v130
    %v242 = vunpack.c.l.b16 %v131
    %v243 = vunpack.c.h.b16 %v131
    %v244 = vunpack.c.l.b16 %v132
    %v245 = vunpack.c.l.b16 %v133
    %v246 = vunpack.c.h.b16 %v133
    %v247 = vunpack.c.l.b16 %v134
    %v248 = vunpack.c.h.b16 %v134
    %v249 = vunpack.c.l.b16 %v135
    %v250 = vunpack.c.l.b16 %v136
    %v251 = vunpack.c.h.b16 %v136
    %v252 = vunpack.c.l.b16 %v137
    %v253 = vunpack.c.h.b16 %v137
    %v254 = vunpack.c.l.b16 %v138
    %v255 = vunpack.c.l.b16 %v139
    %v256 = vunpack.c.h.b16 %v139
    %v257 = vunpack.c.l.b16 %v140
    %v258 = vunpack.c.h.b16 %v140
    %v259 = vunpack.c.l.b16 %v141
    %v260 = vunpack.c.l.b16 %v142
    %v261 = vunpack.c.h.b16 %v142
    %v262 = vunpack.c.l.b16 %v143
    %v263 = vunpack.c.h.b16 %v143
    %v264 = vunpack.c.l.b16 %v144
    %v265 = vunpack.c.l.b16 %v145
    %v266 = vunpack.c.h.b16 %v145
    %v267 = vunpack.c.l.b16 %v146
    %v268 = vunpack.c.h.b16 %v146
    %v269 = vunpack.c.l.b16 %v147
    %v270 = vunpack.c.l.b16 %v148
    %v271 = vunpack.c.h.b16 %v148
    %v272 = vunpack.c.l.b16 %v149
    %v273 = vunpack.c.h.b16 %v149
    %v274 = vunpack.c.l.b16 %v150
    %v275 = vunpack.c.l.b16 %v151
    %v276 = vunpack.c.h.b16 %v151
    %v277 = vunpack.c.l.b16 %v152
    %v278 = vunpack.c.h.b16 %v152
    %v279 = vunpack.c.l.b16 %v153
    %v280 = vunpack.c.l.b16 %v154
    %v281 = vunpack.c.h.b16 %v154
    %v282 = vunpack.c.l.b16 %v155
    %v283 = vunpack.c.h.b16 %v155
    %v284 = vunpack.c.l.b16 %v156
    %v285 = vpack.c.b16 %v210, %v205
    %v286 = vpack.c.b16 %v211, %v206
    %v287 = vpack.c.b16 %v212, %v207
    %v288 = vpack.c.b16 %v213, %v208
    %v289 = vpack.c.b16 %v214, %v209
    %v290 = vpack.c.b16 %v220, %v215
    %v291 = vpack.c.b16 %v221, %v216
    %v292 = vpack.c.b16 %v222, %v217
    %v293 = vpack.c.b16 %v223, %v218
    %v294 = vpack.c.b16 %v224, %v219
    %v295 = vpack.c.b16 %v230, %v225
    %v296 = vpack.c.b16 %v231, %v226
    %v297 = vpack.c.b16 %v232, %v227
    %v298 = vpack.c.b16 %v233, %v228
    %v299 = vpack.c.b16 %v234, %v229
    %v300 = vpack.c.b16 %v240, %v235
    %v301 = vpack.c.b16 %v241, %v236
    %v302 = vpack.c.b16 %v242, %v237
    %v303 = vpack.c.b16 %v243, %v238
    %v304 = vpack.c.b16 %v244, %v239
    %v305 = vpack.c.b16 %v250, %v245
    %v306 = vpack.c.b16 %v251, %v246
    %v307 = vpack.c.b16 %v252, %v247
    %v308 = vpack.c.b16 %v253, %v248
    %v309 = vpack.c.b16 %v254, %v249
    %v310 = vpack.c.b16 %v260, %v255
    %v311 = vpack.c.b16 %v261, %v256
    %v312 = vpack.c.b16 %v262, %v257
    %v313 = vpack.c.b16 %v263, %v258
    %v314 = vpack.c.b16 %v264, %v259
    %v315 = vpack.c.b16 %v270, %v265
    %v316 = vpack.c.b16 %v271, %v266
    %v317 = vpack.c.b16 %v272, %v267
    %v318 = vpack.c.b16 %v273, %v268
    %v319 = vpack.c.b16 %v274, %v269
    %v320 = vpack.c.b16 %v280, %v275
    %v321 = vpack.c.b16 %v281, %v276
    %v322 = vpack.c.b16 %v282, %v277
    %v323 = vpack.c.b16 %v283, %v278
    %v324 = vpack.c.b16 %v284, %v279
    %365 = vmatprep.subr.bf16.mxu0 %v286
    %366 = vmatpush1.bf16.msra.mxu0 %v285
    %367 = vmatprep.subr.bf16.mxu0 %v291
    %368 = vmatpush1.bf16.msra.mxu0 %v290
    %369 = vmatprep.subr.bf16.mxu0 %v296
    %370 = vmatpush1.bf16.msra.mxu0 %v295
    %371 = vmatprep.subr.bf16.mxu0 %v301
    %372 = vmatpush1.bf16.msra.mxu0 %v300
    %373 = vmatprep.subr.bf16.mxu0 %v306
    %374 = vmatpush1.bf16.msra.mxu0 %v305
    %375 = vmatprep.subr.bf16.mxu0 %v311
    %376 = vmatpush1.bf16.msra.mxu0 %v310
    %377 = vmatprep.subr.bf16.mxu0 %v316
    %378 = vmatpush1.bf16.msra.mxu0 %v315
    %379 = vmatprep.subr.bf16.mxu0 %v321
    %380 = vmatpush1.bf16.msra.mxu0 %v320
    %381 = vmatprep.subr.bf16.mxu0 0
    %382 = vmatpush1.bf16.msra.mxu0 0
    %383 = vmatprep.subr.bf16.mxu0 0
    %384 = vmatpush1.bf16.msra.mxu0 0
    %385 = vmatprep.subr.bf16.mxu0 0
    %386 = vmatpush1.bf16.msra.mxu0 0
    %387 = vmatprep.subr.bf16.mxu0 0
    %388 = vmatpush1.bf16.msra.mxu0 0
    %389 = vmatprep.subr.bf16.mxu0 0
    %390 = vmatpush1.bf16.msra.mxu0 0
    %391 = vmatprep.subr.bf16.mxu0 0
    %392 = vmatpush1.bf16.msra.mxu0 0
    %393 = vmatprep.subr.bf16.mxu0 0
    %394 = vmatpush1.bf16.msra.mxu0 0
    %395 = vmatprep.subr.bf16.mxu0 0
    %396 = vmatpush1.bf16.msra.mxu0 0
    %397 = vmatprep.mubr.bf16.mxu0 0
    %398 = vmatmul.mubr.bf16.gmra.mrb[0].mxu0 %v107
    %v399 = vpop.f32.mrb[0].mxu0
    %v400 = vadd.f32 0.0, %v399
    %v401 = vpop.f32.mrb[0].mxu0
    %v402 = vadd.f32 0.0, %v401
    %v403 = vpop.f32.mrb[0].mxu0
    %v404 = vadd.f32 0.0, %v403
    %v405 = vpop.f32.mrb[0].mxu0
    %v406 = vadd.f32 0.0, %v405
    %407 = vmatprep.mubr.bf16.mxu0 0
    %408 = vmatmul.mubr.bf16.gmra.mrb[0].mxu0 %v108
    %v409 = vpop.f32.mrb[0].mxu0
    %v410 = vadd.f32 0.0, %v409
    %v411 = vpop.f32.mrb[0].mxu0
    %v412 = vadd.f32 0.0, %v411
    %v413 = vpop.f32.mrb[0].mxu0
    %v414 = vadd.f32 0.0, %v413
    %v415 = vpop.f32.mrb[0].mxu0
    %v416 = vadd.f32 0.0, %v415
    %417 = vdwg.mxu0
    %418 = vmatprep.subr.bf16.mxu0 %v288
    %419 = vmatpush1.bf16.msra.mxu0 %v287
    %420 = vmatprep.subr.bf16.mxu0 %v293
    %421 = vmatpush1.bf16.msra.mxu0 %v292
    %422 = vmatprep.subr.bf16.mxu0 %v298
    %423 = vmatpush1.bf16.msra.mxu0 %v297
    %424 = vmatprep.subr.bf16.mxu0 %v303
    %425 = vmatpush1.bf16.msra.mxu0 %v302
    %426 = vmatprep.subr.bf16.mxu0 %v308
    %427 = vmatpush1.bf16.msra.mxu0 %v307
    %428 = vmatprep.subr.bf16.mxu0 %v313
    %429 = vmatpush1.bf16.msra.mxu0 %v312
    %430 = vmatprep.subr.bf16.mxu0 %v318
    %431 = vmatpush1.bf16.msra.mxu0 %v317
    %432 = vmatprep.subr.bf16.mxu0 %v323
    %433 = vmatpush1.bf16.msra.mxu0 %v322
    %434 = vmatprep.subr.bf16.mxu0 0
    %435 = vmatpush1.bf16.msra.mxu0 0
    %436 = vmatprep.subr.bf16.mxu0 0
    %437 = vmatpush1.bf16.msra.mxu0 0
    %438 = vmatprep.subr.bf16.mxu0 0
    %439 = vmatpush1.bf16.msra.mxu0 0
    %440 = vmatprep.subr.bf16.mxu0 0
    %441 = vmatpush1.bf16.msra.mxu0 0
    %442 = vmatprep.subr.bf16.mxu0 0
    %443 = vmatpush1.bf16.msra.mxu0 0
    %444 = vmatprep.subr.bf16.mxu0 0
    %445 = vmatpush1.bf16.msra.mxu0 0
    %446 = vmatprep.subr.bf16.mxu0 0
    %447 = vmatpush1.bf16.msra.mxu0 0
    %448 = vmatprep.subr.bf16.mxu0 0
    %449 = vmatpush1.bf16.msra.mxu0 0
    %450 = vmatprep.mubr.bf16.mxu0 0
    %451 = vmatmul.mubr.bf16.gmra.mrb[0].mxu0 %v107
    %v452 = vpop.f32.mrb[0].mxu0
    %v453 = vadd.f32 0.0, %v452
    %v454 = vpop.f32.mrb[0].mxu0
    %v455 = vadd.f32 0.0, %v454
    %v456 = vpop.f32.mrb[0].mxu0
    %v457 = vadd.f32 0.0, %v456
    %v458 = vpop.f32.mrb[0].mxu0
    %v459 = vadd.f32 0.0, %v458
    %460 = vmatprep.mubr.bf16.mxu0 0
    %461 = vmatmul.mubr.bf16.gmra.mrb[0].mxu0 %v108
    %v462 = vpop.f32.mrb[0].mxu0
    %v463 = vadd.f32 0.0, %v462
    %v464 = vpop.f32.mrb[0].mxu0
    %v465 = vadd.f32 0.0, %v464
    %v466 = vpop.f32.mrb[0].mxu0
    %v467 = vadd.f32 0.0, %v466
    %v468 = vpop.f32.mrb[0].mxu0
    %v469 = vadd.f32 0.0, %v468
    %470 = vdwg.mxu0
    %471 = vmatprep.subr.bf16.mxu0 0
    %472 = vmatpush1.bf16.msra.mxu0 %v289
    %473 = vmatprep.subr.bf16.mxu0 0
    %474 = vmatpush1.bf16.msra.mxu0 %v294
    %475 = vmatprep.subr.bf16.mxu0 0
    %476 = vmatpush1.bf16.msra.mxu0 %v299
    %477 = vmatprep.subr.bf16.mxu0 0
    %478 = vmatpush1.bf16.msra.mxu0 %v304
    %479 = vmatprep.subr.bf16.mxu0 0
    %480 = vmatpush1.bf16.msra.mxu0 %v309
    %481 = vmatprep.subr.bf16.mxu0 0
    %482 = vmatpush1.bf16.msra.mxu0 %v314
    %483 = vmatprep.subr.bf16.mxu0 0
    %484 = vmatpush1.bf16.msra.mxu0 %v319
    %485 = vmatprep.subr.bf16.mxu0 0
    %486 = vmatpush1.bf16.msra.mxu0 %v324
    %487 = vmatprep.subr.bf16.mxu0 0
    %488 = vmatpush1.bf16.msra.mxu0 0
    %489 = vmatprep.subr.bf16.mxu0 0
    %490 = vmatpush1.bf16.msra.mxu0 0
    %491 = vmatprep.subr.bf16.mxu0 0
    %492 = vmatpush1.bf16.msra.mxu0 0
    %493 = vmatprep.subr.bf16.mxu0 0
    %494 = vmatpush1.bf16.msra.mxu0 0
    %495 = vmatprep.subr.bf16.mxu0 0
    %496 = vmatpush1.bf16.msra.mxu0 0
    %497 = vmatprep.subr.bf16.mxu0 0
    %498 = vmatpush1.bf16.msra.mxu0 0
    %499 = vmatprep.subr.bf16.mxu0 0
    %500 = vmatpush1.bf16.msra.mxu0 0
    %501 = vmatprep.subr.bf16.mxu0 0
    %502 = vmatpush1.bf16.msra.mxu0 0
    %503 = vmatprep.mubr.bf16.mxu0 0
    %504 = vmatmul.mubr.bf16.gmra.mrb[0].mxu0 %v107
    %v505 = vpop.f32.mrb[0].mxu0
    %v506 = vadd.f32 0.0, %v505
    %v507 = vpop.f32.mrb[0].mxu0
    %v508 = vpop.f32.mrb[0].mxu0
    %v509 = vadd.f32 0.0, %v508
    %v510 = vpop.f32.mrb[0].mxu0
    %511 = vmatprep.mubr.bf16.mxu0 0
    %512 = vmatmul.mubr.bf16.gmra.mrb[0].mxu0 %v108
    %v513 = vpop.f32.mrb[0].mxu0
    %v514 = vadd.f32 0.0, %v513
    %v515 = vpop.f32.mrb[0].mxu0
    %v516 = vpop.f32.mrb[0].mxu0
    %v517 = vadd.f32 0.0, %v516
    %v518 = vpop.f32.mrb[0].mxu0
    %519 = vdwg.mxu0
    %v520 = vadd.f32 %v402, %v406
    %v521 = vadd.f32 %v520, %v412
    %v522 = vadd.f32 %v521, %v416
    %v523 = vrot.slane %v522, 4
    %v524 = vadd.f32 %v522, %v523
    %v525 = vrot.slane %v524, 2
    %v526 = vadd.f32 %v524, %v525
    %v527 = vrot.slane %v526, 1
    %v528 = vadd.f32 %v526, %v527
    %v529 = vadd.f32 %v453, %v457
    %v530 = vadd.f32 %v529, %v463
    %v531 = vadd.f32 %v530, %v467
    %v532 = vrot.slane %v531, 4
    %v533 = vadd.f32 %v531, %v532
    %v534 = vrot.slane %v533, 2
    %v535 = vadd.f32 %v533, %v534
    %v536 = vrot.slane %v535, 1
    %v537 = vadd.f32 %v535, %v536
    %v538 = vadd.f32 %v455, %v459
    %v539 = vadd.f32 %v538, %v465
    %v540 = vadd.f32 %v539, %v469
    %v541 = vrot.slane %v540, 4
    %v542 = vadd.f32 %v540, %v541
    %v543 = vrot.slane %v542, 2
    %v544 = vadd.f32 %v542, %v543
    %v545 = vrot.slane %v544, 1
    %v546 = vadd.f32 %v544, %v545
    %v547 = vadd.f32 %v506, %v509
    %v548 = vadd.f32 %v547, %v514
    %v549 = vadd.f32 %v548, %v517
    %v550 = vrot.slane %v549, 4
    %v551 = vadd.f32 %v549, %v550
    %v552 = vrot.slane %v551, 2
    %v553 = vadd.f32 %v551, %v552
    %v554 = vrot.slane %v553, 1
    %v555 = vadd.f32 %v553, %v554
    %v556 = vmul.f32 %v402, %v402
    %v557 = vmul.f32 %v453, %v453
    %v558 = vmul.f32 %v455, %v455
    %v559 = vmul.f32 %v506, %v506
    %v560 = vmul.f32 %v406, %v406
    %v561 = vmul.f32 %v457, %v457
    %v562 = vmul.f32 %v459, %v459
    %v563 = vmul.f32 %v509, %v509
    %v564 = vmul.f32 %v412, %v412
    %v565 = vmul.f32 %v463, %v463
    %v566 = vmul.f32 %v465, %v465
    %v567 = vmul.f32 %v514, %v514
    %v568 = vmul.f32 %v416, %v416
    %v569 = vmul.f32 %v467, %v467
    %v570 = vmul.f32 %v469, %v469
    %v571 = vmul.f32 %v517, %v517
    %v572 = vadd.f32 %v556, %v560
    %v573 = vadd.f32 %v572, %v564
    %v574 = vadd.f32 %v573, %v568
    %v575 = vrot.slane %v574, 4
    %v576 = vadd.f32 %v574, %v575
    %v577 = vrot.slane %v576, 2
    %v578 = vadd.f32 %v576, %v577
    %v579 = vrot.slane %v578, 1
    %v580 = vadd.f32 %v578, %v579
    %v581 = vadd.f32 %v557, %v561
    %v582 = vadd.f32 %v581, %v565
    %v583 = vadd.f32 %v582, %v569
    %v584 = vrot.slane %v583, 4
    %v585 = vadd.f32 %v583, %v584
    %v586 = vrot.slane %v585, 2
    %v587 = vadd.f32 %v585, %v586
    %v588 = vrot.slane %v587, 1
    %v589 = vadd.f32 %v587, %v588
    %v590 = vadd.f32 %v558, %v562
    %v591 = vadd.f32 %v590, %v566
    %v592 = vadd.f32 %v591, %v570
    %v593 = vrot.slane %v592, 4
    %v594 = vadd.f32 %v592, %v593
    %v595 = vrot.slane %v594, 2
    %v596 = vadd.f32 %v594, %v595
    %v597 = vrot.slane %v596, 1
    %v598 = vadd.f32 %v596, %v597
    %v599 = vadd.f32 %v559, %v563
    %v600 = vadd.f32 %v599, %v567
    %v601 = vadd.f32 %v600, %v571
    %v602 = vrot.slane %v601, 4
    %v603 = vadd.f32 %v601, %v602
    %v604 = vrot.slane %v603, 2
    %v605 = vadd.f32 %v603, %v604
    %v606 = vrot.slane %v605, 1
    %v607 = vadd.f32 %v605, %v606
    %vm608 = vcmask 1040384
    %v609 = vsel %vm608, %v528, %v580
    %v610 = vsel %vm608, %v537, %v589
    %v611 = vsel %vm608, %v546, %v598
    %v612 = vsel %vm608, %v555, %v607
    %613 = vst [vmem:[#allocation3] sm:$0xff] %v402
    %614 = vst [vmem:[#allocation3 + $0x8] sm:$0xff] %v453
    %615 = vst [vmem:[#allocation3 + $0x10] sm:$0xff] %v455
    %616 = vst [vmem:[#allocation3 + $0x18] sm:$0xff] %v506
    %617 = vst [vmem:[#allocation3 + $0x20] sm:$0xff] %v406
    %618 = vst [vmem:[#allocation3 + $0x28] sm:$0xff] %v457
    %619 = vst [vmem:[#allocation3 + $0x30] sm:$0xff] %v459
    %620 = vst [vmem:[#allocation3 + $0x38] sm:$0xff] %v509
    %621 = vst [vmem:[#allocation3 + $0x40] sm:$0xff] %v412
    %622 = vst [vmem:[#allocation3 + $0x48] sm:$0xff] %v463
    %623 = vst [vmem:[#allocation3 + $0x50] sm:$0xff] %v465
    %624 = vst [vmem:[#allocation3 + $0x58] sm:$0xff] %v514
    %625 = vst [vmem:[#allocation3 + $0x60] sm:$0xff] %v416
    %626 = vst [vmem:[#allocation3 + $0x68] sm:$0xff] %v467
    %627 = vst [vmem:[#allocation3 + $0x70] sm:$0xff] %v469
    %628 = vst [vmem:[#allocation3 + $0x78] sm:$0xff] %v517
    %v629 = vld [vmem:[%s3] sm:$0x1]
    %v630 = vld [vmem:[%s3 + $0x1] sm:$0x1]
    %v631 = vadd.f32 %v400, %v404
    %v632 = vadd.f32 %v631, %v410
    %v633 = vadd.f32 %v632, %v414
    %v634 = vrot.slane %v633, 4
    %v635 = vadd.f32 %v633, %v634
    %v636 = vrot.slane %v635, 2
    %v637 = vadd.f32 %v635, %v636
    %v638 = vrot.slane %v637, 1
    %v639 = vadd.f32 %v637, %v638
    %v640 = vmul.f32 %v400, %v400
    %v641 = vmul.f32 %v404, %v404
    %v642 = vmul.f32 %v410, %v410
    %v643 = vmul.f32 %v414, %v414
    %v644 = vadd.f32 %v640, %v641
    %v645 = vadd.f32 %v644, %v642
    %v646 = vadd.f32 %v645, %v643
    %v647 = vrot.slane %v646, 4
    %v648 = vadd.f32 %v646, %v647
    %v649 = vrot.slane %v648, 2
    %v650 = vadd.f32 %v648, %v649
    %v651 = vrot.slane %v650, 1
    %v652 = vadd.f32 %v650, %v651
    %v653 = vsel %vm608, %v639, %v652
    %v654 = vpack.c.bf16 %v653, %v653
    %v655 = vlaneseq
    %v656 = vshrl.u32 %v655, 7
    %v657 = vadd.s32 %v656, 8
    %v658 = vadd.s32 %v656, 16
    %v659 = vadd.s32 %v656, 24
    %v660 = vadd.s32 %v656, 32
    %v661 = vadd.s32 %v656, 40
    %v662 = vadd.s32 %v656, 48
    %v663 = vadd.s32 %v656, 56
    %v664 = vadd.s32 %v656, 64
    %v665 = vadd.s32 %v656, 72
    %v666 = vadd.s32 %v656, 80
    %v667 = vadd.s32 %v656, 88
    %v668 = vadd.s32 %v656, 96
    %v669 = vadd.s32 %v656, 104
    %v670 = vadd.s32 %v656, 112
    %v671 = vadd.s32 %v656, 120
    %vm672 = vcmp.lt.s32.totalorder %v656, 0
    %v673 = vsub.s32 0, %v656
    %v674 = vsel %vm672, %v673, %v656
    %v675 = vshrl.u32 %v674, 3
    %v676 = vand.u32 %v674, 7
    %v677 = vsub.s32 0, %v676
    %v678 = vsel %vm672, %v677, %v676
    %vm679 = vcmp.lt.s32.totalorder %v657, 0
    %v680 = vsub.s32 0, %v657
    %v681 = vsel %vm679, %v680, %v657
    %v682 = vshrl.u32 %v681, 3
    %v683 = vand.u32 %v681, 7
    %v684 = vsub.s32 0, %v683
    %v685 = vsel %vm679, %v684, %v683
    %vm686 = vcmp.lt.s32.totalorder %v658, 0
    %v687 = vsub.s32 0, %v658
    %v688 = vsel %vm686, %v687, %v658
    %v689 = vshrl.u32 %v688, 3
    %v690 = vand.u32 %v688, 7
    %v691 = vsub.s32 0, %v690
    %v692 = vsel %vm686, %v691, %v690
    %vm693 = vcmp.lt.s32.totalorder %v659, 0
    %v694 = vsub.s32 0, %v659
    %v695 = vsel %vm693, %v694, %v659
    %v696 = vshrl.u32 %v695, 3
    %v697 = vand.u32 %v695, 7
    %v698 = vsub.s32 0, %v697
    %v699 = vsel %vm693, %v698, %v697
    %vm700 = vcmp.lt.s32.totalorder %v660, 0
    %v701 = vsub.s32 0, %v660
    %v702 = vsel %vm700, %v701, %v660
    %v703 = vshrl.u32 %v702, 3
    %v704 = vand.u32 %v702, 7
    %v705 = vsub.s32 0, %v704
    %v706 = vsel %vm700, %v705, %v704
    %vm707 = vcmp.lt.s32.totalorder %v661, 0
    %v708 = vsub.s32 0, %v661
    %v709 = vsel %vm707, %v708, %v661
    %v710 = vshrl.u32 %v709, 3
    %v711 = vand.u32 %v709, 7
    %v712 = vsub.s32 0, %v711
    %v713 = vsel %vm707, %v712, %v711
    %vm714 = vcmp.lt.s32.totalorder %v662, 0
    %v715 = vsub.s32 0, %v662
    %v716 = vsel %vm714, %v715, %v662
    %v717 = vshrl.u32 %v716, 3
    %v718 = vand.u32 %v716, 7
    %v719 = vsub.s32 0, %v718
    %v720 = vsel %vm714, %v719, %v718
    %vm721 = vcmp.lt.s32.totalorder %v663, 0
    %v722 = vsub.s32 0, %v663
    %v723 = vsel %vm721, %v722, %v663
    %v724 = vshrl.u32 %v723, 3
    %v725 = vand.u32 %v723, 7
    %v726 = vsub.s32 0, %v725
    %v727 = vsel %vm721, %v726, %v725
    %vm728 = vcmp.lt.s32.totalorder %v664, 0
    %v729 = vsub.s32 0, %v664
    %v730 = vsel %vm728, %v729, %v664
    %v731 = vshrl.u32 %v730, 3
    %v732 = vand.u32 %v730, 7
    %v733 = vsub.s32 0, %v732
    %v734 = vsel %vm728, %v733, %v732
    %vm735 = vcmp.lt.s32.totalorder %v665, 0
    %v736 = vsub.s32 0, %v665
    %v737 = vsel %vm735, %v736, %v665
    %v738 = vshrl.u32 %v737, 3
    %v739 = vand.u32 %v737, 7
    %v740 = vsub.s32 0, %v739
    %v741 = vsel %vm735, %v740, %v739
    %vm742 = vcmp.lt.s32.totalorder %v666, 0
    %v743 = vsub.s32 0, %v666
    %v744 = vsel %vm742, %v743, %v666
    %v745 = vshrl.u32 %v744, 3
    %v746 = vand.u32 %v744, 7
    %v747 = vsub.s32 0, %v746
    %v748 = vsel %vm742, %v747, %v746
    %vm749 = vcmp.lt.s32.totalorder %v667, 0
    %v750 = vsub.s32 0, %v667
    %v751 = vsel %vm749, %v750, %v667
    %v752 = vshrl.u32 %v751, 3
    %v753 = vand.u32 %v751, 7
    %v754 = vsub.s32 0, %v753
    %v755 = vsel %vm749, %v754, %v753
    %vm756 = vcmp.lt.s32.totalorder %v668, 0
    %v757 = vsub.s32 0, %v668
    %v758 = vsel %vm756, %v757, %v668
    %v759 = vshrl.u32 %v758, 3
    %v760 = vand.u32 %v758, 7
    %v761 = vsub.s32 0, %v760
    %v762 = vsel %vm756, %v761, %v760
    %vm763 = vcmp.lt.s32.totalorder %v669, 0
    %v764 = vsub.s32 0, %v669
    %v765 = vsel %vm763, %v764, %v669
    %v766 = vshrl.u32 %v765, 3
    %v767 = vand.u32 %v765, 7
    %v768 = vsub.s32 0, %v767
    %v769 = vsel %vm763, %v768, %v767
    %vm770 = vcmp.lt.s32.totalorder %v670, 0
    %v771 = vsub.s32 0, %v670
    %v772 = vsel %vm770, %v771, %v670
    %v773 = vshrl.u32 %v772, 3
    %v774 = vand.u32 %v772, 7
    %v775 = vsub.s32 0, %v774
    %v776 = vsel %vm770, %v775, %v774
    %vm777 = vcmp.lt.s32.totalorder %v671, 0
    %v778 = vsub.s32 0, %v671
    %v779 = vsel %vm777, %v778, %v671
    %v780 = vshrl.u32 %v779, 3
    %v781 = vand.u32 %v779, 7
    %v782 = vsub.s32 0, %v781
    %v783 = vsel %vm777, %v782, %v781
    %vm784 = vcmp.ne.s32.totalorder %v678, 0
    %vm785 = vcmp.ne.s32.totalorder %v685, 0
    %vm786 = vcmp.ne.s32.totalorder %v692, 0
    %vm787 = vcmp.ne.s32.totalorder %v699, 0
    %vm788 = vcmp.ne.s32.totalorder %v706, 0
    %vm789 = vcmp.ne.s32.totalorder %v713, 0
    %vm790 = vcmp.ne.s32.totalorder %v720, 0
    %vm791 = vcmp.ne.s32.totalorder %v727, 0
    %vm792 = vcmp.ne.s32.totalorder %v734, 0
    %vm793 = vcmp.ne.s32.totalorder %v741, 0
    %vm794 = vcmp.ne.s32.totalorder %v748, 0
    %vm795 = vcmp.ne.s32.totalorder %v755, 0
    %vm796 = vcmp.ne.s32.totalorder %v762, 0
    %vm797 = vcmp.ne.s32.totalorder %v769, 0
    %vm798 = vcmp.ne.s32.totalorder %v776, 0
    %vm799 = vcmp.ne.s32.totalorder %v783, 0
    %vm800 = vcmp.lt.s32.totalorder %v678, 0
    %vm801 = vcmp.lt.s32.totalorder %v685, 0
    %vm802 = vcmp.lt.s32.totalorder %v692, 0
    %vm803 = vcmp.lt.s32.totalorder %v699, 0
    %vm804 = vcmp.lt.s32.totalorder %v706, 0
    %vm805 = vcmp.lt.s32.totalorder %v713, 0
    %vm806 = vcmp.lt.s32.totalorder %v720, 0
    %vm807 = vcmp.lt.s32.totalorder %v727, 0
    %vm808 = vcmp.lt.s32.totalorder %v734, 0
    %vm809 = vcmp.lt.s32.totalorder %v741, 0
    %vm810 = vcmp.lt.s32.totalorder %v748, 0
    %vm811 = vcmp.lt.s32.totalorder %v755, 0
    %vm812 = vcmp.lt.s32.totalorder %v762, 0
    %vm813 = vcmp.lt.s32.totalorder %v769, 0
    %vm814 = vcmp.lt.s32.totalorder %v776, 0
    %vm815 = vcmp.lt.s32.totalorder %v783, 0
    %vm816 = vmand %vm800, %vm784
    %vm817 = vmand %vm801, %vm785
    %vm818 = vmand %vm802, %vm786
    %vm819 = vmand %vm803, %vm787
    %vm820 = vmand %vm804, %vm788
    %vm821 = vmand %vm805, %vm789
    %vm822 = vmand %vm806, %vm790
    %vm823 = vmand %vm807, %vm791
    %vm824 = vmand %vm808, %vm792
    %vm825 = vmand %vm809, %vm793
    %vm826 = vmand %vm810, %vm794
    %vm827 = vmand %vm811, %vm795
    %vm828 = vmand %vm812, %vm796
    %vm829 = vmand %vm813, %vm797
    %vm830 = vmand %vm814, %vm798
    %vm831 = vmand %vm815, %vm799
    %v832 = vadd.s32 %v678, 8
    %v833 = vadd.s32 %v685, 8
    %v834 = vadd.s32 %v692, 8
    %v835 = vadd.s32 %v699, 8
    %v836 = vadd.s32 %v706, 8
    %v837 = vadd.s32 %v713, 8
    %v838 = vadd.s32 %v720, 8
    %v839 = vadd.s32 %v727, 8
    %v840 = vadd.s32 %v734, 8
    %v841 = vadd.s32 %v741, 8
    %v842 = vadd.s32 %v748, 8
    %v843 = vadd.s32 %v755, 8
    %v844 = vadd.s32 %v762, 8
    %v845 = vadd.s32 %v769, 8
    %v846 = vadd.s32 %v776, 8
    %v847 = vadd.s32 %v783, 8
    %v848 = vsel %vm816, %v832, %v678
    %v849 = vsel %vm817, %v833, %v685
    %v850 = vsel %vm818, %v834, %v692
    %v851 = vsel %vm819, %v835, %v699
    %v852 = vsel %vm820, %v836, %v706
    %v853 = vsel %vm821, %v837, %v713
    %v854 = vsel %vm822, %v838, %v720
    %v855 = vsel %vm823, %v839, %v727
    %v856 = vsel %vm824, %v840, %v734
    %v857 = vsel %vm825, %v841, %v741
    %v858 = vsel %vm826, %v842, %v748
    %v859 = vsel %vm827, %v843, %v755
    %v860 = vsel %vm828, %v844, %v762
    %v861 = vsel %vm829, %v845, %v769
    %v862 = vsel %vm830, %v846, %v776
    %v863 = vsel %vm831, %v847, %v783
    %v864 = vlaneseq
    %v865 = vand.u32 %v864, 127
    %vm866 = vcmp.eq.s32.totalorder %v848, %v865
    %vm867 = vcmp.eq.s32.totalorder %v849, %v865
    %vm868 = vcmp.eq.s32.totalorder %v850, %v865
    %vm869 = vcmp.eq.s32.totalorder %v851, %v865
    %vm870 = vcmp.eq.s32.totalorder %v852, %v865
    %vm871 = vcmp.eq.s32.totalorder %v853, %v865
    %vm872 = vcmp.eq.s32.totalorder %v854, %v865
    %vm873 = vcmp.eq.s32.totalorder %v855, %v865
    %vm874 = vcmp.eq.s32.totalorder %v856, %v865
    %vm875 = vcmp.eq.s32.totalorder %v857, %v865
    %vm876 = vcmp.eq.s32.totalorder %v858, %v865
    %vm877 = vcmp.eq.s32.totalorder %v859, %v865
    %vm878 = vcmp.eq.s32.totalorder %v860, %v865
    %vm879 = vcmp.eq.s32.totalorder %v861, %v865
    %vm880 = vcmp.eq.s32.totalorder %v862, %v865
    %vm881 = vcmp.eq.s32.totalorder %v863, %v865
    %v882 = vsel %vm866, 1, 0
    %v883 = vsel %vm867, 1, 0
    %v884 = vsel %vm868, 1, 0
    %v885 = vsel %vm869, 1, 0
    %v886 = vsel %vm870, 1, 0
    %v887 = vsel %vm871, 1, 0
    %v888 = vsel %vm872, 1, 0
    %v889 = vsel %vm873, 1, 0
    %v890 = vsel %vm874, 1, 0
    %v891 = vsel %vm875, 1, 0
    %v892 = vsel %vm876, 1, 0
    %v893 = vsel %vm877, 1, 0
    %v894 = vsel %vm878, 1, 0
    %v895 = vsel %vm879, 1, 0
    %v896 = vsel %vm880, 1, 0
    %v897 = vsel %vm881, 1, 0
    %v898 = vcvt.s32.f32 %v882
    %v899 = vcvt.s32.f32 %v883
    %v900 = vcvt.s32.f32 %v884
    %v901 = vcvt.s32.f32 %v885
    %v902 = vcvt.s32.f32 %v886
    %v903 = vcvt.s32.f32 %v887
    %v904 = vcvt.s32.f32 %v888
    %v905 = vcvt.s32.f32 %v889
    %v906 = vcvt.s32.f32 %v890
    %v907 = vcvt.s32.f32 %v891
    %v908 = vcvt.s32.f32 %v892
    %v909 = vcvt.s32.f32 %v893
    %v910 = vcvt.s32.f32 %v894
    %v911 = vcvt.s32.f32 %v895
    %v912 = vcvt.s32.f32 %v896
    %v913 = vcvt.s32.f32 %v897
    %v914 = vpack.c.bf16 %v899, %v898
    %v915 = vpack.c.bf16 %v901, %v900
    %v916 = vpack.c.bf16 %v903, %v902
    %v917 = vpack.c.bf16 %v905, %v904
    %v918 = vpack.c.bf16 %v907, %v906
    %v919 = vpack.c.bf16 %v909, %v908
    %v920 = vpack.c.bf16 %v911, %v910
    %v921 = vpack.c.bf16 %v913, %v912
    %922 = vmatprep.subr.bf16.mxu0 0
    %923 = vmatpush1.bf16.msra.mxu0 %v914
    %924 = vmatprep.subr.bf16.mxu0 0
    %925 = vmatpush1.bf16.msra.mxu0 %v915
    %926 = vmatprep.subr.bf16.mxu0 0
    %927 = vmatpush1.bf16.msra.mxu0 %v916
    %928 = vmatprep.subr.bf16.mxu0 0
    %929 = vmatpush1.bf16.msra.mxu0 %v917
    %930 = vmatprep.subr.bf16.mxu0 0
    %931 = vmatpush1.bf16.msra.mxu0 %v918
    %932 = vmatprep.subr.bf16.mxu0 0
    %933 = vmatpush1.bf16.msra.mxu0 %v919
    %934 = vmatprep.subr.bf16.mxu0 0
    %935 = vmatpush1.bf16.msra.mxu0 %v920
    %936 = vmatprep.subr.bf16.mxu0 0
    %937 = vmatpush1.bf16.msra.mxu0 %v921
    %938 = vmatprep.subr.bf16.mxu0 0
    %939 = vmatpush1.bf16.msra.mxu0 0
    %940 = vmatprep.subr.bf16.mxu0 0
    %941 = vmatpush1.bf16.msra.mxu0 0
    %942 = vmatprep.subr.bf16.mxu0 0
    %943 = vmatpush1.bf16.msra.mxu0 0
    %944 = vmatprep.subr.bf16.mxu0 0
    %945 = vmatpush1.bf16.msra.mxu0 0
    %946 = vmatprep.subr.bf16.mxu0 0
    %947 = vmatpush1.bf16.msra.mxu0 0
    %948 = vmatprep.subr.bf16.mxu0 0
    %949 = vmatpush1.bf16.msra.mxu0 0
    %950 = vmatprep.subr.bf16.mxu0 0
    %951 = vmatpush1.bf16.msra.mxu0 0
    %952 = vmatprep.subr.bf16.mxu0 0
    %953 = vmatpush1.bf16.msra.mxu0 0
    %954 = vmatprep.mubr.bf16.mxu0 0
    %955 = vmatmul.mubr.bf16.gmra.mrb[0].mxu0 %v654
    %v956 = vpop.f32.mrb[0].mxu0
    %v957 = vadd.f32 0.0, %v956
    %v958 = vpop.f32.mrb[0].mxu0
    %v959 = vpop.f32.mrb[0].mxu0
    %v960 = vpop.f32.mrb[0].mxu0
    %961 = vdwg.mxu0
    %v962 = vmul.f32 %v957, 0.001953125
    %v963 = vmul.f32 %v962, %v962
    %v965 = vrot.slane %v963, 7
    %v967 = vsub.f32 %v962, %v965
    %v968 = vadd.f32 %v967, 1e-05
    %v969 = vrsqrt.pop %v968
    %v971 = vrot.slane %v969, 1
    %v973 = vmul.f32 %v629, %v971
    %v974 = vmul.f32 %v962, %v973
    %v975 = vsub.f32 %v630, %v974
    %v977 = vrot.slane %v975, 7
    %v979 = vsel %vm608, %v973, %v977
    %v980 = vpack.c.bf16 %v979, %v979
    %vm981 = vcmp.lt.s32.totalorder %v865, 0
    %v982 = vsub.s32 0, %v865
    %v983 = vsel %vm981, %v982, %v865
    %v984 = vshrl.u32 %v983, 3
    %v985 = vand.u32 %v983, 7
    %v986 = vsub.s32 0, %v985
    %v987 = vsel %vm981, %v986, %v985
    %vm988 = vcmp.ne.s32.totalorder %v987, 0
    %vm989 = vcmp.lt.s32.totalorder %v987, 0
    %vm990 = vmand %vm989, %vm988
    %v991 = vadd.s32 %v987, 8
    %v992 = vsel %vm990, %v991, %v987
    %vm993 = vcmp.eq.s32.totalorder %v992, %v656
    %v994 = vsel %vm993, 1, 0
    %v995 = vcvt.s32.f32 %v994
    %v996 = vpack.c.bf16 %v995, %v995
    %vm997 = vcmask 64512
    %v999 = vsel %vm997, %v980, 0
    %vm1001 = vcmask 1043456
    %v1003 = vsel %vm1001, %v996, 0
    %1005 = vmatprep.subr.bf16.mxu0 0
    %1006 = vmatpush1.bf16.msra.mxu0 %v1003
    %1007 = vmatprep.subr.bf16.mxu0 0
    %1008 = vmatpush1.bf16.msra.mxu0 0
    %1009 = vmatprep.subr.bf16.mxu0 0
    %1010 = vmatpush1.bf16.msra.mxu0 0
    %1011 = vmatprep.subr.bf16.mxu0 0
    %1012 = vmatpush1.bf16.msra.mxu0 0
    %1013 = vmatprep.subr.bf16.mxu0 0
    %1014 = vmatpush1.bf16.msra.mxu0 0
    %1015 = vmatprep.subr.bf16.mxu0 0
    %1016 = vmatpush1.bf16.msra.mxu0 0
    %1017 = vmatprep.subr.bf16.mxu0 0
    %1018 = vmatpush1.bf16.msra.mxu0 0
    %1019 = vmatprep.subr.bf16.mxu0 0
    %1020 = vmatpush1.bf16.msra.mxu0 0
    %1021 = vmatprep.subr.bf16.mxu0 0
    %1022 = vmatpush1.bf16.msra.mxu0 0
    %1023 = vmatprep.subr.bf16.mxu0 0
    %1024 = vmatpush1.bf16.msra.mxu0 0
    %1025 = vmatprep.subr.bf16.mxu0 0
    %1026 = vmatpush1.bf16.msra.mxu0 0
    %1027 = vmatprep.subr.bf16.mxu0 0
    %1028 = vmatpush1.bf16.msra.mxu0 0
    %1029 = vmatprep.subr.bf16.mxu0 0
    %1030 = vmatpush1.bf16.msra.mxu0 0
    %1031 = vmatprep.subr.bf16.mxu0 0
    %1032 = vmatpush1.bf16.msra.mxu0 0
    %1033 = vmatprep.subr.bf16.mxu0 0
    %1034 = vmatpush1.bf16.msra.mxu0 0
    %1035 = vmatprep.subr.bf16.mxu0 0
    %1036 = vmatpush1.bf16.msra.mxu0 0
    %1037 = vmatprep.mubr.bf16.mxu0 0
    %1038 = vmatmul.mubr.bf16.gmra.mrb[0].mxu0 %v999
    %v1039 = vpop.f32.mrb[0].mxu0
    %v1040 = vadd.f32 0.0, %v1039
    %v1041 = vpop.f32.mrb[0].mxu0
    %v1042 = vpop.f32.mrb[0].mxu0
    %v1043 = vpop.f32.mrb[0].mxu0
    %1044 = vdwg.mxu0
    %v1045 = vlaneseq
    %v1046 = vshrl.u32 %v1045, 7
    %v1047 = vsub.s32 0, %v1046
    %v1048 = vrot.slane %v1040, %v1047
    %v1049 = vmul.f32 %v400, %v1048
    %v1050 = vmul.f32 %v404, %v1048
    %v1051 = vmul.f32 %v410, %v1048
    %v1052 = vmul.f32 %v414, %v1048
    %v1053 = vlaneseq
    %v1054 = vshrl.u32 %v1053, 7
    %v1055 = vsub.s32 1, %v1054
    %v1056 = vrot.slane %v1040, %v1055
    %v1057 = vadd.f32 %v1049, %v1056
    %v1058 = vadd.f32 %v1050, %v1056
    %v1059 = vadd.f32 %v1051, %v1056
    %v1060 = vadd.f32 %v1052, %v1056
    %v1061 = vmax.f32 %v1057, 0.0
    %v1062 = vmax.f32 %v1058, 0.0
    %v1063 = vmax.f32 %v1059, 0.0
    %v1064 = vmax.f32 %v1060, 0.0
    %s1065 = smul.u32 4, 16
    %s1066 = smul.u32 %s1065, 3
    %s1067 = sshll.u32 %s1066, 4
    %1068 = dma.done [#allocation4], %s1067
    %v1069 = vpack.c.bf16 %v1062, %v1061
    %v1070 = vpack.c.bf16 %v1064, %v1063
    %v1071 = vld [vmem:[#allocation2] sm:$0xff]
    %v1072 = vld [vmem:[#allocation2 + $0x8] sm:$0xff]
    %v1073 = vld [vmem:[#allocation2 + $0x10] sm:$0xff]
    %v1074 = vld [vmem:[#allocation2 + $0x38] sm:$0xff]
    %v1075 = vld [vmem:[#allocation2 + $0x40] sm:$0xff]
    %v1076 = vld [vmem:[#allocation2 + $0x48] sm:$0xff]
    %v1077 = vld [vmem:[#allocation2 + $0x70] sm:$0xff]
    %v1078 = vld [vmem:[#allocation2 + $0x78] sm:$0xff]
    %v1079 = vld [vmem:[#allocation2 + $0x80] sm:$0xff]
    %v1080 = vld [vmem:[#allocation2 + $0xa8] sm:$0xff]
    %v1081 = vld [vmem:[#allocation2 + $0xb0] sm:$0xff]
    %v1082 = vld [vmem:[#allocation2 + $0xb8] sm:$0xff]
    %v1083 = vld [vmem:[#allocation2 + $0xe0] sm:$0xff]
    %v1084 = vld [vmem:[#allocation2 + $0xe8] sm:$0xff]
    %v1085 = vld [vmem:[#allocation2 + $0xf0] sm:$0xff]
    %v1086 = vld [vmem:[#allocation2 + $0x118] sm:$0xff]
    %v1087 = vld [vmem:[#allocation2 + $0x120] sm:$0xff]
    %v1088 = vld [vmem:[#allocation2 + $0x128] sm:$0xff]
    %v1089 = vld [vmem:[#allocation2 + $0x150] sm:$0xff]
    %v1090 = vld [vmem:[#allocation2 + $0x158] sm:$0xff]
    %v1091 = vld [vmem:[#allocation2 + $0x160] sm:$0xff]
    %v1092 = vld [vmem:[#allocation2 + $0x188] sm:$0xff]
    %v1093 = vld [vmem:[#allocation2 + $0x190] sm:$0xff]
    %v1094 = vld [vmem:[#allocation2 + $0x198] sm:$0xff]
    %1095 = vmatprep.subr.bf16.mxu0 %v1072
    %1096 = vmatpush1.bf16.msra.mxu0 %v1071
    %1097 = vmatprep.subr.bf16.mxu0 %v1075
    %1098 = vmatpush1.bf16.msra.mxu0 %v1074
    %1099 = vmatprep.subr.bf16.mxu0 %v1078
    %1100 = vmatpush1.bf16.msra.mxu0 %v1077
    %1101 = vmatprep.subr.bf16.mxu0 %v1081
    %1102 = vmatpush1.bf16.msra.mxu0 %v1080
    %1103 = vmatprep.subr.bf16.mxu0 %v1084
    %1104 = vmatpush1.bf16.msra.mxu0 %v1083
    %1105 = vmatprep.subr.bf16.mxu0 %v1087
    %1106 = vmatpush1.bf16.msra.mxu0 %v1086
    %1107 = vmatprep.subr.bf16.mxu0 %v1090
    %1108 = vmatpush1.bf16.msra.mxu0 %v1089
    %1109 = vmatprep.subr.bf16.mxu0 %v1093
    %1110 = vmatpush1.bf16.msra.mxu0 %v1092
    %1111 = vmatprep.subr.bf16.mxu0 0
    %1112 = vmatpush1.bf16.msra.mxu0 0
    %1113 = vmatprep.subr.bf16.mxu0 0
    %1114 = vmatpush1.bf16.msra.mxu0 0
    %1115 = vmatprep.subr.bf16.mxu0 0
    %1116 = vmatpush1.bf16.msra.mxu0 0
    %1117 = vmatprep.subr.bf16.mxu0 0
    %1118 = vmatpush1.bf16.msra.mxu0 0
    %1119 = vmatprep.subr.bf16.mxu0 0
    %1120 = vmatpush1.bf16.msra.mxu0 0
    %1121 = vmatprep.subr.bf16.mxu0 0
    %1122 = vmatpush1.bf16.msra.mxu0 0
    %1123 = vmatprep.subr.bf16.mxu0 0
    %1124 = vmatpush1.bf16.msra.mxu0 0
    %1125 = vmatprep.subr.bf16.mxu0 0
    %1126 = vmatpush1.bf16.msra.mxu0 0
    %1127 = vmatprep.mubr.bf16.mxu0 0
    %1128 = vmatmul.mubr.bf16.gmra.mrb[0].mxu0 %v1069
    %v1129 = vpop.f32.mrb[0].mxu0
    %v1130 = vadd.f32 0.0, %v1129
    %v1131 = vpop.f32.mrb[0].mxu0
    %v1132 = vadd.f32 0.0, %v1131
    %v1133 = vpop.f32.mrb[0].mxu0
    %v1134 = vadd.f32 0.0, %v1133
    %v1135 = vpop.f32.mrb[0].mxu0
    %v1136 = vadd.f32 0.0, %v1135
    %1137 = vmatprep.mubr.bf16.mxu0 0
    %1138 = vmatmul.mubr.bf16.gmra.mrb[0].mxu0 %v1070
    %v1139 = vpop.f32.mrb[0].mxu0
    %v1140 = vadd.f32 0.0, %v1139
    %v1141 = vpop.f32.mrb[0].mxu0
    %v1142 = vadd.f32 0.0, %v1141
    %v1143 = vpop.f32.mrb[0].mxu0
    %v1144 = vadd.f32 0.0, %v1143
    %v1145 = vpop.f32.mrb[0].mxu0
    %v1146 = vadd.f32 0.0, %v1145
    %1147 = vdwg.mxu0
    %1148 = vmatprep.subr.bf16.mxu0 0
    %1149 = vmatpush1.bf16.msra.mxu0 %v1073
    %1150 = vmatprep.subr.bf16.mxu0 0
    %1151 = vmatpush1.bf16.msra.mxu0 %v1076
    %1152 = vmatprep.subr.bf16.mxu0 0
    %1153 = vmatpush1.bf16.msra.mxu0 %v1079
    %1154 = vmatprep.subr.bf16.mxu0 0
    %1155 = vmatpush1.bf16.msra.mxu0 %v1082
    %1156 = vmatprep.subr.bf16.mxu0 0
    %1157 = vmatpush1.bf16.msra.mxu0 %v1085
    %1158 = vmatprep.subr.bf16.mxu0 0
    %1159 = vmatpush1.bf16.msra.mxu0 %v1088
    %1160 = vmatprep.subr.bf16.mxu0 0
    %1161 = vmatpush1.bf16.msra.mxu0 %v1091
    %1162 = vmatprep.subr.bf16.mxu0 0
    %1163 = vmatpush1.bf16.msra.mxu0 %v1094
    %1164 = vmatprep.subr.bf16.mxu0 0
    %1165 = vmatpush1.bf16.msra.mxu0 0
    %1166 = vmatprep.subr.bf16.mxu0 0
    %1167 = vmatpush1.bf16.msra.mxu0 0
    %1168 = vmatprep.subr.bf16.mxu0 0
    %1169 = vmatpush1.bf16.msra.mxu0 0
    %1170 = vmatprep.subr.bf16.mxu0 0
    %1171 = vmatpush1.bf16.msra.mxu0 0
    %1172 = vmatprep.subr.bf16.mxu0 0
    %1173 = vmatpush1.bf16.msra.mxu0 0
    %1174 = vmatprep.subr.bf16.mxu0 0
    %1175 = vmatpush1.bf16.msra.mxu0 0
    %1176 = vmatprep.subr.bf16.mxu0 0
    %1177 = vmatpush1.bf16.msra.mxu0 0
    %1178 = vmatprep.subr.bf16.mxu0 0
    %1179 = vmatpush1.bf16.msra.mxu0 0
    %1180 = vmatprep.mubr.bf16.mxu0 0
    %1181 = vmatmul.mubr.bf16.gmra.mrb[0].mxu0 %v1069
    %v1182 = vpop.f32.mrb[0].mxu0
    %v1183 = vadd.f32 0.0, %v1182
    %v1184 = vpop.f32.mrb[0].mxu0
    %v1185 = vpop.f32.mrb[0].mxu0
    %v1186 = vadd.f32 0.0, %v1185
    %v1187 = vpop.f32.mrb[0].mxu0
    %1188 = vmatprep.mubr.bf16.mxu0 0
    %1189 = vmatmul.mubr.bf16.gmra.mrb[0].mxu0 %v1070
    %v1190 = vpop.f32.mrb[0].mxu0
    %v1191 = vadd.f32 0.0, %v1190
    %v1192 = vpop.f32.mrb[0].mxu0
    %v1193 = vpop.f32.mrb[0].mxu0
    %v1194 = vadd.f32 0.0, %v1193
    %v1195 = vpop.f32.mrb[0].mxu0
    %1196 = vdwg.mxu0
    %vm1197 = vcmp.lt.s32.totalorder %v656, 0
    %v1198 = vsub.s32 0, %v656
    %v1199 = vsel %vm1197, %v1198, %v656
    %v1200 = vshrl.u32 %v1199, 4
    %v1201 = vand.u32 %v1199, 15
    %v1202 = vsub.s32 0, %v1201
    %v1203 = vsel %vm1197, %v1202, %v1201
    %vm1204 = vcmp.lt.s32.totalorder %v657, 0
    %v1205 = vsub.s32 0, %v657
    %v1206 = vsel %vm1204, %v1205, %v657
    %v1207 = vshrl.u32 %v1206, 4
    %v1208 = vand.u32 %v1206, 15
    %v1209 = vsub.s32 0, %v1208
    %v1210 = vsel %vm1204, %v1209, %v1208
    %vm1211 = vcmp.lt.s32.totalorder %v658, 0
    %v1212 = vsub.s32 0, %v658
    %v1213 = vsel %vm1211, %v1212, %v658
    %v1214 = vshrl.u32 %v1213, 4
    %v1215 = vand.u32 %v1213, 15
    %v1216 = vsub.s32 0, %v1215
    %v1217 = vsel %vm1211, %v1216, %v1215
    %vm1218 = vcmp.lt.s32.totalorder %v659, 0
    %v1219 = vsub.s32 0, %v659
    %v1220 = vsel %vm1218, %v1219, %v659
    %v1221 = vshrl.u32 %v1220, 4
    %v1222 = vand.u32 %v1220, 15
    %v1223 = vsub.s32 0, %v1222
    %v1224 = vsel %vm1218, %v1223, %v1222
    %vm1225 = vcmp.ne.s32.totalorder %v1203, 0
    %vm1226 = vcmp.ne.s32.totalorder %v1210, 0
    %vm1227 = vcmp.ne.s32.totalorder %v1217, 0
    %vm1228 = vcmp.ne.s32.totalorder %v1224, 0
    %vm1229 = vcmp.lt.s32.totalorder %v1203, 0
    %vm1230 = vcmp.lt.s32.totalorder %v1210, 0
    %vm1231 = vcmp.lt.s32.totalorder %v1217, 0
    %vm1232 = vcmp.lt.s32.totalorder %v1224, 0
    %vm1233 = vmand %vm1229, %vm1225
    %vm1234 = vmand %vm1230, %vm1226
    %vm1235 = vmand %vm1231, %vm1227
    %vm1236 = vmand %vm1232, %vm1228
    %v1237 = vadd.s32 %v1203, 16
    %v1238 = vadd.s32 %v1210, 16
    %v1239 = vadd.s32 %v1217, 16
    %v1240 = vadd.s32 %v1224, 16
    %v1241 = vsel %vm1233, %v1237, %v1203
    %v1242 = vsel %vm1234, %v1238, %v1210
    %v1243 = vsel %vm1235, %v1239, %v1217
    %v1244 = vsel %vm1236, %v1240, %v1224
    %vm1245 = vcmp.ne.s32.totalorder %v1241, 0
    %vm1246 = vcmp.ne.s32.totalorder %v1242, 0
    %vm1247 = vcmp.ne.s32.totalorder %v1243, 0
    %vm1248 = vcmp.ne.s32.totalorder %v1244, 0
    %v1249 = vrot.slane %v1130, 7
    %v1250 = vrot.slane %v1134, 7
    %v1251 = vrot.slane %v1140, 7
    %v1252 = vrot.slane %v1144, 7
    %vm1253 = vcmp.lt.s32.totalorder %v656, 1
    %v1254 = vsel %vm1253, %v1251, %v1252
    %v1255 = vsel %vm1253, %v1250, %v1251
    %v1256 = vsel %vm1253, %v1249, %v1250
    %v1257 = vsel %vm1253, %v1252, %v1249
    %v1258 = vsel %vm1245, %v1257, 0.0
    %v1259 = vsel %vm1246, %v1256, 0.0
    %v1260 = vsel %vm1247, %v1255, 0.0
    %v1261 = vsel %vm1248, %v1254, 0.0
    %vm1262 = vcmp.ne.s32.totalorder %v1241, 15
    %vm1263 = vcmp.ne.s32.totalorder %v1242, 15
    %vm1264 = vcmp.ne.s32.totalorder %v1243, 15
    %vm1265 = vcmp.ne.s32.totalorder %v1244, 15
    %v1266 = vrot.slane %v1183, 1
    %v1267 = vrot.slane %v1186, 1
    %v1268 = vrot.slane %v1191, 1
    %v1269 = vrot.slane %v1194, 1
    %vm1270 = vcmp.lt.s32.totalorder %v656, 7
    %v1271 = vsel %vm1270, %v1268, %v1269
    %v1272 = vsel %vm1270, %v1267, %v1268
    %v1273 = vsel %vm1270, %v1266, %v1267
    %v1274 = vsel %vm1270, %v1269, %v1266
    %v1275 = vsel %vm1262, %v1273, 0.0
    %v1276 = vsel %vm1263, %v1272, 0.0
    %v1277 = vsel %vm1264, %v1271, 0.0
    %v1278 = vsel %vm1265, %v1274, 0.0
    %v1279 = vadd.f32 %v1258, %v1132
    %v1280 = vadd.f32 %v1259, %v1136
    %v1281 = vadd.f32 %v1260, %v1142
    %v1282 = vadd.f32 %v1261, %v1146
    %v1283 = vadd.f32 %v1279, %v1275
    %v1284 = vadd.f32 %v1280, %v1276
    %v1285 = vadd.f32 %v1281, %v1277
    %v1286 = vadd.f32 %v1282, %v1278
    %v1287 = vld [vmem:[%s3 + $0x2] sm:$0x1]
    %v1288 = vld [vmem:[%s3 + $0x3] sm:$0x1]
    %v1289 = vadd.f32 %v1283, %v1284
    %v1290 = vadd.f32 %v1289, %v1285
    %v1291 = vadd.f32 %v1290, %v1286
    %v1292 = vrot.slane %v1291, 4
    %v1293 = vadd.f32 %v1291, %v1292
    %v1294 = vrot.slane %v1293, 2
    %v1295 = vadd.f32 %v1293, %v1294
    %v1296 = vrot.slane %v1295, 1
    %v1297 = vadd.f32 %v1295, %v1296
    %v1298 = vmul.f32 %v1283, %v1283
    %v1299 = vmul.f32 %v1284, %v1284
    %v1300 = vmul.f32 %v1285, %v1285
    %v1301 = vmul.f32 %v1286, %v1286
    %v1302 = vadd.f32 %v1298, %v1299
    %v1303 = vadd.f32 %v1302, %v1300
    %v1304 = vadd.f32 %v1303, %v1301
    %v1305 = vrot.slane %v1304, 4
    %v1306 = vadd.f32 %v1304, %v1305
    %v1307 = vrot.slane %v1306, 2
    %v1308 = vadd.f32 %v1306, %v1307
    %v1309 = vrot.slane %v1308, 1
    %v1310 = vadd.f32 %v1308, %v1309
    %v1311 = vsel %vm608, %v1297, %v1310
    %v1312 = vpack.c.bf16 %v1311, %v1311
    %1313 = vmatprep.subr.bf16.mxu0 0
    %1314 = vmatpush1.bf16.msra.mxu0 %v914
    %1315 = vmatprep.subr.bf16.mxu0 0
    %1316 = vmatpush1.bf16.msra.mxu0 %v915
    %1317 = vmatprep.subr.bf16.mxu0 0
    %1318 = vmatpush1.bf16.msra.mxu0 %v916
    %1319 = vmatprep.subr.bf16.mxu0 0
    %1320 = vmatpush1.bf16.msra.mxu0 %v917
    %1321 = vmatprep.subr.bf16.mxu0 0
    %1322 = vmatpush1.bf16.msra.mxu0 %v918
    %1323 = vmatprep.subr.bf16.mxu0 0
    %1324 = vmatpush1.bf16.msra.mxu0 %v919
    %1325 = vmatprep.subr.bf16.mxu0 0
    %1326 = vmatpush1.bf16.msra.mxu0 %v920
    %1327 = vmatprep.subr.bf16.mxu0 0
    %1328 = vmatpush1.bf16.msra.mxu0 %v921
    %1329 = vmatprep.subr.bf16.mxu0 0
    %1330 = vmatpush1.bf16.msra.mxu0 0
    %1331 = vmatprep.subr.bf16.mxu0 0
    %1332 = vmatpush1.bf16.msra.mxu0 0
    %1333 = vmatprep.subr.bf16.mxu0 0
    %1334 = vmatpush1.bf16.msra.mxu0 0
    %1335 = vmatprep.subr.bf16.mxu0 0
    %1336 = vmatpush1.bf16.msra.mxu0 0
    %1337 = vmatprep.subr.bf16.mxu0 0
    %1338 = vmatpush1.bf16.msra.mxu0 0
    %1339 = vmatprep.subr.bf16.mxu0 0
    %1340 = vmatpush1.bf16.msra.mxu0 0
    %1341 = vmatprep.subr.bf16.mxu0 0
    %1342 = vmatpush1.bf16.msra.mxu0 0
    %1343 = vmatprep.subr.bf16.mxu0 0
    %1344 = vmatpush1.bf16.msra.mxu0 0
    %1345 = vmatprep.mubr.bf16.mxu0 0
    %1346 = vmatmul.mubr.bf16.gmra.mrb[0].mxu0 %v1312
    %v1347 = vpop.f32.mrb[0].mxu0
    %v1348 = vadd.f32 0.0, %v1347
    %v1349 = vpop.f32.mrb[0].mxu0
    %v1350 = vpop.f32.mrb[0].mxu0
    %v1351 = vpop.f32.mrb[0].mxu0
    %1352 = vdwg.mxu0
    %v1353 = vmul.f32 %v1348, 0.001953125
    %v1354 = vmul.f32 %v1353, %v1353
    %v1356 = vrot.slane %v1354, 7
    %v1358 = vsub.f32 %v1353, %v1356
    %v1359 = vadd.f32 %v1358, 1e-05
    %v1360 = vrsqrt.pop %v1359
    %v1362 = vrot.slane %v1360, 1
    %v1364 = vmul.f32 %v1287, %v1362
    %v1365 = vmul.f32 %v1353, %v1364
    %v1366 = vsub.f32 %v1288, %v1365
    %v1368 = vrot.slane %v1366, 7
    %v1370 = vsel %vm608, %v1364, %v1368
    %v1371 = vpack.c.bf16 %v1370, %v1370
    %v1373 = vsel %vm997, %v1371, 0
    %1375 = vmatprep.subr.bf16.mxu0 0
    %1376 = vmatpush1.bf16.msra.mxu0 %v1003
    %1377 = vmatprep.subr.bf16.mxu0 0
    %1378 = vmatpush1.bf16.msra.mxu0 0
    %1379 = vmatprep.subr.bf16.mxu0 0
    %1380 = vmatpush1.bf16.msra.mxu0 0
    %1381 = vmatprep.subr.bf16.mxu0 0
    %1382 = vmatpush1.bf16.msra.mxu0 0
    %1383 = vmatprep.subr.bf16.mxu0 0
    %1384 = vmatpush1.bf16.msra.mxu0 0
    %1385 = vmatprep.subr.bf16.mxu0 0
    %1386 = vmatpush1.bf16.msra.mxu0 0
    %1387 = vmatprep.subr.bf16.mxu0 0
    %1388 = vmatpush1.bf16.msra.mxu0 0
    %1389 = vmatprep.subr.bf16.mxu0 0
    %1390 = vmatpush1.bf16.msra.mxu0 0
    %1391 = vmatprep.subr.bf16.mxu0 0
    %1392 = vmatpush1.bf16.msra.mxu0 0
    %1393 = vmatprep.subr.bf16.mxu0 0
    %1394 = vmatpush1.bf16.msra.mxu0 0
    %1395 = vmatprep.subr.bf16.mxu0 0
    %1396 = vmatpush1.bf16.msra.mxu0 0
    %1397 = vmatprep.subr.bf16.mxu0 0
    %1398 = vmatpush1.bf16.msra.mxu0 0
    %1399 = vmatprep.subr.bf16.mxu0 0
    %1400 = vmatpush1.bf16.msra.mxu0 0
    %1401 = vmatprep.subr.bf16.mxu0 0
    %1402 = vmatpush1.bf16.msra.mxu0 0
    %1403 = vmatprep.subr.bf16.mxu0 0
    %1404 = vmatpush1.bf16.msra.mxu0 0
    %1405 = vmatprep.subr.bf16.mxu0 0
    %1406 = vmatpush1.bf16.msra.mxu0 0
    %1407 = vmatprep.mubr.bf16.mxu0 0
    %1408 = vmatmul.mubr.bf16.gmra.mrb[0].mxu0 %v1373
    %v1409 = vpop.f32.mrb[0].mxu0
    %v1410 = vadd.f32 0.0, %v1409
    %v1411 = vpop.f32.mrb[0].mxu0
    %v1412 = vpop.f32.mrb[0].mxu0
    %v1413 = vpop.f32.mrb[0].mxu0
    %1414 = vdwg.mxu0
    %v1415 = vlaneseq
    %v1416 = vshrl.u32 %v1415, 7
    %v1417 = vsub.s32 0, %v1416
    %v1418 = vrot.slane %v1410, %v1417
    %v1419 = vmul.f32 %v1283, %v1418
    %v1420 = vmul.f32 %v1284, %v1418
    %v1421 = vmul.f32 %v1285, %v1418
    %v1422 = vmul.f32 %v1286, %v1418
    %v1423 = vlaneseq
    %v1424 = vshrl.u32 %v1423, 7
    %v1425 = vsub.s32 1, %v1424
    %v1426 = vrot.slane %v1410, %v1425
    %v1427 = vadd.f32 %v1419, %v1426
    %v1428 = vadd.f32 %v1420, %v1426
    %v1429 = vadd.f32 %v1421, %v1426
    %v1430 = vadd.f32 %v1422, %v1426
    %v1431 = vmax.f32 %v1427, 0.0
    %v1432 = vmax.f32 %v1428, 0.0
    %v1433 = vmax.f32 %v1429, 0.0
    %v1434 = vmax.f32 %v1430, 0.0
    %s1435 = smul.u32 %s1065, 4
    %s1436 = sshll.u32 %s1435, 4
    %1437 = dma.done %s68, %s1436
    %v1438 = vpack.c.bf16 %v1432, %v1431
    %v1439 = vpack.c.bf16 %v1434, %v1433
    %v1440 = vld [vmem:[#allocation2 + $0x18] sm:$0xff]
    %v1441 = vld [vmem:[#allocation2 + $0x20] sm:$0xff]
    %v1442 = vld [vmem:[#allocation2 + $0x28] sm:$0xff]
    %v1443 = vld [vmem:[#allocation2 + $0x30] sm:$0xff]
    %v1444 = vld [vmem:[#allocation2 + $0x50] sm:$0xff]
    %v1445 = vld [vmem:[#allocation2 + $0x58] sm:$0xff]
    %v1446 = vld [vmem:[#allocation2 + $0x60] sm:$0xff]
    %v1447 = vld [vmem:[#allocation2 + $0x68] sm:$0xff]
    %v1448 = vld [vmem:[#allocation2 + $0x88] sm:$0xff]
    %v1449 = vld [vmem:[#allocation2 + $0x90] sm:$0xff]
    %v1450 = vld [vmem:[#allocation2 + $0x98] sm:$0xff]
    %v1451 = vld [vmem:[#allocation2 + $0xa0] sm:$0xff]
    %v1452 = vld [vmem:[#allocation2 + $0xc0] sm:$0xff]
    %v1453 = vld [vmem:[#allocation2 + $0xc8] sm:$0xff]
    %v1454 = vld [vmem:[#allocation2 + $0xd0] sm:$0xff]
    %v1455 = vld [vmem:[#allocation2 + $0xd8] sm:$0xff]
    %v1456 = vld [vmem:[#allocation2 + $0xf8] sm:$0xff]
    %v1457 = vld [vmem:[#allocation2 + $0x100] sm:$0xff]
    %v1458 = vld [vmem:[#allocation2 + $0x108] sm:$0xff]
    %v1459 = vld [vmem:[#allocation2 + $0x110] sm:$0xff]
    %v1460 = vld [vmem:[#allocation2 + $0x130] sm:$0xff]
    %v1461 = vld [vmem:[#allocation2 + $0x138] sm:$0xff]
    %v1462 = vld [vmem:[#allocation2 + $0x140] sm:$0xff]
    %v1463 = vld [vmem:[#allocation2 + $0x148] sm:$0xff]
    %v1464 = vld [vmem:[#allocation2 + $0x168] sm:$0xff]
    %v1465 = vld [vmem:[#allocation2 + $0x170] sm:$0xff]
    %v1466 = vld [vmem:[#allocation2 + $0x178] sm:$0xff]
    %v1467 = vld [vmem:[#allocation2 + $0x180] sm:$0xff]
    %v1468 = vld [vmem:[#allocation2 + $0x1a0] sm:$0xff]
    %v1469 = vld [vmem:[#allocation2 + $0x1a8] sm:$0xff]
    %v1470 = vld [vmem:[#allocation2 + $0x1b0] sm:$0xff]
    %v1471 = vld [vmem:[#allocation2 + $0x1b8] sm:$0xff]
    %1472 = vmatprep.subr.bf16.mxu0 %v1441
    %1473 = vmatpush1.bf16.msra.mxu0 %v1440
    %1474 = vmatprep.subr.bf16.mxu0 %v1445
    %1475 = vmatpush1.bf16.msra.mxu0 %v1444
    %1476 = vmatprep.subr.bf16.mxu0 %v1449
    %1477 = vmatpush1.bf16.msra.mxu0 %v1448
    %1478 = vmatprep.subr.bf16.mxu0 %v1453
    %1479 = vmatpush1.bf16.msra.mxu0 %v1452
    %1480 = vmatprep.subr.bf16.mxu0 %v1457
    %1481 = vmatpush1.bf16.msra.mxu0 %v1456
    %1482 = vmatprep.subr.bf16.mxu0 %v1461
    %1483 = vmatpush1.bf16.msra.mxu0 %v1460
    %1484 = vmatprep.subr.bf16.mxu0 %v1465
    %1485 = vmatpush1.bf16.msra.mxu0 %v1464
    %1486 = vmatprep.subr.bf16.mxu0 %v1469
    %1487 = vmatpush1.bf16.msra.mxu0 %v1468
    %1488 = vmatprep.subr.bf16.mxu0 0
    %1489 = vmatpush1.bf16.msra.mxu0 0
    %1490 = vmatprep.subr.bf16.mxu0 0
    %1491 = vmatpush1.bf16.msra.mxu0 0
    %1492 = vmatprep.subr.bf16.mxu0 0
    %1493 = vmatpush1.bf16.msra.mxu0 0
    %1494 = vmatprep.subr.bf16.mxu0 0
    %1495 = vmatpush1.bf16.msra.mxu0 0
    %1496 = vmatprep.subr.bf16.mxu0 0
    %1497 = vmatpush1.bf16.msra.mxu0 0
    %1498 = vmatprep.subr.bf16.mxu0 0
    %1499 = vmatpush1.bf16.msra.mxu0 0
    %1500 = vmatprep.subr.bf16.mxu0 0
    %1501 = vmatpush1.bf16.msra.mxu0 0
    %1502 = vmatprep.subr.bf16.mxu0 0
    %1503 = vmatpush1.bf16.msra.mxu0 0
    %1504 = vmatprep.mubr.bf16.mxu0 0
    %1505 = vmatmul.mubr.bf16.gmra.mrb[0].mxu0 %v1438
    %v1506 = vpop.f32.mrb[0].mxu0
    %v1507 = vadd.f32 0.0, %v1506
    %v1508 = vpop.f32.mrb[0].mxu0
    %v1509 = vadd.f32 0.0, %v1508
    %v1510 = vpop.f32.mrb[0].mxu0
    %v1511 = vadd.f32 0.0, %v1510
    %v1512 = vpop.f32.mrb[0].mxu0
    %v1513 = vadd.f32 0.0, %v1512
    %1514 = vmatprep.mubr.bf16.mxu0 0
    %1515 = vmatmul.mubr.bf16.gmra.mrb[0].mxu0 %v1439
    %v1516 = vpop.f32.mrb[0].mxu0
    %v1517 = vadd.f32 0.0, %v1516
    %v1518 = vpop.f32.mrb[0].mxu0
    %v1519 = vadd.f32 0.0, %v1518
    %v1520 = vpop.f32.mrb[0].mxu0
    %v1521 = vadd.f32 0.0, %v1520
    %v1522 = vpop.f32.mrb[0].mxu0
    %v1523 = vadd.f32 0.0, %v1522
    %1524 = vdwg.mxu0
    %1525 = vmatprep.subr.bf16.mxu0 %v1443
    %1526 = vmatpush1.bf16.msra.mxu0 %v1442
    %1527 = vmatprep.subr.bf16.mxu0 %v1447
    %1528 = vmatpush1.bf16.msra.mxu0 %v1446
    %1529 = vmatprep.subr.bf16.mxu0 %v1451
    %1530 = vmatpush1.bf16.msra.mxu0 %v1450
    %1531 = vmatprep.subr.bf16.mxu0 %v1455
    %1532 = vmatpush1.bf16.msra.mxu0 %v1454
    %1533 = vmatprep.subr.bf16.mxu0 %v1459
    %1534 = vmatpush1.bf16.msra.mxu0 %v1458
    %1535 = vmatprep.subr.bf16.mxu0 %v1463
    %1536 = vmatpush1.bf16.msra.mxu0 %v1462
    %1537 = vmatprep.subr.bf16.mxu0 %v1467
    %1538 = vmatpush1.bf16.msra.mxu0 %v1466
    %1539 = vmatprep.subr.bf16.mxu0 %v1471
    %1540 = vmatpush1.bf16.msra.mxu0 %v1470
    %1541 = vmatprep.subr.bf16.mxu0 0
    %1542 = vmatpush1.bf16.msra.mxu0 0
    %1543 = vmatprep.subr.bf16.mxu0 0
    %1544 = vmatpush1.bf16.msra.mxu0 0
    %1545 = vmatprep.subr.bf16.mxu0 0
    %1546 = vmatpush1.bf16.msra.mxu0 0
    %1547 = vmatprep.subr.bf16.mxu0 0
    %1548 = vmatpush1.bf16.msra.mxu0 0
    %1549 = vmatprep.subr.bf16.mxu0 0
    %1550 = vmatpush1.bf16.msra.mxu0 0
    %1551 = vmatprep.subr.bf16.mxu0 0
    %1552 = vmatpush1.bf16.msra.mxu0 0
    %1553 = vmatprep.subr.bf16.mxu0 0
    %1554 = vmatpush1.bf16.msra.mxu0 0
    %1555 = vmatprep.subr.bf16.mxu0 0
    %1556 = vmatpush1.bf16.msra.mxu0 0
    %1557 = vmatprep.mubr.bf16.mxu0 0
    %1558 = vmatmul.mubr.bf16.gmra.mrb[0].mxu0 %v1438
    %v1559 = vpop.f32.mrb[0].mxu0
    %v1560 = vadd.f32 0.0, %v1559
    %v1561 = vpop.f32.mrb[0].mxu0
    %v1562 = vadd.f32 0.0, %v1561
    %v1563 = vpop.f32.mrb[0].mxu0
    %v1564 = vadd.f32 0.0, %v1563
    %v1565 = vpop.f32.mrb[0].mxu0
    %v1566 = vadd.f32 0.0, %v1565
    %1567 = vmatprep.mubr.bf16.mxu0 0
    %1568 = vmatmul.mubr.bf16.gmra.mrb[0].mxu0 %v1439
    %v1569 = vpop.f32.mrb[0].mxu0
    %v1570 = vadd.f32 0.0, %v1569
    %v1571 = vpop.f32.mrb[0].mxu0
    %v1572 = vadd.f32 0.0, %v1571
    %v1573 = vpop.f32.mrb[0].mxu0
    %v1574 = vadd.f32 0.0, %v1573
    %v1575 = vpop.f32.mrb[0].mxu0
    %v1576 = vadd.f32 0.0, %v1575
    %1577 = vdwg.mxu0
    %v1578 = vadd.s32 %v656, 128
    %v1579 = vadd.s32 %v656, 136
    %v1580 = vadd.s32 %v656, 144
    %v1581 = vadd.s32 %v656, 152
    %v1582 = vadd.s32 %v656, 160
    %v1583 = vadd.s32 %v656, 168
    %v1584 = vadd.s32 %v656, 176
    %v1585 = vadd.s32 %v656, 184
    %v1586 = vadd.s32 %v656, 192
    %v1587 = vadd.s32 %v656, 200
    %v1588 = vadd.s32 %v656, 208
    %v1589 = vadd.s32 %v656, 216
    %v1590 = vadd.s32 %v656, 224
    %v1591 = vadd.s32 %v656, 232
    %v1592 = vadd.s32 %v656, 240
    %v1593 = vadd.s32 %v656, 248
    %v1594 = vadd.s32 %v656, 256
    %v1595 = vadd.s32 %v656, 264
    %v1596 = vadd.s32 %v656, 272
    %v1597 = vadd.s32 %v656, 280
    %v1598 = vadd.s32 %v656, 288
    %v1599 = vadd.s32 %v656, 296
    %v1600 = vadd.s32 %v656, 304
    %v1601 = vadd.s32 %v656, 312
    %v1602 = vadd.s32 %v656, 320
    %v1603 = vadd.s32 %v656, 328
    %v1604 = vadd.s32 %v656, 336
    %v1605 = vadd.s32 %v656, 344
    %v1606 = vadd.s32 %v656, 352
    %v1607 = vadd.s32 %v656, 360
    %v1608 = vadd.s32 %v656, 368
    %v1609 = vadd.s32 %v656, 376
    %v1610 = vadd.s32 %v656, 384
    %v1611 = vadd.s32 %v656, 392
    %v1612 = vadd.s32 %v656, 400
    %v1613 = vadd.s32 %v656, 408
    %v1614 = vadd.s32 %v656, 416
    %v1615 = vadd.s32 %v656, 424
    %v1616 = vadd.s32 %v656, 432
    %v1617 = vadd.s32 %v656, 440
    %v1618 = vadd.s32 %v656, 448
    %v1619 = vadd.s32 %v656, 456
    %v1620 = vadd.s32 %v656, 464
    %v1621 = vadd.s32 %v656, 472
    %v1622 = vadd.s32 %v656, 480
    %v1623 = vadd.s32 %v656, 488
    %v1624 = vadd.s32 %v656, 496
    %v1625 = vadd.s32 %v656, 504
    %vm1626 = vcmp.lt.s32.totalorder %v656, 0
    %v1627 = vsub.s32 0, %v656
    %v1628 = vsel %vm1626, %v1627, %v656
    %v1629 = vshrl.u32 %v1628, 5
    %v1630 = vand.u32 %v1628, 31
    %v1631 = vsub.s32 0, %v1630
    %v1632 = vsel %vm1626, %v1631, %v1630
    %vm1633 = vcmp.lt.s32.totalorder %v657, 0
    %v1634 = vsub.s32 0, %v657
    %v1635 = vsel %vm1633, %v1634, %v657
    %v1636 = vshrl.u32 %v1635, 5
    %v1637 = vand.u32 %v1635, 31
    %v1638 = vsub.s32 0, %v1637
    %v1639 = vsel %vm1633, %v1638, %v1637
    %vm1640 = vcmp.lt.s32.totalorder %v658, 0
    %v1641 = vsub.s32 0, %v658
    %v1642 = vsel %vm1640, %v1641, %v658
    %v1643 = vshrl.u32 %v1642, 5
    %v1644 = vand.u32 %v1642, 31
    %v1645 = vsub.s32 0, %v1644
    %v1646 = vsel %vm1640, %v1645, %v1644
    %vm1647 = vcmp.lt.s32.totalorder %v659, 0
    %v1648 = vsub.s32 0, %v659
    %v1649 = vsel %vm1647, %v1648, %v659
    %v1650 = vshrl.u32 %v1649, 5
    %v1651 = vand.u32 %v1649, 31
    %v1652 = vsub.s32 0, %v1651
    %v1653 = vsel %vm1647, %v1652, %v1651
    %vm1654 = vcmp.lt.s32.totalorder %v660, 0
    %v1655 = vsub.s32 0, %v660
    %v1656 = vsel %vm1654, %v1655, %v660
    %v1657 = vshrl.u32 %v1656, 5
    %v1658 = vand.u32 %v1656, 31
    %v1659 = vsub.s32 0, %v1658
    %v1660 = vsel %vm1654, %v1659, %v1658
    %vm1661 = vcmp.lt.s32.totalorder %v661, 0
    %v1662 = vsub.s32 0, %v661
    %v1663 = vsel %vm1661, %v1662, %v661
    %v1664 = vshrl.u32 %v1663, 5
    %v1665 = vand.u32 %v1663, 31
    %v1666 = vsub.s32 0, %v1665
    %v1667 = vsel %vm1661, %v1666, %v1665
    %vm1668 = vcmp.lt.s32.totalorder %v662, 0
    %v1669 = vsub.s32 0, %v662
    %v1670 = vsel %vm1668, %v1669, %v662
    %v1671 = vshrl.u32 %v1670, 5
    %v1672 = vand.u32 %v1670, 31
    %v1673 = vsub.s32 0, %v1672
    %v1674 = vsel %vm1668, %v1673, %v1672
    %vm1675 = vcmp.lt.s32.totalorder %v663, 0
    %v1676 = vsub.s32 0, %v663
    %v1677 = vsel %vm1675, %v1676, %v663
    %v1678 = vshrl.u32 %v1677, 5
    %v1679 = vand.u32 %v1677, 31
    %v1680 = vsub.s32 0, %v1679
    %v1681 = vsel %vm1675, %v1680, %v1679
    %vm1682 = vcmp.lt.s32.totalorder %v664, 0
    %v1683 = vsub.s32 0, %v664
    %v1684 = vsel %vm1682, %v1683, %v664
    %v1685 = vshrl.u32 %v1684, 5
    %v1686 = vand.u32 %v1684, 31
    %v1687 = vsub.s32 0, %v1686
    %v1688 = vsel %vm1682, %v1687, %v1686
    %vm1689 = vcmp.lt.s32.totalorder %v665, 0
    %v1690 = vsub.s32 0, %v665
    %v1691 = vsel %vm1689, %v1690, %v665
    %v1692 = vshrl.u32 %v1691, 5
    %v1693 = vand.u32 %v1691, 31
    %v1694 = vsub.s32 0, %v1693
    %v1695 = vsel %vm1689, %v1694, %v1693
    %vm1696 = vcmp.lt.s32.totalorder %v666, 0
    %v1697 = vsub.s32 0, %v666
    %v1698 = vsel %vm1696, %v1697, %v666
    %v1699 = vshrl.u32 %v1698, 5
    %v1700 = vand.u32 %v1698, 31
    %v1701 = vsub.s32 0, %v1700
    %v1702 = vsel %vm1696, %v1701, %v1700
    %vm1703 = vcmp.lt.s32.totalorder %v667, 0
    %v1704 = vsub.s32 0, %v667
    %v1705 = vsel %vm1703, %v1704, %v667
    %v1706 = vshrl.u32 %v1705, 5
    %v1707 = vand.u32 %v1705, 31
    %v1708 = vsub.s32 0, %v1707
    %v1709 = vsel %vm1703, %v1708, %v1707
    %vm1710 = vcmp.lt.s32.totalorder %v668, 0
    %v1711 = vsub.s32 0, %v668
    %v1712 = vsel %vm1710, %v1711, %v668
    %v1713 = vshrl.u32 %v1712, 5
    %v1714 = vand.u32 %v1712, 31
    %v1715 = vsub.s32 0, %v1714
    %v1716 = vsel %vm1710, %v1715, %v1714
    %vm1717 = vcmp.lt.s32.totalorder %v669, 0
    %v1718 = vsub.s32 0, %v669
    %v1719 = vsel %vm1717, %v1718, %v669
    %v1720 = vshrl.u32 %v1719, 5
    %v1721 = vand.u32 %v1719, 31
    %v1722 = vsub.s32 0, %v1721
    %v1723 = vsel %vm1717, %v1722, %v1721
    %vm1724 = vcmp.lt.s32.totalorder %v670, 0
    %v1725 = vsub.s32 0, %v670
    %v1726 = vsel %vm1724, %v1725, %v670
    %v1727 = vshrl.u32 %v1726, 5
    %v1728 = vand.u32 %v1726, 31
    %v1729 = vsub.s32 0, %v1728
    %v1730 = vsel %vm1724, %v1729, %v1728
    %vm1731 = vcmp.lt.s32.totalorder %v671, 0
    %v1732 = vsub.s32 0, %v671
    %v1733 = vsel %vm1731, %v1732, %v671
    %v1734 = vshrl.u32 %v1733, 5
    %v1735 = vand.u32 %v1733, 31
    %v1736 = vsub.s32 0, %v1735
    %v1737 = vsel %vm1731, %v1736, %v1735
    %vm1738 = vcmp.lt.s32.totalorder %v1578, 0
    %v1739 = vsub.s32 0, %v1578
    %v1740 = vsel %vm1738, %v1739, %v1578
    %v1741 = vshrl.u32 %v1740, 5
    %v1742 = vand.u32 %v1740, 31
    %v1743 = vsub.s32 0, %v1742
    %v1744 = vsel %vm1738, %v1743, %v1742
    %vm1745 = vcmp.lt.s32.totalorder %v1579, 0
    %v1746 = vsub.s32 0, %v1579
    %v1747 = vsel %vm1745, %v1746, %v1579
    %v1748 = vshrl.u32 %v1747, 5
    %v1749 = vand.u32 %v1747, 31
    %v1750 = vsub.s32 0, %v1749
    %v1751 = vsel %vm1745, %v1750, %v1749
    %vm1752 = vcmp.lt.s32.totalorder %v1580, 0
    %v1753 = vsub.s32 0, %v1580
    %v1754 = vsel %vm1752, %v1753, %v1580
    %v1755 = vshrl.u32 %v1754, 5
    %v1756 = vand.u32 %v1754, 31
    %v1757 = vsub.s32 0, %v1756
    %v1758 = vsel %vm1752, %v1757, %v1756
    %vm1759 = vcmp.lt.s32.totalorder %v1581, 0
    %v1760 = vsub.s32 0, %v1581
    %v1761 = vsel %vm1759, %v1760, %v1581
    %v1762 = vshrl.u32 %v1761, 5
    %v1763 = vand.u32 %v1761, 31
    %v1764 = vsub.s32 0, %v1763
    %v1765 = vsel %vm1759, %v1764, %v1763
    %vm1766 = vcmp.lt.s32.totalorder %v1582, 0
    %v1767 = vsub.s32 0, %v1582
    %v1768 = vsel %vm1766, %v1767, %v1582
    %v1769 = vshrl.u32 %v1768, 5
    %v1770 = vand.u32 %v1768, 31
    %v1771 = vsub.s32 0, %v1770
    %v1772 = vsel %vm1766, %v1771, %v1770
    %vm1773 = vcmp.lt.s32.totalorder %v1583, 0
    %v1774 = vsub.s32 0, %v1583
    %v1775 = vsel %vm1773, %v1774, %v1583
    %v1776 = vshrl.u32 %v1775, 5
    %v1777 = vand.u32 %v1775, 31
    %v1778 = vsub.s32 0, %v1777
    %v1779 = vsel %vm1773, %v1778, %v1777
    %vm1780 = vcmp.lt.s32.totalorder %v1584, 0
    %v1781 = vsub.s32 0, %v1584
    %v1782 = vsel %vm1780, %v1781, %v1584
    %v1783 = vshrl.u32 %v1782, 5
    %v1784 = vand.u32 %v1782, 31
    %v1785 = vsub.s32 0, %v1784
    %v1786 = vsel %vm1780, %v1785, %v1784
    %vm1787 = vcmp.lt.s32.totalorder %v1585, 0
    %v1788 = vsub.s32 0, %v1585
    %v1789 = vsel %vm1787, %v1788, %v1585
    %v1790 = vshrl.u32 %v1789, 5
    %v1791 = vand.u32 %v1789, 31
    %v1792 = vsub.s32 0, %v1791
    %v1793 = vsel %vm1787, %v1792, %v1791
    %vm1794 = vcmp.lt.s32.totalorder %v1586, 0
    %v1795 = vsub.s32 0, %v1586
    %v1796 = vsel %vm1794, %v1795, %v1586
    %v1797 = vshrl.u32 %v1796, 5
    %v1798 = vand.u32 %v1796, 31
    %v1799 = vsub.s32 0, %v1798
    %v1800 = vsel %vm1794, %v1799, %v1798
    %vm1801 = vcmp.lt.s32.totalorder %v1587, 0
    %v1802 = vsub.s32 0, %v1587
    %v1803 = vsel %vm1801, %v1802, %v1587
    %v1804 = vshrl.u32 %v1803, 5
    %v1805 = vand.u32 %v1803, 31
    %v1806 = vsub.s32 0, %v1805
    %v1807 = vsel %vm1801, %v1806, %v1805
    %vm1808 = vcmp.lt.s32.totalorder %v1588, 0
    %v1809 = vsub.s32 0, %v1588
    %v1810 = vsel %vm1808, %v1809, %v1588
    %v1811 = vshrl.u32 %v1810, 5
    %v1812 = vand.u32 %v1810, 31
    %v1813 = vsub.s32 0, %v1812
    %v1814 = vsel %vm1808, %v1813, %v1812
    %vm1815 = vcmp.lt.s32.totalorder %v1589, 0
    %v1816 = vsub.s32 0, %v1589
    %v1817 = vsel %vm1815, %v1816, %v1589
    %v1818 = vshrl.u32 %v1817, 5
    %v1819 = vand.u32 %v1817, 31
    %v1820 = vsub.s32 0, %v1819
    %v1821 = vsel %vm1815, %v1820, %v1819
    %vm1822 = vcmp.lt.s32.totalorder %v1590, 0
    %v1823 = vsub.s32 0, %v1590
    %v1824 = vsel %vm1822, %v1823, %v1590
    %v1825 = vshrl.u32 %v1824, 5
    %v1826 = vand.u32 %v1824, 31
    %v1827 = vsub.s32 0, %v1826
    %v1828 = vsel %vm1822, %v1827, %v1826
    %vm1829 = vcmp.lt.s32.totalorder %v1591, 0
    %v1830 = vsub.s32 0, %v1591
    %v1831 = vsel %vm1829, %v1830, %v1591
    %v1832 = vshrl.u32 %v1831, 5
    %v1833 = vand.u32 %v1831, 31
    %v1834 = vsub.s32 0, %v1833
    %v1835 = vsel %vm1829, %v1834, %v1833
    %vm1836 = vcmp.lt.s32.totalorder %v1592, 0
    %v1837 = vsub.s32 0, %v1592
    %v1838 = vsel %vm1836, %v1837, %v1592
    %v1839 = vshrl.u32 %v1838, 5
    %v1840 = vand.u32 %v1838, 31
    %v1841 = vsub.s32 0, %v1840
    %v1842 = vsel %vm1836, %v1841, %v1840
    %vm1843 = vcmp.lt.s32.totalorder %v1593, 0
    %v1844 = vsub.s32 0, %v1593
    %v1845 = vsel %vm1843, %v1844, %v1593
    %v1846 = vshrl.u32 %v1845, 5
    %v1847 = vand.u32 %v1845, 31
    %v1848 = vsub.s32 0, %v1847
    %v1849 = vsel %vm1843, %v1848, %v1847
    %vm1850 = vcmp.lt.s32.totalorder %v1594, 0
    %v1851 = vsub.s32 0, %v1594
    %v1852 = vsel %vm1850, %v1851, %v1594
    %v1853 = vshrl.u32 %v1852, 5
    %v1854 = vand.u32 %v1852, 31
    %v1855 = vsub.s32 0, %v1854
    %v1856 = vsel %vm1850, %v1855, %v1854
    %vm1857 = vcmp.lt.s32.totalorder %v1595, 0
    %v1858 = vsub.s32 0, %v1595
    %v1859 = vsel %vm1857, %v1858, %v1595
    %v1860 = vshrl.u32 %v1859, 5
    %v1861 = vand.u32 %v1859, 31
    %v1862 = vsub.s32 0, %v1861
    %v1863 = vsel %vm1857, %v1862, %v1861
    %vm1864 = vcmp.lt.s32.totalorder %v1596, 0
    %v1865 = vsub.s32 0, %v1596
    %v1866 = vsel %vm1864, %v1865, %v1596
    %v1867 = vshrl.u32 %v1866, 5
    %v1868 = vand.u32 %v1866, 31
    %v1869 = vsub.s32 0, %v1868
    %v1870 = vsel %vm1864, %v1869, %v1868
    %vm1871 = vcmp.lt.s32.totalorder %v1597, 0
    %v1872 = vsub.s32 0, %v1597
    %v1873 = vsel %vm1871, %v1872, %v1597
    %v1874 = vshrl.u32 %v1873, 5
    %v1875 = vand.u32 %v1873, 31
    %v1876 = vsub.s32 0, %v1875
    %v1877 = vsel %vm1871, %v1876, %v1875
    %vm1878 = vcmp.lt.s32.totalorder %v1598, 0
    %v1879 = vsub.s32 0, %v1598
    %v1880 = vsel %vm1878, %v1879, %v1598
    %v1881 = vshrl.u32 %v1880, 5
    %v1882 = vand.u32 %v1880, 31
    %v1883 = vsub.s32 0, %v1882
    %v1884 = vsel %vm1878, %v1883, %v1882
    %vm1885 = vcmp.lt.s32.totalorder %v1599, 0
    %v1886 = vsub.s32 0, %v1599
    %v1887 = vsel %vm1885, %v1886, %v1599
    %v1888 = vshrl.u32 %v1887, 5
    %v1889 = vand.u32 %v1887, 31
    %v1890 = vsub.s32 0, %v1889
    %v1891 = vsel %vm1885, %v1890, %v1889
    %vm1892 = vcmp.lt.s32.totalorder %v1600, 0
    %v1893 = vsub.s32 0, %v1600
    %v1894 = vsel %vm1892, %v1893, %v1600
    %v1895 = vshrl.u32 %v1894, 5
    %v1896 = vand.u32 %v1894, 31
    %v1897 = vsub.s32 0, %v1896
    %v1898 = vsel %vm1892, %v1897, %v1896
    %vm1899 = vcmp.lt.s32.totalorder %v1601, 0
    %v1900 = vsub.s32 0, %v1601
    %v1901 = vsel %vm1899, %v1900, %v1601
    %v1902 = vshrl.u32 %v1901, 5
    %v1903 = vand.u32 %v1901, 31
    %v1904 = vsub.s32 0, %v1903
    %v1905 = vsel %vm1899, %v1904, %v1903
    %vm1906 = vcmp.lt.s32.totalorder %v1602, 0
    %v1907 = vsub.s32 0, %v1602
    %v1908 = vsel %vm1906, %v1907, %v1602
    %v1909 = vshrl.u32 %v1908, 5
    %v1910 = vand.u32 %v1908, 31
    %v1911 = vsub.s32 0, %v1910
    %v1912 = vsel %vm1906, %v1911, %v1910
    %vm1913 = vcmp.lt.s32.totalorder %v1603, 0
    %v1914 = vsub.s32 0, %v1603
    %v1915 = vsel %vm1913, %v1914, %v1603
    %v1916 = vshrl.u32 %v1915, 5
    %v1917 = vand.u32 %v1915, 31
    %v1918 = vsub.s32 0, %v1917
    %v1919 = vsel %vm1913, %v1918, %v1917
    %vm1920 = vcmp.lt.s32.totalorder %v1604, 0
    %v1921 = vsub.s32 0, %v1604
    %v1922 = vsel %vm1920, %v1921, %v1604
    %v1923 = vshrl.u32 %v1922, 5
    %v1924 = vand.u32 %v1922, 31
    %v1925 = vsub.s32 0, %v1924
    %v1926 = vsel %vm1920, %v1925, %v1924
    %vm1927 = vcmp.lt.s32.totalorder %v1605, 0
    %v1928 = vsub.s32 0, %v1605
    %v1929 = vsel %vm1927, %v1928, %v1605
    %v1930 = vshrl.u32 %v1929, 5
    %v1931 = vand.u32 %v1929, 31
    %v1932 = vsub.s32 0, %v1931
    %v1933 = vsel %vm1927, %v1932, %v1931
    %vm1934 = vcmp.lt.s32.totalorder %v1606, 0
    %v1935 = vsub.s32 0, %v1606
    %v1936 = vsel %vm1934, %v1935, %v1606
    %v1937 = vshrl.u32 %v1936, 5
    %v1938 = vand.u32 %v1936, 31
    %v1939 = vsub.s32 0, %v1938
    %v1940 = vsel %vm1934, %v1939, %v1938
    %vm1941 = vcmp.lt.s32.totalorder %v1607, 0
    %v1942 = vsub.s32 0, %v1607
    %v1943 = vsel %vm1941, %v1942, %v1607
    %v1944 = vshrl.u32 %v1943, 5
    %v1945 = vand.u32 %v1943, 31
    %v1946 = vsub.s32 0, %v1945
    %v1947 = vsel %vm1941, %v1946, %v1945
    %vm1948 = vcmp.lt.s32.totalorder %v1608, 0
    %v1949 = vsub.s32 0, %v1608
    %v1950 = vsel %vm1948, %v1949, %v1608
    %v1951 = vshrl.u32 %v1950, 5
    %v1952 = vand.u32 %v1950, 31
    %v1953 = vsub.s32 0, %v1952
    %v1954 = vsel %vm1948, %v1953, %v1952
    %vm1955 = vcmp.lt.s32.totalorder %v1609, 0
    %v1956 = vsub.s32 0, %v1609
    %v1957 = vsel %vm1955, %v1956, %v1609
    %v1958 = vshrl.u32 %v1957, 5
    %v1959 = vand.u32 %v1957, 31
    %v1960 = vsub.s32 0, %v1959
    %v1961 = vsel %vm1955, %v1960, %v1959
    %vm1962 = vcmp.lt.s32.totalorder %v1610, 0
    %v1963 = vsub.s32 0, %v1610
    %v1964 = vsel %vm1962, %v1963, %v1610
    %v1965 = vshrl.u32 %v1964, 5
    %v1966 = vand.u32 %v1964, 31
    %v1967 = vsub.s32 0, %v1966
    %v1968 = vsel %vm1962, %v1967, %v1966
    %vm1969 = vcmp.lt.s32.totalorder %v1611, 0
    %v1970 = vsub.s32 0, %v1611
    %v1971 = vsel %vm1969, %v1970, %v1611
    %v1972 = vshrl.u32 %v1971, 5
    %v1973 = vand.u32 %v1971, 31
    %v1974 = vsub.s32 0, %v1973
    %v1975 = vsel %vm1969, %v1974, %v1973
    %vm1976 = vcmp.lt.s32.totalorder %v1612, 0
    %v1977 = vsub.s32 0, %v1612
    %v1978 = vsel %vm1976, %v1977, %v1612
    %v1979 = vshrl.u32 %v1978, 5
    %v1980 = vand.u32 %v1978, 31
    %v1981 = vsub.s32 0, %v1980
    %v1982 = vsel %vm1976, %v1981, %v1980
    %vm1983 = vcmp.lt.s32.totalorder %v1613, 0
    %v1984 = vsub.s32 0, %v1613
    %v1985 = vsel %vm1983, %v1984, %v1613
    %v1986 = vshrl.u32 %v1985, 5
    %v1987 = vand.u32 %v1985, 31
    %v1988 = vsub.s32 0, %v1987
    %v1989 = vsel %vm1983, %v1988, %v1987
    %vm1990 = vcmp.lt.s32.totalorder %v1614, 0
    %v1991 = vsub.s32 0, %v1614
    %v1992 = vsel %vm1990, %v1991, %v1614
    %v1993 = vshrl.u32 %v1992, 5
    %v1994 = vand.u32 %v1992, 31
    %v1995 = vsub.s32 0, %v1994
    %v1996 = vsel %vm1990, %v1995, %v1994
    %vm1997 = vcmp.lt.s32.totalorder %v1615, 0
    %v1998 = vsub.s32 0, %v1615
    %v1999 = vsel %vm1997, %v1998, %v1615
    %v2000 = vshrl.u32 %v1999, 5
    %v2001 = vand.u32 %v1999, 31
    %v2002 = vsub.s32 0, %v2001
    %v2003 = vsel %vm1997, %v2002, %v2001
    %vm2004 = vcmp.lt.s32.totalorder %v1616, 0
    %v2005 = vsub.s32 0, %v1616
    %v2006 = vsel %vm2004, %v2005, %v1616
    %v2007 = vshrl.u32 %v2006, 5
    %v2008 = vand.u32 %v2006, 31
    %v2009 = vsub.s32 0, %v2008
    %v2010 = vsel %vm2004, %v2009, %v2008
    %vm2011 = vcmp.lt.s32.totalorder %v1617, 0
    %v2012 = vsub.s32 0, %v1617
    %v2013 = vsel %vm2011, %v2012, %v1617
    %v2014 = vshrl.u32 %v2013, 5
    %v2015 = vand.u32 %v2013, 31
    %v2016 = vsub.s32 0, %v2015
    %v2017 = vsel %vm2011, %v2016, %v2015
    %vm2018 = vcmp.lt.s32.totalorder %v1618, 0
    %v2019 = vsub.s32 0, %v1618
    %v2020 = vsel %vm2018, %v2019, %v1618
    %v2021 = vshrl.u32 %v2020, 5
    %v2022 = vand.u32 %v2020, 31
    %v2023 = vsub.s32 0, %v2022
    %v2024 = vsel %vm2018, %v2023, %v2022
    %vm2025 = vcmp.lt.s32.totalorder %v1619, 0
    %v2026 = vsub.s32 0, %v1619
    %v2027 = vsel %vm2025, %v2026, %v1619
    %v2028 = vshrl.u32 %v2027, 5
    %v2029 = vand.u32 %v2027, 31
    %v2030 = vsub.s32 0, %v2029
    %v2031 = vsel %vm2025, %v2030, %v2029
    %vm2032 = vcmp.lt.s32.totalorder %v1620, 0
    %v2033 = vsub.s32 0, %v1620
    %v2034 = vsel %vm2032, %v2033, %v1620
    %v2035 = vshrl.u32 %v2034, 5
    %v2036 = vand.u32 %v2034, 31
    %v2037 = vsub.s32 0, %v2036
    %v2038 = vsel %vm2032, %v2037, %v2036
    %vm2039 = vcmp.lt.s32.totalorder %v1621, 0
    %v2040 = vsub.s32 0, %v1621
    %v2041 = vsel %vm2039, %v2040, %v1621
    %v2042 = vshrl.u32 %v2041, 5
    %v2043 = vand.u32 %v2041, 31
    %v2044 = vsub.s32 0, %v2043
    %v2045 = vsel %vm2039, %v2044, %v2043
    %vm2046 = vcmp.lt.s32.totalorder %v1622, 0
    %v2047 = vsub.s32 0, %v1622
    %v2048 = vsel %vm2046, %v2047, %v1622
    %v2049 = vshrl.u32 %v2048, 5
    %v2050 = vand.u32 %v2048, 31
    %v2051 = vsub.s32 0, %v2050
    %v2052 = vsel %vm2046, %v2051, %v2050
    %vm2053 = vcmp.lt.s32.totalorder %v1623, 0
    %v2054 = vsub.s32 0, %v1623
    %v2055 = vsel %vm2053, %v2054, %v1623
    %v2056 = vshrl.u32 %v2055, 5
    %v2057 = vand.u32 %v2055, 31
    %v2058 = vsub.s32 0, %v2057
    %v2059 = vsel %vm2053, %v2058, %v2057
    %vm2060 = vcmp.lt.s32.totalorder %v1624, 0
    %v2061 = vsub.s32 0, %v1624
    %v2062 = vsel %vm2060, %v2061, %v1624
    %v2063 = vshrl.u32 %v2062, 5
    %v2064 = vand.u32 %v2062, 31
    %v2065 = vsub.s32 0, %v2064
    %v2066 = vsel %vm2060, %v2065, %v2064
    %vm2067 = vcmp.lt.s32.totalorder %v1625, 0
    %v2068 = vsub.s32 0, %v1625
    %v2069 = vsel %vm2067, %v2068, %v1625
    %v2070 = vshrl.u32 %v2069, 5
    %v2071 = vand.u32 %v2069, 31
    %v2072 = vsub.s32 0, %v2071
    %v2073 = vsel %vm2067, %v2072, %v2071
    %vm2074 = vcmp.ne.s32.totalorder %v1632, 0
    %vm2075 = vcmp.ne.s32.totalorder %v1639, 0
    %vm2076 = vcmp.ne.s32.totalorder %v1646, 0
    %vm2077 = vcmp.ne.s32.totalorder %v1653, 0
    %vm2078 = vcmp.ne.s32.totalorder %v1660, 0
    %vm2079 = vcmp.ne.s32.totalorder %v1667, 0
    %vm2080 = vcmp.ne.s32.totalorder %v1674, 0
    %vm2081 = vcmp.ne.s32.totalorder %v1681, 0
    %vm2082 = vcmp.ne.s32.totalorder %v1688, 0
    %vm2083 = vcmp.ne.s32.totalorder %v1695, 0
    %vm2084 = vcmp.ne.s32.totalorder %v1702, 0
    %vm2085 = vcmp.ne.s32.totalorder %v1709, 0
    %vm2086 = vcmp.ne.s32.totalorder %v1716, 0
    %vm2087 = vcmp.ne.s32.totalorder %v1723, 0
    %vm2088 = vcmp.ne.s32.totalorder %v1730, 0
    %vm2089 = vcmp.ne.s32.totalorder %v1737, 0
    %vm2090 = vcmp.ne.s32.totalorder %v1744, 0
    %vm2091 = vcmp.ne.s32.totalorder %v1751, 0
    %vm2092 = vcmp.ne.s32.totalorder %v1758, 0
    %vm2093 = vcmp.ne.s32.totalorder %v1765, 0
    %vm2094 = vcmp.ne.s32.totalorder %v1772, 0
    %vm2095 = vcmp.ne.s32.totalorder %v1779, 0
    %vm2096 = vcmp.ne.s32.totalorder %v1786, 0
    %vm2097 = vcmp.ne.s32.totalorder %v1793, 0
    %vm2098 = vcmp.ne.s32.totalorder %v1800, 0
    %vm2099 = vcmp.ne.s32.totalorder %v1807, 0
    %vm2100 = vcmp.ne.s32.totalorder %v1814, 0
    %vm2101 = vcmp.ne.s32.totalorder %v1821, 0
    %vm2102 = vcmp.ne.s32.totalorder %v1828, 0
    %vm2103 = vcmp.ne.s32.totalorder %v1835, 0
    %vm2104 = vcmp.ne.s32.totalorder %v1842, 0
    %vm2105 = vcmp.ne.s32.totalorder %v1849, 0
    %vm2106 = vcmp.ne.s32.totalorder %v1856, 0
    %vm2107 = vcmp.ne.s32.totalorder %v1863, 0
    %vm2108 = vcmp.ne.s32.totalorder %v1870, 0
    %vm2109 = vcmp.ne.s32.totalorder %v1877, 0
    %vm2110 = vcmp.ne.s32.totalorder %v1884, 0
    %vm2111 = vcmp.ne.s32.totalorder %v1891, 0
    %vm2112 = vcmp.ne.s32.totalorder %v1898, 0
    %vm2113 = vcmp.ne.s32.totalorder %v1905, 0
    %vm2114 = vcmp.ne.s32.totalorder %v1912, 0
    %vm2115 = vcmp.ne.s32.totalorder %v1919, 0
    %vm2116 = vcmp.ne.s32.totalorder %v1926, 0
    %vm2117 = vcmp.ne.s32.totalorder %v1933, 0
    %vm2118 = vcmp.ne.s32.totalorder %v1940, 0
    %vm2119 = vcmp.ne.s32.totalorder %v1947, 0
    %vm2120 = vcmp.ne.s32.totalorder %v1954, 0
    %vm2121 = vcmp.ne.s32.totalorder %v1961, 0
    %vm2122 = vcmp.ne.s32.totalorder %v1968, 0
    %vm2123 = vcmp.ne.s32.totalorder %v1975, 0
    %vm2124 = vcmp.ne.s32.totalorder %v1982, 0
    %vm2125 = vcmp.ne.s32.totalorder %v1989, 0
    %vm2126 = vcmp.ne.s32.totalorder %v1996, 0
    %vm2127 = vcmp.ne.s32.totalorder %v2003, 0
    %vm2128 = vcmp.ne.s32.totalorder %v2010, 0
    %vm2129 = vcmp.ne.s32.totalorder %v2017, 0
    %vm2130 = vcmp.ne.s32.totalorder %v2024, 0
    %vm2131 = vcmp.ne.s32.totalorder %v2031, 0
    %vm2132 = vcmp.ne.s32.totalorder %v2038, 0
    %vm2133 = vcmp.ne.s32.totalorder %v2045, 0
    %vm2134 = vcmp.ne.s32.totalorder %v2052, 0
    %vm2135 = vcmp.ne.s32.totalorder %v2059, 0
    %vm2136 = vcmp.ne.s32.totalorder %v2066, 0
    %vm2137 = vcmp.ne.s32.totalorder %v2073, 0
    %vm2138 = vcmp.lt.s32.totalorder %v1632, 0
    %vm2139 = vcmp.lt.s32.totalorder %v1639, 0
    %vm2140 = vcmp.lt.s32.totalorder %v1646, 0
    %vm2141 = vcmp.lt.s32.totalorder %v1653, 0
    %vm2142 = vcmp.lt.s32.totalorder %v1660, 0
    %vm2143 = vcmp.lt.s32.totalorder %v1667, 0
    %vm2144 = vcmp.lt.s32.totalorder %v1674, 0
    %vm2145 = vcmp.lt.s32.totalorder %v1681, 0
    %vm2146 = vcmp.lt.s32.totalorder %v1688, 0
    %vm2147 = vcmp.lt.s32.totalorder %v1695, 0
    %vm2148 = vcmp.lt.s32.totalorder %v1702, 0
    %vm2149 = vcmp.lt.s32.totalorder %v1709, 0
    %vm2150 = vcmp.lt.s32.totalorder %v1716, 0
    %vm2151 = vcmp.lt.s32.totalorder %v1723, 0
    %vm2152 = vcmp.lt.s32.totalorder %v1730, 0
    %vm2153 = vcmp.lt.s32.totalorder %v1737, 0
    %vm2154 = vcmp.lt.s32.totalorder %v1744, 0
    %vm2155 = vcmp.lt.s32.totalorder %v1751, 0
    %vm2156 = vcmp.lt.s32.totalorder %v1758, 0
    %vm2157 = vcmp.lt.s32.totalorder %v1765, 0
    %vm2158 = vcmp.lt.s32.totalorder %v1772, 0
    %vm2159 = vcmp.lt.s32.totalorder %v1779, 0
    %vm2160 = vcmp.lt.s32.totalorder %v1786, 0
    %vm2161 = vcmp.lt.s32.totalorder %v1793, 0
    %vm2162 = vcmp.lt.s32.totalorder %v1800, 0
    %vm2163 = vcmp.lt.s32.totalorder %v1807, 0
    %vm2164 = vcmp.lt.s32.totalorder %v1814, 0
    %vm2165 = vcmp.lt.s32.totalorder %v1821, 0
    %vm2166 = vcmp.lt.s32.totalorder %v1828, 0
    %vm2167 = vcmp.lt.s32.totalorder %v1835, 0
    %vm2168 = vcmp.lt.s32.totalorder %v1842, 0
    %vm2169 = vcmp.lt.s32.totalorder %v1849, 0
    %vm2170 = vcmp.lt.s32.totalorder %v1856, 0
    %vm2171 = vcmp.lt.s32.totalorder %v1863, 0
    %vm2172 = vcmp.lt.s32.totalorder %v1870, 0
    %vm2173 = vcmp.lt.s32.totalorder %v1877, 0
    %vm2174 = vcmp.lt.s32.totalorder %v1884, 0
    %vm2175 = vcmp.lt.s32.totalorder %v1891, 0
    %vm2176 = vcmp.lt.s32.totalorder %v1898, 0
    %vm2177 = vcmp.lt.s32.totalorder %v1905, 0
    %vm2178 = vcmp.lt.s32.totalorder %v1912, 0
    %vm2179 = vcmp.lt.s32.totalorder %v1919, 0
    %vm2180 = vcmp.lt.s32.totalorder %v1926, 0
    %vm2181 = vcmp.lt.s32.totalorder %v1933, 0
    %vm2182 = vcmp.lt.s32.totalorder %v1940, 0
    %vm2183 = vcmp.lt.s32.totalorder %v1947, 0
    %vm2184 = vcmp.lt.s32.totalorder %v1954, 0
    %vm2185 = vcmp.lt.s32.totalorder %v1961, 0
    %vm2186 = vcmp.lt.s32.totalorder %v1968, 0
    %vm2187 = vcmp.lt.s32.totalorder %v1975, 0
    %vm2188 = vcmp.lt.s32.totalorder %v1982, 0
    %vm2189 = vcmp.lt.s32.totalorder %v1989, 0
    %vm2190 = vcmp.lt.s32.totalorder %v1996, 0
    %vm2191 = vcmp.lt.s32.totalorder %v2003, 0
    %vm2192 = vcmp.lt.s32.totalorder %v2010, 0
    %vm2193 = vcmp.lt.s32.totalorder %v2017, 0
    %vm2194 = vcmp.lt.s32.totalorder %v2024, 0
    %vm2195 = vcmp.lt.s32.totalorder %v2031, 0
    %vm2196 = vcmp.lt.s32.totalorder %v2038, 0
    %vm2197 = vcmp.lt.s32.totalorder %v2045, 0
    %vm2198 = vcmp.lt.s32.totalorder %v2052, 0
    %vm2199 = vcmp.lt.s32.totalorder %v2059, 0
    %vm2200 = vcmp.lt.s32.totalorder %v2066, 0
    %vm2201 = vcmp.lt.s32.totalorder %v2073, 0
    %vm2202 = vmand %vm2138, %vm2074
    %vm2203 = vmand %vm2139, %vm2075
    %vm2204 = vmand %vm2140, %vm2076
    %vm2205 = vmand %vm2141, %vm2077
    %vm2206 = vmand %vm2142, %vm2078
    %vm2207 = vmand %vm2143, %vm2079
    %vm2208 = vmand %vm2144, %vm2080
    %vm2209 = vmand %vm2145, %vm2081
    %vm2210 = vmand %vm2146, %vm2082
    %vm2211 = vmand %vm2147, %vm2083
    %vm2212 = vmand %vm2148, %vm2084
    %vm2213 = vmand %vm2149, %vm2085
    %vm2214 = vmand %vm2150, %vm2086
    %vm2215 = vmand %vm2151, %vm2087
    %vm2216 = vmand %vm2152, %vm2088
    %vm2217 = vmand %vm2153, %vm2089
    %vm2218 = vmand %vm2154, %vm2090
    %vm2219 = vmand %vm2155, %vm2091
    %vm2220 = vmand %vm2156, %vm2092
    %vm2221 = vmand %vm2157, %vm2093
    %vm2222 = vmand %vm2158, %vm2094
    %vm2223 = vmand %vm2159, %vm2095
    %vm2224 = vmand %vm2160, %vm2096
    %vm2225 = vmand %vm2161, %vm2097
    %vm2226 = vmand %vm2162, %vm2098
    %vm2227 = vmand %vm2163, %vm2099
    %vm2228 = vmand %vm2164, %vm2100
    %vm2229 = vmand %vm2165, %vm2101
    %vm2230 = vmand %vm2166, %vm2102
    %vm2231 = vmand %vm2167, %vm2103
    %vm2232 = vmand %vm2168, %vm2104
    %vm2233 = vmand %vm2169, %vm2105
    %vm2234 = vmand %vm2170, %vm2106
    %vm2235 = vmand %vm2171, %vm2107
    %vm2236 = vmand %vm2172, %vm2108
    %vm2237 = vmand %vm2173, %vm2109
    %vm2238 = vmand %vm2174, %vm2110
    %vm2239 = vmand %vm2175, %vm2111
    %vm2240 = vmand %vm2176, %vm2112
    %vm2241 = vmand %vm2177, %vm2113
    %vm2242 = vmand %vm2178, %vm2114
    %vm2243 = vmand %vm2179, %vm2115
    %vm2244 = vmand %vm2180, %vm2116
    %vm2245 = vmand %vm2181, %vm2117
    %vm2246 = vmand %vm2182, %vm2118
    %vm2247 = vmand %vm2183, %vm2119
    %vm2248 = vmand %vm2184, %vm2120
    %vm2249 = vmand %vm2185, %vm2121
    %vm2250 = vmand %vm2186, %vm2122
    %vm2251 = vmand %vm2187, %vm2123
    %vm2252 = vmand %vm2188, %vm2124
    %vm2253 = vmand %vm2189, %vm2125
    %vm2254 = vmand %vm2190, %vm2126
    %vm2255 = vmand %vm2191, %vm2127
    %vm2256 = vmand %vm2192, %vm2128
    %vm2257 = vmand %vm2193, %vm2129
    %vm2258 = vmand %vm2194, %vm2130
    %vm2259 = vmand %vm2195, %vm2131
    %vm2260 = vmand %vm2196, %vm2132
    %vm2261 = vmand %vm2197, %vm2133
    %vm2262 = vmand %vm2198, %vm2134
    %vm2263 = vmand %vm2199, %vm2135
    %vm2264 = vmand %vm2200, %vm2136
    %vm2265 = vmand %vm2201, %vm2137
    %v2266 = vadd.s32 %v1632, 32
    %v2267 = vadd.s32 %v1639, 32
    %v2268 = vadd.s32 %v1646, 32
    %v2269 = vadd.s32 %v1653, 32
    %v2270 = vadd.s32 %v1660, 32
    %v2271 = vadd.s32 %v1667, 32
    %v2272 = vadd.s32 %v1674, 32
    %v2273 = vadd.s32 %v1681, 32
    %v2274 = vadd.s32 %v1688, 32
    %v2275 = vadd.s32 %v1695, 32
    %v2276 = vadd.s32 %v1702, 32
    %v2277 = vadd.s32 %v1709, 32
    %v2278 = vadd.s32 %v1716, 32
    %v2279 = vadd.s32 %v1723, 32
    %v2280 = vadd.s32 %v1730, 32
    %v2281 = vadd.s32 %v1737, 32
    %v2282 = vadd.s32 %v1744, 32
    %v2283 = vadd.s32 %v1751, 32
    %v2284 = vadd.s32 %v1758, 32
    %v2285 = vadd.s32 %v1765, 32
    %v2286 = vadd.s32 %v1772, 32
    %v2287 = vadd.s32 %v1779, 32
    %v2288 = vadd.s32 %v1786, 32
    %v2289 = vadd.s32 %v1793, 32
    %v2290 = vadd.s32 %v1800, 32
    %v2291 = vadd.s32 %v1807, 32
    %v2292 = vadd.s32 %v1814, 32
    %v2293 = vadd.s32 %v1821, 32
    %v2294 = vadd.s32 %v1828, 32
    %v2295 = vadd.s32 %v1835, 32
    %v2296 = vadd.s32 %v1842, 32
    %v2297 = vadd.s32 %v1849, 32
    %v2298 = vadd.s32 %v1856, 32
    %v2299 = vadd.s32 %v1863, 32
    %v2300 = vadd.s32 %v1870, 32
    %v2301 = vadd.s32 %v1877, 32
    %v2302 = vadd.s32 %v1884, 32
    %v2303 = vadd.s32 %v1891, 32
    %v2304 = vadd.s32 %v1898, 32
    %v2305 = vadd.s32 %v1905, 32
    %v2306 = vadd.s32 %v1912, 32
    %v2307 = vadd.s32 %v1919, 32
    %v2308 = vadd.s32 %v1926, 32
    %v2309 = vadd.s32 %v1933, 32
    %v2310 = vadd.s32 %v1940, 32
    %v2311 = vadd.s32 %v1947, 32
    %v2312 = vadd.s32 %v1954, 32
    %v2313 = vadd.s32 %v1961, 32
    %v2314 = vadd.s32 %v1968, 32
    %v2315 = vadd.s32 %v1975, 32
    %v2316 = vadd.s32 %v1982, 32
    %v2317 = vadd.s32 %v1989, 32
    %v2318 = vadd.s32 %v1996, 32
    %v2319 = vadd.s32 %v2003, 32
    %v2320 = vadd.s32 %v2010, 32
    %v2321 = vadd.s32 %v2017, 32
    %v2322 = vadd.s32 %v2024, 32
    %v2323 = vadd.s32 %v2031, 32
    %v2324 = vadd.s32 %v2038, 32
    %v2325 = vadd.s32 %v2045, 32
    %v2326 = vadd.s32 %v2052, 32
    %v2327 = vadd.s32 %v2059, 32
    %v2328 = vadd.s32 %v2066, 32
    %v2329 = vadd.s32 %v2073, 32
    %v2330 = vsel %vm2202, %v2266, %v1632
    %v2331 = vsel %vm2203, %v2267, %v1639
    %v2332 = vsel %vm2204, %v2268, %v1646
    %v2333 = vsel %vm2205, %v2269, %v1653
    %v2334 = vsel %vm2206, %v2270, %v1660
    %v2335 = vsel %vm2207, %v2271, %v1667
    %v2336 = vsel %vm2208, %v2272, %v1674
    %v2337 = vsel %vm2209, %v2273, %v1681
    %v2338 = vsel %vm2210, %v2274, %v1688
    %v2339 = vsel %vm2211, %v2275, %v1695
    %v2340 = vsel %vm2212, %v2276, %v1702
    %v2341 = vsel %vm2213, %v2277, %v1709
    %v2342 = vsel %vm2214, %v2278, %v1716
    %v2343 = vsel %vm2215, %v2279, %v1723
    %v2344 = vsel %vm2216, %v2280, %v1730
    %v2345 = vsel %vm2217, %v2281, %v1737
    %v2346 = vsel %vm2218, %v2282, %v1744
    %v2347 = vsel %vm2219, %v2283, %v1751
    %v2348 = vsel %vm2220, %v2284, %v1758
    %v2349 = vsel %vm2221, %v2285, %v1765
    %v2350 = vsel %vm2222, %v2286, %v1772
    %v2351 = vsel %vm2223, %v2287, %v1779
    %v2352 = vsel %vm2224, %v2288, %v1786
    %v2353 = vsel %vm2225, %v2289, %v1793
    %v2354 = vsel %vm2226, %v2290, %v1800
    %v2355 = vsel %vm2227, %v2291, %v1807
    %v2356 = vsel %vm2228, %v2292, %v1814
    %v2357 = vsel %vm2229, %v2293, %v1821
    %v2358 = vsel %vm2230, %v2294, %v1828
    %v2359 = vsel %vm2231, %v2295, %v1835
    %v2360 = vsel %vm2232, %v2296, %v1842
    %v2361 = vsel %vm2233, %v2297, %v1849
    %v2362 = vsel %vm2234, %v2298, %v1856
    %v2363 = vsel %vm2235, %v2299, %v1863
    %v2364 = vsel %vm2236, %v2300, %v1870
    %v2365 = vsel %vm2237, %v2301, %v1877
    %v2366 = vsel %vm2238, %v2302, %v1884
    %v2367 = vsel %vm2239, %v2303, %v1891
    %v2368 = vsel %vm2240, %v2304, %v1898
    %v2369 = vsel %vm2241, %v2305, %v1905
    %v2370 = vsel %vm2242, %v2306, %v1912
    %v2371 = vsel %vm2243, %v2307, %v1919
    %v2372 = vsel %vm2244, %v2308, %v1926
    %v2373 = vsel %vm2245, %v2309, %v1933
    %v2374 = vsel %vm2246, %v2310, %v1940
    %v2375 = vsel %vm2247, %v2311, %v1947
    %v2376 = vsel %vm2248, %v2312, %v1954
    %v2377 = vsel %vm2249, %v2313, %v1961
    %v2378 = vsel %vm2250, %v2314, %v1968
    %v2379 = vsel %vm2251, %v2315, %v1975
    %v2380 = vsel %vm2252, %v2316, %v1982
    %v2381 = vsel %vm2253, %v2317, %v1989
    %v2382 = vsel %vm2254, %v2318, %v1996
    %v2383 = vsel %vm2255, %v2319, %v2003
    %v2384 = vsel %vm2256, %v2320, %v2010
    %v2385 = vsel %vm2257, %v2321, %v2017
    %v2386 = vsel %vm2258, %v2322, %v2024
    %v2387 = vsel %vm2259, %v2323, %v2031
    %v2388 = vsel %vm2260, %v2324, %v2038
    %v2389 = vsel %vm2261, %v2325, %v2045
    %v2390 = vsel %vm2262, %v2326, %v2052
    %v2391 = vsel %vm2263, %v2327, %v2059
    %v2392 = vsel %vm2264, %v2328, %v2066
    %v2393 = vsel %vm2265, %v2329, %v2073
    %vm2394 = vcmp.eq.s32.totalorder %v2330, %v865
    %vm2395 = vcmp.eq.s32.totalorder %v2331, %v865
    %vm2396 = vcmp.eq.s32.totalorder %v2332, %v865
    %vm2397 = vcmp.eq.s32.totalorder %v2333, %v865
    %vm2398 = vcmp.eq.s32.totalorder %v2334, %v865
    %vm2399 = vcmp.eq.s32.totalorder %v2335, %v865
    %vm2400 = vcmp.eq.s32.totalorder %v2336, %v865
    %vm2401 = vcmp.eq.s32.totalorder %v2337, %v865
    %vm2402 = vcmp.eq.s32.totalorder %v2338, %v865
    %vm2403 = vcmp.eq.s32.totalorder %v2339, %v865
    %vm2404 = vcmp.eq.s32.totalorder %v2340, %v865
    %vm2405 = vcmp.eq.s32.totalorder %v2341, %v865
    %vm2406 = vcmp.eq.s32.totalorder %v2342, %v865
    %vm2407 = vcmp.eq.s32.totalorder %v2343, %v865
    %vm2408 = vcmp.eq.s32.totalorder %v2344, %v865
    %vm2409 = vcmp.eq.s32.totalorder %v2345, %v865
    %vm2410 = vcmp.eq.s32.totalorder %v2346, %v865
    %vm2411 = vcmp.eq.s32.totalorder %v2347, %v865
    %vm2412 = vcmp.eq.s32.totalorder %v2348, %v865
    %vm2413 = vcmp.eq.s32.totalorder %v2349, %v865
    %vm2414 = vcmp.eq.s32.totalorder %v2350, %v865
    %vm2415 = vcmp.eq.s32.totalorder %v2351, %v865
    %vm2416 = vcmp.eq.s32.totalorder %v2352, %v865
    %vm2417 = vcmp.eq.s32.totalorder %v2353, %v865
    %vm2418 = vcmp.eq.s32.totalorder %v2354, %v865
    %vm2419 = vcmp.eq.s32.totalorder %v2355, %v865
    %vm2420 = vcmp.eq.s32.totalorder %v2356, %v865
    %vm2421 = vcmp.eq.s32.totalorder %v2357, %v865
    %vm2422 = vcmp.eq.s32.totalorder %v2358, %v865
    %vm2423 = vcmp.eq.s32.totalorder %v2359, %v865
    %vm2424 = vcmp.eq.s32.totalorder %v2360, %v865
    %vm2425 = vcmp.eq.s32.totalorder %v2361, %v865
    %vm2426 = vcmp.eq.s32.totalorder %v2362, %v865
    %vm2427 = vcmp.eq.s32.totalorder %v2363, %v865
    %vm2428 = vcmp.eq.s32.totalorder %v2364, %v865
    %vm2429 = vcmp.eq.s32.totalorder %v2365, %v865
    %vm2430 = vcmp.eq.s32.totalorder %v2366, %v865
    %vm2431 = vcmp.eq.s32.totalorder %v2367, %v865
    %vm2432 = vcmp.eq.s32.totalorder %v2368, %v865
    %vm2433 = vcmp.eq.s32.totalorder %v2369, %v865
    %vm2434 = vcmp.eq.s32.totalorder %v2370, %v865
    %vm2435 = vcmp.eq.s32.totalorder %v2371, %v865
    %vm2436 = vcmp.eq.s32.totalorder %v2372, %v865
    %vm2437 = vcmp.eq.s32.totalorder %v2373, %v865
    %vm2438 = vcmp.eq.s32.totalorder %v2374, %v865
    %vm2439 = vcmp.eq.s32.totalorder %v2375, %v865
    %vm2440 = vcmp.eq.s32.totalorder %v2376, %v865
    %vm2441 = vcmp.eq.s32.totalorder %v2377, %v865
    %vm2442 = vcmp.eq.s32.totalorder %v2378, %v865
    %vm2443 = vcmp.eq.s32.totalorder %v2379, %v865
    %vm2444 = vcmp.eq.s32.totalorder %v2380, %v865
    %vm2445 = vcmp.eq.s32.totalorder %v2381, %v865
    %vm2446 = vcmp.eq.s32.totalorder %v2382, %v865
    %vm2447 = vcmp.eq.s32.totalorder %v2383, %v865
    %vm2448 = vcmp.eq.s32.totalorder %v2384, %v865
    %vm2449 = vcmp.eq.s32.totalorder %v2385, %v865
    %vm2450 = vcmp.eq.s32.totalorder %v2386, %v865
    %vm2451 = vcmp.eq.s32.totalorder %v2387, %v865
    %vm2452 = vcmp.eq.s32.totalorder %v2388, %v865
    %vm2453 = vcmp.eq.s32.totalorder %v2389, %v865
    %vm2454 = vcmp.eq.s32.totalorder %v2390, %v865
    %vm2455 = vcmp.eq.s32.totalorder %v2391, %v865
    %vm2456 = vcmp.eq.s32.totalorder %v2392, %v865
    %vm2457 = vcmp.eq.s32.totalorder %v2393, %v865
    %v2458 = vsel %vm2394, 1, 0
    %v2459 = vsel %vm2395, 1, 0
    %v2460 = vsel %vm2396, 1, 0
    %v2461 = vsel %vm2397, 1, 0
    %v2462 = vsel %vm2398, 1, 0
    %v2463 = vsel %vm2399, 1, 0
    %v2464 = vsel %vm2400, 1, 0
    %v2465 = vsel %vm2401, 1, 0
    %v2466 = vsel %vm2402, 1, 0
    %v2467 = vsel %vm2403, 1, 0
    %v2468 = vsel %vm2404, 1, 0
    %v2469 = vsel %vm2405, 1, 0
    %v2470 = vsel %vm2406, 1, 0
    %v2471 = vsel %vm2407, 1, 0
    %v2472 = vsel %vm2408, 1, 0
    %v2473 = vsel %vm2409, 1, 0
    %v2474 = vsel %vm2410, 1, 0
    %v2475 = vsel %vm2411, 1, 0
    %v2476 = vsel %vm2412, 1, 0
    %v2477 = vsel %vm2413, 1, 0
    %v2478 = vsel %vm2414, 1, 0
    %v2479 = vsel %vm2415, 1, 0
    %v2480 = vsel %vm2416, 1, 0
    %v2481 = vsel %vm2417, 1, 0
    %v2482 = vsel %vm2418, 1, 0
    %v2483 = vsel %vm2419, 1, 0
    %v2484 = vsel %vm2420, 1, 0
    %v2485 = vsel %vm2421, 1, 0
    %v2486 = vsel %vm2422, 1, 0
    %v2487 = vsel %vm2423, 1, 0
    %v2488 = vsel %vm2424, 1, 0
    %v2489 = vsel %vm2425, 1, 0
    %v2490 = vsel %vm2426, 1, 0
    %v2491 = vsel %vm2427, 1, 0
    %v2492 = vsel %vm2428, 1, 0
    %v2493 = vsel %vm2429, 1, 0
    %v2494 = vsel %vm2430, 1, 0
    %v2495 = vsel %vm2431, 1, 0
    %v2496 = vsel %vm2432, 1, 0
    %v2497 = vsel %vm2433, 1, 0
    %v2498 = vsel %vm2434, 1, 0
    %v2499 = vsel %vm2435, 1, 0
    %v2500 = vsel %vm2436, 1, 0
    %v2501 = vsel %vm2437, 1, 0
    %v2502 = vsel %vm2438, 1, 0
    %v2503 = vsel %vm2439, 1, 0
    %v2504 = vsel %vm2440, 1, 0
    %v2505 = vsel %vm2441, 1, 0
    %v2506 = vsel %vm2442, 1, 0
    %v2507 = vsel %vm2443, 1, 0
    %v2508 = vsel %vm2444, 1, 0
    %v2509 = vsel %vm2445, 1, 0
    %v2510 = vsel %vm2446, 1, 0
    %v2511 = vsel %vm2447, 1, 0
    %v2512 = vsel %vm2448, 1, 0
    %v2513 = vsel %vm2449, 1, 0
    %v2514 = vsel %vm2450, 1, 0
    %v2515 = vsel %vm2451, 1, 0
    %v2516 = vsel %vm2452, 1, 0
    %v2517 = vsel %vm2453, 1, 0
    %v2518 = vsel %vm2454, 1, 0
    %v2519 = vsel %vm2455, 1, 0
    %v2520 = vsel %vm2456, 1, 0
    %v2521 = vsel %vm2457, 1, 0
    %v2522 = vcvt.s32.f32 %v2458
    %v2523 = vcvt.s32.f32 %v2459
    %v2524 = vcvt.s32.f32 %v2460
    %v2525 = vcvt.s32.f32 %v2461
    %v2526 = vcvt.s32.f32 %v2462
    %v2527 = vcvt.s32.f32 %v2463
    %v2528 = vcvt.s32.f32 %v2464
    %v2529 = vcvt.s32.f32 %v2465
    %v2530 = vcvt.s32.f32 %v2466
    %v2531 = vcvt.s32.f32 %v2467
    %v2532 = vcvt.s32.f32 %v2468
    %v2533 = vcvt.s32.f32 %v2469
    %v2534 = vcvt.s32.f32 %v2470
    %v2535 = vcvt.s32.f32 %v2471
    %v2536 = vcvt.s32.f32 %v2472
    %v2537 = vcvt.s32.f32 %v2473
    %v2538 = vcvt.s32.f32 %v2474
    %v2539 = vcvt.s32.f32 %v2475
    %v2540 = vcvt.s32.f32 %v2476
    %v2541 = vcvt.s32.f32 %v2477
    %v2542 = vcvt.s32.f32 %v2478
    %v2543 = vcvt.s32.f32 %v2479
    %v2544 = vcvt.s32.f32 %v2480
    %v2545 = vcvt.s32.f32 %v2481
    %v2546 = vcvt.s32.f32 %v2482
    %v2547 = vcvt.s32.f32 %v2483
    %v2548 = vcvt.s32.f32 %v2484
    %v2549 = vcvt.s32.f32 %v2485
    %v2550 = vcvt.s32.f32 %v2486
    %v2551 = vcvt.s32.f32 %v2487
    %v2552 = vcvt.s32.f32 %v2488
    %v2553 = vcvt.s32.f32 %v2489
    %v2554 = vcvt.s32.f32 %v2490
    %v2555 = vcvt.s32.f32 %v2491
    %v2556 = vcvt.s32.f32 %v2492
    %v2557 = vcvt.s32.f32 %v2493
    %v2558 = vcvt.s32.f32 %v2494
    %v2559 = vcvt.s32.f32 %v2495
    %v2560 = vcvt.s32.f32 %v2496
    %v2561 = vcvt.s32.f32 %v2497
    %v2562 = vcvt.s32.f32 %v2498
    %v2563 = vcvt.s32.f32 %v2499
    %v2564 = vcvt.s32.f32 %v2500
    %v2565 = vcvt.s32.f32 %v2501
    %v2566 = vcvt.s32.f32 %v2502
    %v2567 = vcvt.s32.f32 %v2503
    %v2568 = vcvt.s32.f32 %v2504
    %v2569 = vcvt.s32.f32 %v2505
    %v2570 = vcvt.s32.f32 %v2506
    %v2571 = vcvt.s32.f32 %v2507
    %v2572 = vcvt.s32.f32 %v2508
    %v2573 = vcvt.s32.f32 %v2509
    %v2574 = vcvt.s32.f32 %v2510
    %v2575 = vcvt.s32.f32 %v2511
    %v2576 = vcvt.s32.f32 %v2512
    %v2577 = vcvt.s32.f32 %v2513
    %v2578 = vcvt.s32.f32 %v2514
    %v2579 = vcvt.s32.f32 %v2515
    %v2580 = vcvt.s32.f32 %v2516
    %v2581 = vcvt.s32.f32 %v2517
    %v2582 = vcvt.s32.f32 %v2518
    %v2583 = vcvt.s32.f32 %v2519
    %v2584 = vcvt.s32.f32 %v2520
    %v2585 = vcvt.s32.f32 %v2521
    %v2586 = vpack.c.bf16 %v2523, %v2522
    %v2587 = vpack.c.bf16 %v2525, %v2524
    %v2588 = vpack.c.bf16 %v2527, %v2526
    %v2589 = vpack.c.bf16 %v2529, %v2528
    %v2590 = vpack.c.bf16 %v2531, %v2530
    %v2591 = vpack.c.bf16 %v2533, %v2532
    %v2592 = vpack.c.bf16 %v2535, %v2534
    %v2593 = vpack.c.bf16 %v2537, %v2536
    %v2594 = vpack.c.bf16 %v2539, %v2538
    %v2595 = vpack.c.bf16 %v2541, %v2540
    %v2596 = vpack.c.bf16 %v2543, %v2542
    %v2597 = vpack.c.bf16 %v2545, %v2544
    %v2598 = vpack.c.bf16 %v2547, %v2546
    %v2599 = vpack.c.bf16 %v2549, %v2548
    %v2600 = vpack.c.bf16 %v2551, %v2550
    %v2601 = vpack.c.bf16 %v2553, %v2552
    %v2602 = vpack.c.bf16 %v2555, %v2554
    %v2603 = vpack.c.bf16 %v2557, %v2556
    %v2604 = vpack.c.bf16 %v2559, %v2558
    %v2605 = vpack.c.bf16 %v2561, %v2560
    %v2606 = vpack.c.bf16 %v2563, %v2562
    %v2607 = vpack.c.bf16 %v2565, %v2564
    %v2608 = vpack.c.bf16 %v2567, %v2566
    %v2609 = vpack.c.bf16 %v2569, %v2568
    %v2610 = vpack.c.bf16 %v2571, %v2570
    %v2611 = vpack.c.bf16 %v2573, %v2572
    %v2612 = vpack.c.bf16 %v2575, %v2574
    %v2613 = vpack.c.bf16 %v2577, %v2576
    %v2614 = vpack.c.bf16 %v2579, %v2578
    %v2615 = vpack.c.bf16 %v2581, %v2580
    %v2616 = vpack.c.bf16 %v2583, %v2582
    %v2617 = vpack.c.bf16 %v2585, %v2584
    %v2618 = vadd.s32 %v865, 128
    %v2619 = vadd.s32 %v865, 256
    %v2620 = vadd.s32 %v865, 384
    %vm2621 = vcmp.lt.s32.totalorder %v865, 0
    %v2622 = vsub.s32 0, %v865
    %v2623 = vsel %vm2621, %v2622, %v865
    %v2624 = vshrl.u32 %v2623, 5
    %v2625 = vand.u32 %v2623, 31
    %v2626 = vsub.s32 0, %v2625
    %v2627 = vsel %vm2621, %v2626, %v2625
    %vm2628 = vcmp.lt.s32.totalorder %v2618, 0
    %v2629 = vsub.s32 0, %v2618
    %v2630 = vsel %vm2628, %v2629, %v2618
    %v2631 = vshrl.u32 %v2630, 5
    %v2632 = vand.u32 %v2630, 31
    %v2633 = vsub.s32 0, %v2632
    %v2634 = vsel %vm2628, %v2633, %v2632
    %vm2635 = vcmp.lt.s32.totalorder %v2619, 0
    %v2636 = vsub.s32 0, %v2619
    %v2637 = vsel %vm2635, %v2636, %v2619
    %v2638 = vshrl.u32 %v2637, 5
    %v2639 = vand.u32 %v2637, 31
    %v2640 = vsub.s32 0, %v2639
    %v2641 = vsel %vm2635, %v2640, %v2639
    %vm2642 = vcmp.lt.s32.totalorder %v2620, 0
    %v2643 = vsub.s32 0, %v2620
    %v2644 = vsel %vm2642, %v2643, %v2620
    %v2645 = vshrl.u32 %v2644, 5
    %v2646 = vand.u32 %v2644, 31
    %v2647 = vsub.s32 0, %v2646
    %v2648 = vsel %vm2642, %v2647, %v2646
    %vm2649 = vcmp.ne.s32.totalorder %v2627, 0
    %vm2650 = vcmp.ne.s32.totalorder %v2634, 0
    %vm2651 = vcmp.ne.s32.totalorder %v2641, 0
    %vm2652 = vcmp.ne.s32.totalorder %v2648, 0
    %vm2653 = vcmp.lt.s32.totalorder %v2627, 0
    %vm2654 = vcmp.lt.s32.totalorder %v2634, 0
    %vm2655 = vcmp.lt.s32.totalorder %v2641, 0
    %vm2656 = vcmp.lt.s32.totalorder %v2648, 0
    %vm2657 = vmand %vm2653, %vm2649
    %vm2658 = vmand %vm2654, %vm2650
    %vm2659 = vmand %vm2655, %vm2651
    %vm2660 = vmand %vm2656, %vm2652
    %v2661 = vadd.s32 %v2627, 32
    %v2662 = vadd.s32 %v2634, 32
    %v2663 = vadd.s32 %v2641, 32
    %v2664 = vadd.s32 %v2648, 32
    %v2665 = vsel %vm2657, %v2661, %v2627
    %v2666 = vsel %vm2658, %v2662, %v2634
    %v2667 = vsel %vm2659, %v2663, %v2641
    %v2668 = vsel %vm2660, %v2664, %v2648
    %vm2669 = vcmp.eq.s32.totalorder %v2665, %v656
    %vm2670 = vcmp.eq.s32.totalorder %v2666, %v656
    %vm2671 = vcmp.eq.s32.totalorder %v2667, %v656
    %vm2672 = vcmp.eq.s32.totalorder %v2668, %v656
    %vm2673 = vcmp.eq.s32.totalorder %v2665, %v657
    %vm2674 = vcmp.eq.s32.totalorder %v2666, %v657
    %vm2675 = vcmp.eq.s32.totalorder %v2667, %v657
    %vm2676 = vcmp.eq.s32.totalorder %v2668, %v657
    %vm2677 = vcmp.eq.s32.totalorder %v2665, %v658
    %vm2678 = vcmp.eq.s32.totalorder %v2666, %v658
    %vm2679 = vcmp.eq.s32.totalorder %v2667, %v658
    %vm2680 = vcmp.eq.s32.totalorder %v2668, %v658
    %vm2681 = vcmp.eq.s32.totalorder %v2665, %v659
    %vm2682 = vcmp.eq.s32.totalorder %v2666, %v659
    %vm2683 = vcmp.eq.s32.totalorder %v2667, %v659
    %vm2684 = vcmp.eq.s32.totalorder %v2668, %v659
    %v2685 = vsel %vm2669, 1, 0
    %v2686 = vsel %vm2670, 1, 0
    %v2687 = vsel %vm2671, 1, 0
    %v2688 = vsel %vm2672, 1, 0
    %v2689 = vsel %vm2673, 1, 0
    %v2690 = vsel %vm2674, 1, 0
    %v2691 = vsel %vm2675, 1, 0
    %v2692 = vsel %vm2676, 1, 0
    %v2693 = vsel %vm2677, 1, 0
    %v2694 = vsel %vm2678, 1, 0
    %v2695 = vsel %vm2679, 1, 0
    %v2696 = vsel %vm2680, 1, 0
    %v2697 = vsel %vm2681, 1, 0
    %v2698 = vsel %vm2682, 1, 0
    %v2699 = vsel %vm2683, 1, 0
    %v2700 = vsel %vm2684, 1, 0
    %v2701 = vcvt.s32.f32 %v2685
    %v2702 = vcvt.s32.f32 %v2686
    %v2703 = vcvt.s32.f32 %v2687
    %v2704 = vcvt.s32.f32 %v2688
    %v2705 = vcvt.s32.f32 %v2689
    %v2706 = vcvt.s32.f32 %v2690
    %v2707 = vcvt.s32.f32 %v2691
    %v2708 = vcvt.s32.f32 %v2692
    %v2709 = vcvt.s32.f32 %v2693
    %v2710 = vcvt.s32.f32 %v2694
    %v2711 = vcvt.s32.f32 %v2695
    %v2712 = vcvt.s32.f32 %v2696
    %v2713 = vcvt.s32.f32 %v2697
    %v2714 = vcvt.s32.f32 %v2698
    %v2715 = vcvt.s32.f32 %v2699
    %v2716 = vcvt.s32.f32 %v2700
    %v2717 = vpack.c.bf16 %v2705, %v2701
    %v2718 = vpack.c.bf16 %v2706, %v2702
    %v2719 = vpack.c.bf16 %v2707, %v2703
    %v2720 = vpack.c.bf16 %v2708, %v2704
    %v2721 = vpack.c.bf16 %v2713, %v2709
    %v2722 = vpack.c.bf16 %v2714, %v2710
    %v2723 = vpack.c.bf16 %v2715, %v2711
    %v2724 = vpack.c.bf16 %v2716, %v2712
    %v2725 = vadd.f32 %v1507, %v1511
    %v2726 = vadd.f32 %v2725, %v1517
    %v2727 = vadd.f32 %v2726, %v1521
    %v2728 = vrot.slane %v2727, 4
    %v2729 = vadd.f32 %v2727, %v2728
    %v2730 = vrot.slane %v2729, 2
    %v2731 = vadd.f32 %v2729, %v2730
    %v2732 = vrot.slane %v2731, 1
    %v2733 = vadd.f32 %v2731, %v2732
    %v2734 = vadd.f32 %v1509, %v1513
    %v2735 = vadd.f32 %v2734, %v1519
    %v2736 = vadd.f32 %v2735, %v1523
    %v2737 = vrot.slane %v2736, 4
    %v2738 = vadd.f32 %v2736, %v2737
    %v2739 = vrot.slane %v2738, 2
    %v2740 = vadd.f32 %v2738, %v2739
    %v2741 = vrot.slane %v2740, 1
    %v2742 = vadd.f32 %v2740, %v2741
    %v2743 = vadd.f32 %v1560, %v1564
    %v2744 = vadd.f32 %v2743, %v1570
    %v2745 = vadd.f32 %v2744, %v1574
    %v2746 = vrot.slane %v2745, 4
    %v2747 = vadd.f32 %v2745, %v2746
    %v2748 = vrot.slane %v2747, 2
    %v2749 = vadd.f32 %v2747, %v2748
    %v2750 = vrot.slane %v2749, 1
    %v2751 = vadd.f32 %v2749, %v2750
    %v2752 = vadd.f32 %v1562, %v1566
    %v2753 = vadd.f32 %v2752, %v1572
    %v2754 = vadd.f32 %v2753, %v1576
    %v2755 = vrot.slane %v2754, 4
    %v2756 = vadd.f32 %v2754, %v2755
    %v2757 = vrot.slane %v2756, 2
    %v2758 = vadd.f32 %v2756, %v2757
    %v2759 = vrot.slane %v2758, 1
    %v2760 = vadd.f32 %v2758, %v2759
    %v2761 = vmul.f32 %v1507, %v1507
    %v2762 = vmul.f32 %v1509, %v1509
    %v2763 = vmul.f32 %v1560, %v1560
    %v2764 = vmul.f32 %v1562, %v1562
    %v2765 = vmul.f32 %v1511, %v1511
    %v2766 = vmul.f32 %v1513, %v1513
    %v2767 = vmul.f32 %v1564, %v1564
    %v2768 = vmul.f32 %v1566, %v1566
    %v2769 = vmul.f32 %v1517, %v1517
    %v2770 = vmul.f32 %v1519, %v1519
    %v2771 = vmul.f32 %v1570, %v1570
    %v2772 = vmul.f32 %v1572, %v1572
    %v2773 = vmul.f32 %v1521, %v1521
    %v2774 = vmul.f32 %v1523, %v1523
    %v2775 = vmul.f32 %v1574, %v1574
    %v2776 = vmul.f32 %v1576, %v1576
    %v2777 = vadd.f32 %v2761, %v2765
    %v2778 = vadd.f32 %v2777, %v2769
    %v2779 = vadd.f32 %v2778, %v2773
    %v2780 = vrot.slane %v2779, 4
    %v2781 = vadd.f32 %v2779, %v2780
    %v2782 = vrot.slane %v2781, 2
    %v2783 = vadd.f32 %v2781, %v2782
    %v2784 = vrot.slane %v2783, 1
    %v2785 = vadd.f32 %v2783, %v2784
    %v2786 = vadd.f32 %v2762, %v2766
    %v2787 = vadd.f32 %v2786, %v2770
    %v2788 = vadd.f32 %v2787, %v2774
    %v2789 = vrot.slane %v2788, 4
    %v2790 = vadd.f32 %v2788, %v2789
    %v2791 = vrot.slane %v2790, 2
    %v2792 = vadd.f32 %v2790, %v2791
    %v2793 = vrot.slane %v2792, 1
    %v2794 = vadd.f32 %v2792, %v2793
    %v2795 = vadd.f32 %v2763, %v2767
    %v2796 = vadd.f32 %v2795, %v2771
    %v2797 = vadd.f32 %v2796, %v2775
    %v2798 = vrot.slane %v2797, 4
    %v2799 = vadd.f32 %v2797, %v2798
    %v2800 = vrot.slane %v2799, 2
    %v2801 = vadd.f32 %v2799, %v2800
    %v2802 = vrot.slane %v2801, 1
    %v2803 = vadd.f32 %v2801, %v2802
    %v2804 = vadd.f32 %v2764, %v2768
    %v2805 = vadd.f32 %v2804, %v2772
    %v2806 = vadd.f32 %v2805, %v2776
    %v2807 = vrot.slane %v2806, 4
    %v2808 = vadd.f32 %v2806, %v2807
    %v2809 = vrot.slane %v2808, 2
    %v2810 = vadd.f32 %v2808, %v2809
    %v2811 = vrot.slane %v2810, 1
    %v2812 = vadd.f32 %v2810, %v2811
    %v2813 = vsel %vm608, %v2733, %v2785
    %v2814 = vsel %vm608, %v2742, %v2794
    %v2815 = vsel %vm608, %v2751, %v2803
    %v2816 = vsel %vm608, %v2760, %v2812
    %v2821 = vrot.slane %v609, 7
    %v2822 = vrot.slane %v610, 7
    %v2823 = vrot.slane %v611, 7
    %v2824 = vrot.slane %v612, 7
    %v2833 = vrot.slane %v2813, 7
    %v2834 = vrot.slane %v2814, 7
    %v2835 = vrot.slane %v2815, 7
    %v2836 = vrot.slane %v2816, 7
    %v2841 = vrot.slane %v609, 6
    %v2842 = vrot.slane %v610, 6
    %v2843 = vrot.slane %v611, 6
    %v2844 = vrot.slane %v612, 6
    %v2849 = vsel %vm608, %v2813, %v2821
    %v2850 = vsel %vm608, %v2814, %v2822
    %v2851 = vsel %vm608, %v2815, %v2823
    %v2852 = vsel %vm608, %v2816, %v2824
    %vm2853 = vcmask 1041408
    %v2854 = vsel %vm2853, %v2849, %v2833
    %v2855 = vsel %vm2853, %v2850, %v2834
    %v2856 = vsel %vm2853, %v2851, %v2835
    %v2857 = vsel %vm2853, %v2852, %v2836
    %vm2858 = vcmask 1042432
    %v2859 = vsel %vm2858, %v2854, %v2841
    %v2860 = vsel %vm2858, %v2855, %v2842
    %v2861 = vsel %vm2858, %v2856, %v2843
    %v2862 = vsel %vm2858, %v2857, %v2844
    %v2863 = vpack.c.bf16 %v2859, %v2859
    %v2864 = vpack.c.bf16 %v2860, %v2860
    %v2865 = vpack.c.bf16 %v2861, %v2861
    %v2866 = vpack.c.bf16 %v2862, %v2862
    %2867 = vmatprep.subr.bf16.mxu0 0
    %2868 = vmatpush1.bf16.msra.mxu0 %v2586
    %2869 = vmatprep.subr.bf16.mxu0 0
    %2870 = vmatpush1.bf16.msra.mxu0 %v2587
    %2871 = vmatprep.subr.bf16.mxu0 0
    %2872 = vmatpush1.bf16.msra.mxu0 %v2588
    %2873 = vmatprep.subr.bf16.mxu0 0
    %2874 = vmatpush1.bf16.msra.mxu0 %v2589
    %2875 = vmatprep.subr.bf16.mxu0 0
    %2876 = vmatpush1.bf16.msra.mxu0 %v2590
    %2877 = vmatprep.subr.bf16.mxu0 0
    %2878 = vmatpush1.bf16.msra.mxu0 %v2591
    %2879 = vmatprep.subr.bf16.mxu0 0
    %2880 = vmatpush1.bf16.msra.mxu0 %v2592
    %2881 = vmatprep.subr.bf16.mxu0 0
    %2882 = vmatpush1.bf16.msra.mxu0 %v2593
    %2883 = vmatprep.subr.bf16.mxu0 0
    %2884 = vmatpush1.bf16.msra.mxu0 %v2594
    %2885 = vmatprep.subr.bf16.mxu0 0
    %2886 = vmatpush1.bf16.msra.mxu0 %v2595
    %2887 = vmatprep.subr.bf16.mxu0 0
    %2888 = vmatpush1.bf16.msra.mxu0 %v2596
    %2889 = vmatprep.subr.bf16.mxu0 0
    %2890 = vmatpush1.bf16.msra.mxu0 %v2597
    %2891 = vmatprep.subr.bf16.mxu0 0
    %2892 = vmatpush1.bf16.msra.mxu0 %v2598
    %2893 = vmatprep.subr.bf16.mxu0 0
    %2894 = vmatpush1.bf16.msra.mxu0 %v2599
    %2895 = vmatprep.subr.bf16.mxu0 0
    %2896 = vmatpush1.bf16.msra.mxu0 %v2600
    %2897 = vmatprep.subr.bf16.mxu0 0
    %2898 = vmatpush1.bf16.msra.mxu0 %v2601
    %2899 = vmatprep.mubr.bf16.mxu0 %v2864
    %2900 = vmatmul.mubr.bf16.gmra.mrb[0].mxu0 %v2863
    %v2901 = vpop.f32.mrb[0].mxu0
    %v2902 = vadd.f32 0.0, %v2901
    %v2903 = vpop.f32.mrb[0].mxu0
    %v2904 = vpop.f32.mrb[0].mxu0
    %v2905 = vpop.f32.mrb[0].mxu0
    %2906 = vdwg.mxu0
    %2907 = vmatprep.subr.bf16.mxu0 0
    %2908 = vmatpush1.bf16.msra.mxu0 %v2602
    %2909 = vmatprep.subr.bf16.mxu0 0
    %2910 = vmatpush1.bf16.msra.mxu0 %v2603
    %2911 = vmatprep.subr.bf16.mxu0 0
    %2912 = vmatpush1.bf16.msra.mxu0 %v2604
    %2913 = vmatprep.subr.bf16.mxu0 0
    %2914 = vmatpush1.bf16.msra.mxu0 %v2605
    %2915 = vmatprep.subr.bf16.mxu0 0
    %2916 = vmatpush1.bf16.msra.mxu0 %v2606
    %2917 = vmatprep.subr.bf16.mxu0 0
    %2918 = vmatpush1.bf16.msra.mxu0 %v2607
    %2919 = vmatprep.subr.bf16.mxu0 0
    %2920 = vmatpush1.bf16.msra.mxu0 %v2608
    %2921 = vmatprep.subr.bf16.mxu0 0
    %2922 = vmatpush1.bf16.msra.mxu0 %v2609
    %2923 = vmatprep.subr.bf16.mxu0 0
    %2924 = vmatpush1.bf16.msra.mxu0 %v2610
    %2925 = vmatprep.subr.bf16.mxu0 0
    %2926 = vmatpush1.bf16.msra.mxu0 %v2611
    %2927 = vmatprep.subr.bf16.mxu0 0
    %2928 = vmatpush1.bf16.msra.mxu0 %v2612
    %2929 = vmatprep.subr.bf16.mxu0 0
    %2930 = vmatpush1.bf16.msra.mxu0 %v2613
    %2931 = vmatprep.subr.bf16.mxu0 0
    %2932 = vmatpush1.bf16.msra.mxu0 %v2614
    %2933 = vmatprep.subr.bf16.mxu0 0
    %2934 = vmatpush1.bf16.msra.mxu0 %v2615
    %2935 = vmatprep.subr.bf16.mxu0 0
    %2936 = vmatpush1.bf16.msra.mxu0 %v2616
    %2937 = vmatprep.subr.bf16.mxu0 0
    %2938 = vmatpush1.bf16.msra.mxu0 %v2617
    %2939 = vmatprep.mubr.bf16.mxu0 %v2866
    %2940 = vmatmul.mubr.bf16.gmra.mrb[0].mxu0 %v2865
    %v2941 = vpop.f32.mrb[0].mxu0
    %v2942 = vadd.f32 %v2902, %v2941
    %v2943 = vpop.f32.mrb[0].mxu0
    %v2944 = vpop.f32.mrb[0].mxu0
    %v2945 = vpop.f32.mrb[0].mxu0
    %2946 = vdwg.mxu0
    %v2947 = vmul.f32 %v2942, 0.001953125
    %v2948 = vmul.f32 %v2947, %v2947
    %v2950 = vrot.slane %v2948, 6
    %v2952 = vsub.f32 %v2947, %v2950
    %v2953 = vld [vmem:[%s3 + $0x4] sm:$0x3]
    %v2954 = vld [vmem:[%s3 + $0x6] sm:$0x3]
    %v2955 = vadd.f32 %v2952, 1e-05
    %v2956 = vrsqrt.pop %v2955
    %v2958 = vrot.slane %v2956, 2
    %v2960 = vmul.f32 %v2953, %v2958
    %v2961 = vmul.f32 %v2947, %v2960
    %v2962 = vsub.f32 %v2954, %v2961
    %v2964 = vrot.slane %v2962, 6
    %v2966 = vsel %vm2853, %v2960, %v2964
    %v2967 = vpack.c.bf16 %v2966, %v2966
    %vm2968 = vcmask 261120
    %v2970 = vsel %vm2968, %v2967, 0
    %2972 = vmatprep.subr.bf16.mxu0 %v2718
    %2973 = vmatpush1.bf16.msra.mxu0 %v2717
    %2974 = vmatprep.subr.bf16.mxu0 %v2722
    %2975 = vmatpush1.bf16.msra.mxu0 %v2721
    %2976 = vmatprep.subr.bf16.mxu0 0
    %2977 = vmatpush1.bf16.msra.mxu0 0
    %2978 = vmatprep.subr.bf16.mxu0 0
    %2979 = vmatpush1.bf16.msra.mxu0 0
    %2980 = vmatprep.subr.bf16.mxu0 0
    %2981 = vmatpush1.bf16.msra.mxu0 0
    %2982 = vmatprep.subr.bf16.mxu0 0
    %2983 = vmatpush1.bf16.msra.mxu0 0
    %2984 = vmatprep.subr.bf16.mxu0 0
    %2985 = vmatpush1.bf16.msra.mxu0 0
    %2986 = vmatprep.subr.bf16.mxu0 0
    %2987 = vmatpush1.bf16.msra.mxu0 0
    %2988 = vmatprep.subr.bf16.mxu0 0
    %2989 = vmatpush1.bf16.msra.mxu0 0
    %2990 = vmatprep.subr.bf16.mxu0 0
    %2991 = vmatpush1.bf16.msra.mxu0 0
    %2992 = vmatprep.subr.bf16.mxu0 0
    %2993 = vmatpush1.bf16.msra.mxu0 0
    %2994 = vmatprep.subr.bf16.mxu0 0
    %2995 = vmatpush1.bf16.msra.mxu0 0
    %2996 = vmatprep.subr.bf16.mxu0 0
    %2997 = vmatpush1.bf16.msra.mxu0 0
    %2998 = vmatprep.subr.bf16.mxu0 0
    %2999 = vmatpush1.bf16.msra.mxu0 0
    %3000 = vmatprep.subr.bf16.mxu0 0
    %3001 = vmatpush1.bf16.msra.mxu0 0
    %3002 = vmatprep.subr.bf16.mxu0 0
    %3003 = vmatpush1.bf16.msra.mxu0 0
    %3004 = vmatprep.mubr.bf16.mxu0 0
    %3005 = vmatmul.mubr.bf16.gmra.mrb[0].mxu0 %v2970
    %v3006 = vpop.f32.mrb[0].mxu0
    %v3007 = vadd.f32 0.0, %v3006
    %v3008 = vpop.f32.mrb[0].mxu0
    %v3009 = vadd.f32 0.0, %v3008
    %v3010 = vpop.f32.mrb[0].mxu0
    %v3011 = vpop.f32.mrb[0].mxu0
    %3012 = vdwg.mxu0
    %3013 = vmatprep.subr.bf16.mxu0 %v2720
    %3014 = vmatpush1.bf16.msra.mxu0 %v2719
    %3015 = vmatprep.subr.bf16.mxu0 %v2724
    %3016 = vmatpush1.bf16.msra.mxu0 %v2723
    %3017 = vmatprep.subr.bf16.mxu0 0
    %3018 = vmatpush1.bf16.msra.mxu0 0
    %3019 = vmatprep.subr.bf16.mxu0 0
    %3020 = vmatpush1.bf16.msra.mxu0 0
    %3021 = vmatprep.subr.bf16.mxu0 0
    %3022 = vmatpush1.bf16.msra.mxu0 0
    %3023 = vmatprep.subr.bf16.mxu0 0
    %3024 = vmatpush1.bf16.msra.mxu0 0
    %3025 = vmatprep.subr.bf16.mxu0 0
    %3026 = vmatpush1.bf16.msra.mxu0 0
    %3027 = vmatprep.subr.bf16.mxu0 0
    %3028 = vmatpush1.bf16.msra.mxu0 0
    %3029 = vmatprep.subr.bf16.mxu0 0
    %3030 = vmatpush1.bf16.msra.mxu0 0
    %3031 = vmatprep.subr.bf16.mxu0 0
    %3032 = vmatpush1.bf16.msra.mxu0 0
    %3033 = vmatprep.subr.bf16.mxu0 0
    %3034 = vmatpush1.bf16.msra.mxu0 0
    %3035 = vmatprep.subr.bf16.mxu0 0
    %3036 = vmatpush1.bf16.msra.mxu0 0
    %3037 = vmatprep.subr.bf16.mxu0 0
    %3038 = vmatpush1.bf16.msra.mxu0 0
    %3039 = vmatprep.subr.bf16.mxu0 0
    %3040 = vmatpush1.bf16.msra.mxu0 0
    %3041 = vmatprep.subr.bf16.mxu0 0
    %3042 = vmatpush1.bf16.msra.mxu0 0
    %3043 = vmatprep.subr.bf16.mxu0 0
    %3044 = vmatpush1.bf16.msra.mxu0 0
    %3045 = vmatprep.mubr.bf16.mxu0 0
    %3046 = vmatmul.mubr.bf16.gmra.mrb[0].mxu0 %v2970
    %v3047 = vpop.f32.mrb[0].mxu0
    %v3048 = vadd.f32 0.0, %v3047
    %v3049 = vpop.f32.mrb[0].mxu0
    %v3050 = vadd.f32 0.0, %v3049
    %v3051 = vpop.f32.mrb[0].mxu0
    %v3052 = vpop.f32.mrb[0].mxu0
    %3053 = vdwg.mxu0
    %v3054 = vlaneseq
    %v3055 = vshrl.u32 %v3054, 7
    %v3056 = vsub.s32 0, %v3055
    %v3057 = vrot.slane %v3007, %v3056
    %v3058 = vlaneseq
    %v3059 = vshrl.u32 %v3058, 7
    %v3060 = vsub.s32 0, %v3059
    %v3061 = vrot.slane %v3009, %v3060
    %v3062 = vlaneseq
    %v3063 = vshrl.u32 %v3062, 7
    %v3064 = vsub.s32 0, %v3063
    %v3065 = vrot.slane %v3048, %v3064
    %v3066 = vlaneseq
    %v3067 = vshrl.u32 %v3066, 7
    %v3068 = vsub.s32 0, %v3067
    %v3069 = vrot.slane %v3050, %v3068
    %v3070 = vmul.f32 %v1507, %v3057
    %v3071 = vmul.f32 %v1509, %v3061
    %v3072 = vmul.f32 %v1560, %v3065
    %v3073 = vmul.f32 %v1562, %v3069
    %v3074 = vmul.f32 %v1511, %v3057
    %v3075 = vmul.f32 %v1513, %v3061
    %v3076 = vmul.f32 %v1564, %v3065
    %v3077 = vmul.f32 %v1566, %v3069
    %v3078 = vmul.f32 %v1517, %v3057
    %v3079 = vmul.f32 %v1519, %v3061
    %v3080 = vmul.f32 %v1570, %v3065
    %v3081 = vmul.f32 %v1572, %v3069
    %v3082 = vmul.f32 %v1521, %v3057
    %v3083 = vmul.f32 %v1523, %v3061
    %v3084 = vmul.f32 %v1574, %v3065
    %v3085 = vmul.f32 %v1576, %v3069
    %v3086 = vlaneseq
    %v3087 = vshrl.u32 %v3086, 7
    %v3088 = vsub.s32 2, %v3087
    %v3089 = vrot.slane %v3007, %v3088
    %v3090 = vlaneseq
    %v3091 = vshrl.u32 %v3090, 7
    %v3092 = vsub.s32 2, %v3091
    %v3093 = vrot.slane %v3009, %v3092
    %v3094 = vlaneseq
    %v3095 = vshrl.u32 %v3094, 7
    %v3096 = vsub.s32 2, %v3095
    %v3097 = vrot.slane %v3048, %v3096
    %v3098 = vlaneseq
    %v3099 = vshrl.u32 %v3098, 7
    %v3100 = vsub.s32 2, %v3099
    %v3101 = vrot.slane %v3050, %v3100
    %v3102 = vadd.f32 %v3070, %v3089
    %v3103 = vadd.f32 %v3071, %v3093
    %v3104 = vadd.f32 %v3072, %v3097
    %v3105 = vadd.f32 %v3073, %v3101
    %v3106 = vadd.f32 %v3074, %v3089
    %v3107 = vadd.f32 %v3075, %v3093
    %v3108 = vadd.f32 %v3076, %v3097
    %v3109 = vadd.f32 %v3077, %v3101
    %v3110 = vadd.f32 %v3078, %v3089
    %v3111 = vadd.f32 %v3079, %v3093
    %v3112 = vadd.f32 %v3080, %v3097
    %v3113 = vadd.f32 %v3081, %v3101
    %v3114 = vadd.f32 %v3082, %v3089
    %v3115 = vadd.f32 %v3083, %v3093
    %v3116 = vadd.f32 %v3084, %v3097
    %v3117 = vadd.f32 %v3085, %v3101
    %v3118 = vmax.f32 %v3102, 0.0
    %v3119 = vmax.f32 %v3103, 0.0
    %v3120 = vmax.f32 %v3104, 0.0
    %v3121 = vmax.f32 %v3105, 0.0
    %v3122 = vmax.f32 %v3106, 0.0
    %v3123 = vmax.f32 %v3107, 0.0
    %v3124 = vmax.f32 %v3108, 0.0
    %v3125 = vmax.f32 %v3109, 0.0
    %v3126 = vmax.f32 %v3110, 0.0
    %v3127 = vmax.f32 %v3111, 0.0
    %v3128 = vmax.f32 %v3112, 0.0
    %v3129 = vmax.f32 %v3113, 0.0
    %v3130 = vmax.f32 %v3114, 0.0
    %v3131 = vmax.f32 %v3115, 0.0
    %v3132 = vmax.f32 %v3116, 0.0
    %v3133 = vmax.f32 %v3117, 0.0
    %v3134 = vadd.f32 %v3118, %v3122
    %v3135 = vrot.slane %v3134, 4
    %v3136 = vadd.f32 %v3134, %v3135
    %v3137 = vrot.slane %v3136, 2
    %v3138 = vadd.f32 %v3136, %v3137
    %v3139 = vrot.slane %v3138, 1
    %v3140 = vadd.f32 %v3138, %v3139
    %v3141 = vadd.f32 %v3119, %v3123
    %v3142 = vrot.slane %v3141, 4
    %v3143 = vadd.f32 %v3141, %v3142
    %v3144 = vrot.slane %v3143, 2
    %v3145 = vadd.f32 %v3143, %v3144
    %v3146 = vrot.slane %v3145, 1
    %v3147 = vadd.f32 %v3145, %v3146
    %v3148 = vadd.f32 %v3120, %v3124
    %v3149 = vrot.slane %v3148, 4
    %v3150 = vadd.f32 %v3148, %v3149
    %v3151 = vrot.slane %v3150, 2
    %v3152 = vadd.f32 %v3150, %v3151
    %v3153 = vrot.slane %v3152, 1
    %v3154 = vadd.f32 %v3152, %v3153
    %v3155 = vadd.f32 %v3121, %v3125
    %v3156 = vrot.slane %v3155, 4
    %v3157 = vadd.f32 %v3155, %v3156
    %v3158 = vrot.slane %v3157, 2
    %v3159 = vadd.f32 %v3157, %v3158
    %v3160 = vrot.slane %v3159, 1
    %v3161 = vadd.f32 %v3159, %v3160
    %v3162 = vadd.f32 %v3126, %v3130
    %v3163 = vrot.slane %v3162, 4
    %v3164 = vadd.f32 %v3162, %v3163
    %v3165 = vrot.slane %v3164, 2
    %v3166 = vadd.f32 %v3164, %v3165
    %v3167 = vrot.slane %v3166, 1
    %v3168 = vadd.f32 %v3166, %v3167
    %v3169 = vadd.f32 %v3127, %v3131
    %v3170 = vrot.slane %v3169, 4
    %v3171 = vadd.f32 %v3169, %v3170
    %v3172 = vrot.slane %v3171, 2
    %v3173 = vadd.f32 %v3171, %v3172
    %v3174 = vrot.slane %v3173, 1
    %v3175 = vadd.f32 %v3173, %v3174
    %v3176 = vadd.f32 %v3128, %v3132
    %v3177 = vrot.slane %v3176, 4
    %v3178 = vadd.f32 %v3176, %v3177
    %v3179 = vrot.slane %v3178, 2
    %v3180 = vadd.f32 %v3178, %v3179
    %v3181 = vrot.slane %v3180, 1
    %v3182 = vadd.f32 %v3180, %v3181
    %v3183 = vadd.f32 %v3129, %v3133
    %v3184 = vrot.slane %v3183, 4
    %v3185 = vadd.f32 %v3183, %v3184
    %v3186 = vrot.slane %v3185, 2
    %v3187 = vadd.f32 %v3185, %v3186
    %v3188 = vrot.slane %v3187, 1
    %v3189 = vadd.f32 %v3187, %v3188
    %v3190 = vsel %vm608, %v3140, %v3168
    %v3191 = vsel %vm608, %v3147, %v3175
    %v3192 = vsel %vm608, %v3154, %v3182
    %v3193 = vsel %vm608, %v3161, %v3189
    %v3194 = vpack.c.bf16 %v3190, %v3190
    %v3195 = vpack.c.bf16 %v3191, %v3191
    %v3196 = vpack.c.bf16 %v3192, %v3192
    %v3197 = vpack.c.bf16 %v3193, %v3193
    %3198 = vmatprep.subr.bf16.mxu0 0
    %3199 = vmatpush1.bf16.msra.mxu0 %v2586
    %3200 = vmatprep.subr.bf16.mxu0 0
    %3201 = vmatpush1.bf16.msra.mxu0 %v2587
    %3202 = vmatprep.subr.bf16.mxu0 0
    %3203 = vmatpush1.bf16.msra.mxu0 %v2588
    %3204 = vmatprep.subr.bf16.mxu0 0
    %3205 = vmatpush1.bf16.msra.mxu0 %v2589
    %3206 = vmatprep.subr.bf16.mxu0 0
    %3207 = vmatpush1.bf16.msra.mxu0 %v2590
    %3208 = vmatprep.subr.bf16.mxu0 0
    %3209 = vmatpush1.bf16.msra.mxu0 %v2591
    %3210 = vmatprep.subr.bf16.mxu0 0
    %3211 = vmatpush1.bf16.msra.mxu0 %v2592
    %3212 = vmatprep.subr.bf16.mxu0 0
    %3213 = vmatpush1.bf16.msra.mxu0 %v2593
    %3214 = vmatprep.subr.bf16.mxu0 0
    %3215 = vmatpush1.bf16.msra.mxu0 %v2594
    %3216 = vmatprep.subr.bf16.mxu0 0
    %3217 = vmatpush1.bf16.msra.mxu0 %v2595
    %3218 = vmatprep.subr.bf16.mxu0 0
    %3219 = vmatpush1.bf16.msra.mxu0 %v2596
    %3220 = vmatprep.subr.bf16.mxu0 0
    %3221 = vmatpush1.bf16.msra.mxu0 %v2597
    %3222 = vmatprep.subr.bf16.mxu0 0
    %3223 = vmatpush1.bf16.msra.mxu0 %v2598
    %3224 = vmatprep.subr.bf16.mxu0 0
    %3225 = vmatpush1.bf16.msra.mxu0 %v2599
    %3226 = vmatprep.subr.bf16.mxu0 0
    %3227 = vmatpush1.bf16.msra.mxu0 %v2600
    %3228 = vmatprep.subr.bf16.mxu0 0
    %3229 = vmatpush1.bf16.msra.mxu0 %v2601
    %3230 = vmatprep.mubr.bf16.mxu0 %v3195
    %3231 = vmatmul.mubr.bf16.gmra.mrb[0].mxu0 %v3194
    %v3232 = vpop.f32.mrb[0].mxu0
    %v3233 = vadd.f32 0.0, %v3232
    %v3234 = vpop.f32.mrb[0].mxu0
    %v3235 = vpop.f32.mrb[0].mxu0
    %v3236 = vpop.f32.mrb[0].mxu0
    %3237 = vdwg.mxu0
    %3238 = vmatprep.subr.bf16.mxu0 0
    %3239 = vmatpush1.bf16.msra.mxu0 %v2602
    %3240 = vmatprep.subr.bf16.mxu0 0
    %3241 = vmatpush1.bf16.msra.mxu0 %v2603
    %3242 = vmatprep.subr.bf16.mxu0 0
    %3243 = vmatpush1.bf16.msra.mxu0 %v2604
    %3244 = vmatprep.subr.bf16.mxu0 0
    %3245 = vmatpush1.bf16.msra.mxu0 %v2605
    %3246 = vmatprep.subr.bf16.mxu0 0
    %3247 = vmatpush1.bf16.msra.mxu0 %v2606
    %3248 = vmatprep.subr.bf16.mxu0 0
    %3249 = vmatpush1.bf16.msra.mxu0 %v2607
    %3250 = vmatprep.subr.bf16.mxu0 0
    %3251 = vmatpush1.bf16.msra.mxu0 %v2608
    %3252 = vmatprep.subr.bf16.mxu0 0
    %3253 = vmatpush1.bf16.msra.mxu0 %v2609
    %3254 = vmatprep.subr.bf16.mxu0 0
    %3255 = vmatpush1.bf16.msra.mxu0 %v2610
    %3256 = vmatprep.subr.bf16.mxu0 0
    %3257 = vmatpush1.bf16.msra.mxu0 %v2611
    %3258 = vmatprep.subr.bf16.mxu0 0
    %3259 = vmatpush1.bf16.msra.mxu0 %v2612
    %3260 = vmatprep.subr.bf16.mxu0 0
    %3261 = vmatpush1.bf16.msra.mxu0 %v2613
    %3262 = vmatprep.subr.bf16.mxu0 0
    %3263 = vmatpush1.bf16.msra.mxu0 %v2614
    %3264 = vmatprep.subr.bf16.mxu0 0
    %3265 = vmatpush1.bf16.msra.mxu0 %v2615
    %3266 = vmatprep.subr.bf16.mxu0 0
    %3267 = vmatpush1.bf16.msra.mxu0 %v2616
    %3268 = vmatprep.subr.bf16.mxu0 0
    %3269 = vmatpush1.bf16.msra.mxu0 %v2617
    %3270 = vmatprep.mubr.bf16.mxu0 %v3197
    %3271 = vmatmul.mubr.bf16.gmra.mrb[0].mxu0 %v3196
    %v3272 = vpop.f32.mrb[0].mxu0
    %v3273 = vadd.f32 %v3233, %v3272
    %v3274 = vpop.f32.mrb[0].mxu0
    %v3275 = vpop.f32.mrb[0].mxu0
    %v3276 = vpop.f32.mrb[0].mxu0
    %3277 = vdwg.mxu0
    %v3278 = vmul.f32 %v3273, 0.00390625
    %v3279 = vld [vmem:[%s3 + $0x8] sm:$0xff]
    %v3280 = vld [vmem:[%s3 + $0x10] sm:$0xff]
    %v3281 = vld [vmem:[%s3 + $0x18] sm:$0xff]
    %v3282 = vld [vmem:[%s3 + $0x20] sm:$0xff]
    %v3283 = vld [vmem:[%s3 + $0x28] sm:$0xff]
    %v3284 = vld [vmem:[%s3 + $0x30] sm:$0xff]
    %v3285 = vld [vmem:[%s3 + $0x38] sm:$0xff]
    %v3286 = vld [vmem:[%s3 + $0x40] sm:$0xff]
    %v3287 = vld [vmem:[%s3 + $0x48] sm:$0x1]
    %v3288 = vld [vmem:[%s3 + $0x49] sm:$0x1]
    %v3289 = vlaneseq
    %v3290 = vshrl.u32 %v3289, 7
    %v3291 = vsub.s32 0, %v3290
    %v3292 = vrot.slane %v3287, %v3291
    %v3294 = vsel %vm2968, %v3278, 0
    %3296 = vmatprep.subr.mxu0 0.0
    %3297 = vmatpush1.msra.mxu0 %v3279
    %3298 = vmatprep.subr.mxu0 0.0
    %3299 = vmatpush1.msra.mxu0 %v3280
    %3300 = vmatprep.subr.mxu0 0.0
    %3301 = vmatpush1.msra.mxu0 %v3281
    %3302 = vmatprep.subr.mxu0 0.0
    %3303 = vmatpush1.msra.mxu0 %v3282
    %3304 = vmatprep.subr.mxu0 0.0
    %3305 = vmatpush1.msra.mxu0 0.0
    %3306 = vmatprep.subr.mxu0 0.0
    %3307 = vmatpush1.msra.mxu0 0.0
    %3308 = vmatprep.subr.mxu0 0.0
    %3309 = vmatpush1.msra.mxu0 0.0
    %3310 = vmatprep.subr.mxu0 0.0
    %3311 = vmatpush1.msra.mxu0 0.0
    %3312 = vmatprep.subr.mxu0 0.0
    %3313 = vmatpush1.msra.mxu0 0.0
    %3314 = vmatprep.subr.mxu0 0.0
    %3315 = vmatpush1.msra.mxu0 0.0
    %3316 = vmatprep.subr.mxu0 0.0
    %3317 = vmatpush1.msra.mxu0 0.0
    %3318 = vmatprep.subr.mxu0 0.0
    %3319 = vmatpush1.msra.mxu0 0.0
    %3320 = vmatprep.subr.mxu0 0.0
    %3321 = vmatpush1.msra.mxu0 0.0
    %3322 = vmatprep.subr.mxu0 0.0
    %3323 = vmatpush1.msra.mxu0 0.0
    %3324 = vmatprep.subr.mxu0 0.0
    %3325 = vmatpush1.msra.mxu0 0.0
    %3326 = vmatprep.subr.mxu0 0.0
    %3327 = vmatpush1.msra.mxu0 0.0
    %3328 = vmatprep.subr.mxu0 0.0
    %3329 = vmatpush1.msra.mxu0 0.0
    %3330 = vmatprep.subr.mxu0 0.0
    %3331 = vmatpush1.msra.mxu0 0.0
    %3332 = vmatprep.subr.mxu0 0.0
    %3333 = vmatpush1.msra.mxu0 0.0
    %3334 = vmatprep.subr.mxu0 0.0
    %3335 = vmatpush1.msra.mxu0 0.0
    %3336 = vmatprep.subr.mxu0 0.0
    %3337 = vmatpush1.msra.mxu0 0.0
    %3338 = vmatprep.subr.mxu0 0.0
    %3339 = vmatpush1.msra.mxu0 0.0
    %3340 = vmatprep.subr.mxu0 0.0
    %3341 = vmatpush1.msra.mxu0 0.0
    %3342 = vmatprep.subr.mxu0 0.0
    %3343 = vmatpush1.msra.mxu0 0.0
    %3344 = vmatprep.subr.mxu0 0.0
    %3345 = vmatpush1.msra.mxu0 0.0
    %3346 = vmatprep.subr.mxu0 0.0
    %3347 = vmatpush1.msra.mxu0 0.0
    %3348 = vmatprep.subr.mxu0 0.0
    %3349 = vmatpush1.msra.mxu0 0.0
    %3350 = vmatprep.subr.mxu0 0.0
    %3351 = vmatpush1.msra.mxu0 0.0
    %3352 = vmatprep.subr.mxu0 0.0
    %3353 = vmatpush1.msra.mxu0 0.0
    %3354 = vmatprep.subr.mxu0 0.0
    %3355 = vmatpush1.msra.mxu0 0.0
    %3356 = vmatprep.subr.mxu0 0.0
    %3357 = vmatpush1.msra.mxu0 0.0
    %3358 = vmatprep.subr.mxu0 0.0
    %3359 = vmatpush1.msra.mxu0 0.0
    %3360 = vmatprep.mubr.f32.mxu0 0.0
    %3361 = vmatmul.mubr.f32.gmra.mrb[0].mxu0 %v3294
    %v3362 = vpop.f32.mrb[0].mxu0
    %v3363 = vadd.f32 %v3292, %v3362
    %v3364 = vpop.f32.mrb[0].mxu0
    %3365 = vdwg.mxu0
    %v3366 = vmax.f32 %v3363, 0.0
    %v3367 = vlaneseq
    %v3368 = vshrl.u32 %v3367, 7
    %v3369 = vsub.s32 0, %v3368
    %v3370 = vrot.slane %v3288, %v3369
    %v3372 = vsel %vm2968, %v3366, 0
    %3374 = vmatprep.subr.mxu0 0.0
    %3375 = vmatpush1.msra.mxu0 %v3283
    %3376 = vmatprep.subr.mxu0 0.0
    %3377 = vmatpush1.msra.mxu0 %v3284
    %3378 = vmatprep.subr.mxu0 0.0
    %3379 = vmatpush1.msra.mxu0 %v3285
    %3380 = vmatprep.subr.mxu0 0.0
    %3381 = vmatpush1.msra.mxu0 %v3286
    %3382 = vmatprep.subr.mxu0 0.0
    %3383 = vmatpush1.msra.mxu0 0.0
    %3384 = vmatprep.subr.mxu0 0.0
    %3385 = vmatpush1.msra.mxu0 0.0
    %3386 = vmatprep.subr.mxu0 0.0
    %3387 = vmatpush1.msra.mxu0 0.0
    %3388 = vmatprep.subr.mxu0 0.0
    %3389 = vmatpush1.msra.mxu0 0.0
    %3390 = vmatprep.subr.mxu0 0.0
    %3391 = vmatpush1.msra.mxu0 0.0
    %3392 = vmatprep.subr.mxu0 0.0
    %3393 = vmatpush1.msra.mxu0 0.0
    %3394 = vmatprep.subr.mxu0 0.0
    %3395 = vmatpush1.msra.mxu0 0.0
    %3396 = vmatprep.subr.mxu0 0.0
    %3397 = vmatpush1.msra.mxu0 0.0
    %3398 = vmatprep.subr.mxu0 0.0
    %3399 = vmatpush1.msra.mxu0 0.0
    %3400 = vmatprep.subr.mxu0 0.0
    %3401 = vmatpush1.msra.mxu0 0.0
    %3402 = vmatprep.subr.mxu0 0.0
    %3403 = vmatpush1.msra.mxu0 0.0
    %3404 = vmatprep.subr.mxu0 0.0
    %3405 = vmatpush1.msra.mxu0 0.0
    %3406 = vmatprep.subr.mxu0 0.0
    %3407 = vmatpush1.msra.mxu0 0.0
    %3408 = vmatprep.subr.mxu0 0.0
    %3409 = vmatpush1.msra.mxu0 0.0
    %3410 = vmatprep.subr.mxu0 0.0
    %3411 = vmatpush1.msra.mxu0 0.0
    %3412 = vmatprep.subr.mxu0 0.0
    %3413 = vmatpush1.msra.mxu0 0.0
    %3414 = vmatprep.subr.mxu0 0.0
    %3415 = vmatpush1.msra.mxu0 0.0
    %3416 = vmatprep.subr.mxu0 0.0
    %3417 = vmatpush1.msra.mxu0 0.0
    %3418 = vmatprep.subr.mxu0 0.0
    %3419 = vmatpush1.msra.mxu0 0.0
    %3420 = vmatprep.subr.mxu0 0.0
    %3421 = vmatpush1.msra.mxu0 0.0
    %3422 = vmatprep.subr.mxu0 0.0
    %3423 = vmatpush1.msra.mxu0 0.0
    %3424 = vmatprep.subr.mxu0 0.0
    %3425 = vmatpush1.msra.mxu0 0.0
    %3426 = vmatprep.subr.mxu0 0.0
    %3427 = vmatpush1.msra.mxu0 0.0
    %3428 = vmatprep.subr.mxu0 0.0
    %3429 = vmatpush1.msra.mxu0 0.0
    %3430 = vmatprep.subr.mxu0 0.0
    %3431 = vmatpush1.msra.mxu0 0.0
    %3432 = vmatprep.subr.mxu0 0.0
    %3433 = vmatpush1.msra.mxu0 0.0
    %3434 = vmatprep.subr.mxu0 0.0
    %3435 = vmatpush1.msra.mxu0 0.0
    %3436 = vmatprep.subr.mxu0 0.0
    %3437 = vmatpush1.msra.mxu0 0.0
    %3438 = vmatprep.mubr.f32.mxu0 0.0
    %3439 = vmatmul.mubr.f32.gmra.mrb[0].mxu0 %v3372
    %v3440 = vpop.f32.mrb[0].mxu0
    %v3441 = vadd.f32 %v3370, %v3440
    %v3442 = vpop.f32.mrb[0].mxu0
    %3443 = vdwg.mxu0
    %v3444 = vxor.u32 %v3441, 2147483648
    %v3445 = vmul.f32 %v3444, 1.442695
    %v3446 = vpow.pop %v3445
    %v3447 = vadd.f32 %v3446, 1.0
    %v3448 = vrcp.pop %v3447
    %v3449 = vmul.f32 1.0, %v3448
    %v3450 = vpack.c.bf16 %v3449, %v3449
    %v3452 = vsel %vm2968, %v3450, 0
    %3454 = vmatprep.subr.bf16.mxu0 %v2718
    %3455 = vmatpush1.bf16.msra.mxu0 %v2717
    %3456 = vmatprep.subr.bf16.mxu0 %v2722
    %3457 = vmatpush1.bf16.msra.mxu0 %v2721
    %3458 = vmatprep.subr.bf16.mxu0 0
    %3459 = vmatpush1.bf16.msra.mxu0 0
    %3460 = vmatprep.subr.bf16.mxu0 0
    %3461 = vmatpush1.bf16.msra.mxu0 0
    %3462 = vmatprep.subr.bf16.mxu0 0
    %3463 = vmatpush1.bf16.msra.mxu0 0
    %3464 = vmatprep.subr.bf16.mxu0 0
    %3465 = vmatpush1.bf16.msra.mxu0 0
    %3466 = vmatprep.subr.bf16.mxu0 0
    %3467 = vmatpush1.bf16.msra.mxu0 0
    %3468 = vmatprep.subr.bf16.mxu0 0
    %3469 = vmatpush1.bf16.msra.mxu0 0
    %3470 = vmatprep.subr.bf16.mxu0 0
    %3471 = vmatpush1.bf16.msra.mxu0 0
    %3472 = vmatprep.subr.bf16.mxu0 0
    %3473 = vmatpush1.bf16.msra.mxu0 0
    %3474 = vmatprep.subr.bf16.mxu0 0
    %3475 = vmatpush1.bf16.msra.mxu0 0
    %3476 = vmatprep.subr.bf16.mxu0 0
    %3477 = vmatpush1.bf16.msra.mxu0 0
    %3478 = vmatprep.subr.bf16.mxu0 0
    %3479 = vmatpush1.bf16.msra.mxu0 0
    %3480 = vmatprep.subr.bf16.mxu0 0
    %3481 = vmatpush1.bf16.msra.mxu0 0
    %3482 = vmatprep.subr.bf16.mxu0 0
    %3483 = vmatpush1.bf16.msra.mxu0 0
    %3484 = vmatprep.subr.bf16.mxu0 0
    %3485 = vmatpush1.bf16.msra.mxu0 0
    %3486 = vmatprep.mubr.bf16.mxu0 0
    %3487 = vmatmul.mubr.bf16.gmra.mrb[0].mxu0 %v3452
    %v3488 = vpop.f32.mrb[0].mxu0
    %v3489 = vadd.f32 0.0, %v3488
    %v3490 = vpop.f32.mrb[0].mxu0
    %v3491 = vadd.f32 0.0, %v3490
    %v3492 = vpop.f32.mrb[0].mxu0
    %v3493 = vpop.f32.mrb[0].mxu0
    %3494 = vdwg.mxu0
    %3495 = vmatprep.subr.bf16.mxu0 %v2720
    %3496 = vmatpush1.bf16.msra.mxu0 %v2719
    %3497 = vmatprep.subr.bf16.mxu0 %v2724
    %3498 = vmatpush1.bf16.msra.mxu0 %v2723
    %3499 = vmatprep.subr.bf16.mxu0 0
    %3500 = vmatpush1.bf16.msra.mxu0 0
    %3501 = vmatprep.subr.bf16.mxu0 0
    %3502 = vmatpush1.bf16.msra.mxu0 0
    %3503 = vmatprep.subr.bf16.mxu0 0
    %3504 = vmatpush1.bf16.msra.mxu0 0
    %3505 = vmatprep.subr.bf16.mxu0 0
    %3506 = vmatpush1.bf16.msra.mxu0 0
    %3507 = vmatprep.subr.bf16.mxu0 0
    %3508 = vmatpush1.bf16.msra.mxu0 0
    %3509 = vmatprep.subr.bf16.mxu0 0
    %3510 = vmatpush1.bf16.msra.mxu0 0
    %3511 = vmatprep.subr.bf16.mxu0 0
    %3512 = vmatpush1.bf16.msra.mxu0 0
    %3513 = vmatprep.subr.bf16.mxu0 0
    %3514 = vmatpush1.bf16.msra.mxu0 0
    %3515 = vmatprep.subr.bf16.mxu0 0
    %3516 = vmatpush1.bf16.msra.mxu0 0
    %3517 = vmatprep.subr.bf16.mxu0 0
    %3518 = vmatpush1.bf16.msra.mxu0 0
    %3519 = vmatprep.subr.bf16.mxu0 0
    %3520 = vmatpush1.bf16.msra.mxu0 0
    %3521 = vmatprep.subr.bf16.mxu0 0
    %3522 = vmatpush1.bf16.msra.mxu0 0
    %3523 = vmatprep.subr.bf16.mxu0 0
    %3524 = vmatpush1.bf16.msra.mxu0 0
    %3525 = vmatprep.subr.bf16.mxu0 0
    %3526 = vmatpush1.bf16.msra.mxu0 0
    %3527 = vmatprep.mubr.bf16.mxu0 0
    %3528 = vmatmul.mubr.bf16.gmra.mrb[0].mxu0 %v3452
    %v3529 = vpop.f32.mrb[0].mxu0
    %v3530 = vadd.f32 0.0, %v3529
    %v3531 = vpop.f32.mrb[0].mxu0
    %v3532 = vadd.f32 0.0, %v3531
    %v3533 = vpop.f32.mrb[0].mxu0
    %v3534 = vpop.f32.mrb[0].mxu0
    %3535 = vdwg.mxu0
    %v3536 = vld [vmem:[#allocation3] sm:$0xff]
    %v3537 = vld [vmem:[#allocation3 + $0x8] sm:$0xff]
    %v3538 = vld [vmem:[#allocation3 + $0x10] sm:$0xff]
    %v3539 = vld [vmem:[#allocation3 + $0x18] sm:$0xff]
    %v3540 = vld [vmem:[#allocation3 + $0x20] sm:$0xff]
    %v3541 = vld [vmem:[#allocation3 + $0x28] sm:$0xff]
    %v3542 = vld [vmem:[#allocation3 + $0x30] sm:$0xff]
    %v3543 = vld [vmem:[#allocation3 + $0x38] sm:$0xff]
    %v3544 = vlaneseq
    %v3545 = vshrl.u32 %v3544, 7
    %v3546 = vsub.s32 1, %v3545
    %v3547 = vrot.slane %v3007, %v3546
    %v3548 = vlaneseq
    %v3549 = vshrl.u32 %v3548, 7
    %v3550 = vsub.s32 1, %v3549
    %v3551 = vrot.slane %v3009, %v3550
    %v3552 = vlaneseq
    %v3553 = vshrl.u32 %v3552, 7
    %v3554 = vsub.s32 1, %v3553
    %v3555 = vrot.slane %v3048, %v3554
    %v3556 = vlaneseq
    %v3557 = vshrl.u32 %v3556, 7
    %v3558 = vsub.s32 1, %v3557
    %v3559 = vrot.slane %v3050, %v3558
    %v3560 = vmul.f32 %v3536, %v3547
    %v3561 = vmul.f32 %v3537, %v3551
    %v3562 = vmul.f32 %v3538, %v3555
    %v3563 = vmul.f32 %v3539, %v3559
    %v3564 = vmul.f32 %v3540, %v3547
    %v3565 = vmul.f32 %v3541, %v3551
    %v3566 = vmul.f32 %v3542, %v3555
    %v3567 = vmul.f32 %v3543, %v3559
    %v3568 = vlaneseq
    %v3569 = vshrl.u32 %v3568, 7
    %v3570 = vsub.s32 3, %v3569
    %v3571 = vrot.slane %v3007, %v3570
    %v3572 = vlaneseq
    %v3573 = vshrl.u32 %v3572, 7
    %v3574 = vsub.s32 3, %v3573
    %v3575 = vrot.slane %v3009, %v3574
    %v3576 = vlaneseq
    %v3577 = vshrl.u32 %v3576, 7
    %v3578 = vsub.s32 3, %v3577
    %v3579 = vrot.slane %v3048, %v3578
    %v3580 = vlaneseq
    %v3581 = vshrl.u32 %v3580, 7
    %v3582 = vsub.s32 3, %v3581
    %v3583 = vrot.slane %v3050, %v3582
    %v3584 = vadd.f32 %v3560, %v3571
    %v3585 = vadd.f32 %v3561, %v3575
    %v3586 = vadd.f32 %v3562, %v3579
    %v3587 = vadd.f32 %v3563, %v3583
    %v3588 = vadd.f32 %v3564, %v3571
    %v3589 = vadd.f32 %v3565, %v3575
    %v3590 = vadd.f32 %v3566, %v3579
    %v3591 = vadd.f32 %v3567, %v3583
    %v3592 = vlaneseq
    %v3593 = vshrl.u32 %v3592, 7
    %v3594 = vsub.s32 0, %v3593
    %v3595 = vrot.slane %v3489, %v3594
    %v3596 = vlaneseq
    %v3597 = vshrl.u32 %v3596, 7
    %v3598 = vsub.s32 0, %v3597
    %v3599 = vrot.slane %v3491, %v3598
    %v3600 = vlaneseq
    %v3601 = vshrl.u32 %v3600, 7
    %v3602 = vsub.s32 0, %v3601
    %v3603 = vrot.slane %v3530, %v3602
    %v3604 = vlaneseq
    %v3605 = vshrl.u32 %v3604, 7
    %v3606 = vsub.s32 0, %v3605
    %v3607 = vrot.slane %v3532, %v3606
    %v3608 = vmul.f32 %v3118, %v3595
    %v3609 = vmul.f32 %v3119, %v3599
    %v3610 = vmul.f32 %v3120, %v3603
    %v3611 = vmul.f32 %v3121, %v3607
    %v3612 = vmul.f32 %v3122, %v3595
    %v3613 = vmul.f32 %v3123, %v3599
    %v3614 = vmul.f32 %v3124, %v3603
    %v3615 = vmul.f32 %v3125, %v3607
    %v3616 = vadd.f32 %v3608, %v3584
    %v3617 = vadd.f32 %v3609, %v3585
    %v3618 = vadd.f32 %v3610, %v3586
    %v3619 = vadd.f32 %v3611, %v3587
    %v3620 = vadd.f32 %v3612, %v3588
    %v3621 = vadd.f32 %v3613, %v3589
    %v3622 = vadd.f32 %v3614, %v3590
    %v3623 = vadd.f32 %v3615, %v3591
    %v3624 = vmax.f32 %v3616, 0.0
    %v3625 = vmax.f32 %v3617, 0.0
    %v3626 = vmax.f32 %v3618, 0.0
    %v3627 = vmax.f32 %v3619, 0.0
    %v3628 = vmax.f32 %v3620, 0.0
    %v3629 = vmax.f32 %v3621, 0.0
    %v3630 = vmax.f32 %v3622, 0.0
    %v3631 = vmax.f32 %v3623, 0.0
    %3632 = vst [vmem:[#allocation8] sm:$0xff] %v3624
    %3633 = vst [vmem:[#allocation8 + $0x8] sm:$0xff] %v3625
    %3634 = vst [vmem:[#allocation8 + $0x10] sm:$0xff] %v3626
    %3635 = vst [vmem:[#allocation8 + $0x18] sm:$0xff] %v3627
    %3636 = vst [vmem:[#allocation8 + $0x20] sm:$0xff] %v3628
    %3637 = vst [vmem:[#allocation8 + $0x28] sm:$0xff] %v3629
    %3638 = vst [vmem:[#allocation8 + $0x30] sm:$0xff] %v3630
    %3639 = vst [vmem:[#allocation8 + $0x38] sm:$0xff] %v3631
    %v3640 = vld [vmem:[#allocation3 + $0x40] sm:$0xff]
    %v3641 = vld [vmem:[#allocation3 + $0x48] sm:$0xff]
    %v3642 = vld [vmem:[#allocation3 + $0x50] sm:$0xff]
    %v3643 = vld [vmem:[#allocation3 + $0x58] sm:$0xff]
    %v3644 = vld [vmem:[#allocation3 + $0x60] sm:$0xff]
    %v3645 = vld [vmem:[#allocation3 + $0x68] sm:$0xff]
    %v3646 = vld [vmem:[#allocation3 + $0x70] sm:$0xff]
    %v3647 = vld [vmem:[#allocation3 + $0x78] sm:$0xff]
    %v3648 = vmul.f32 %v3640, %v3547
    %v3649 = vmul.f32 %v3641, %v3551
    %v3650 = vmul.f32 %v3642, %v3555
    %v3651 = vmul.f32 %v3643, %v3559
    %v3652 = vmul.f32 %v3644, %v3547
    %v3653 = vmul.f32 %v3645, %v3551
    %v3654 = vmul.f32 %v3646, %v3555
    %v3655 = vmul.f32 %v3647, %v3559
    %v3656 = vadd.f32 %v3648, %v3571
    %v3657 = vadd.f32 %v3649, %v3575
    %v3658 = vadd.f32 %v3650, %v3579
    %v3659 = vadd.f32 %v3651, %v3583
    %v3660 = vadd.f32 %v3652, %v3571
    %v3661 = vadd.f32 %v3653, %v3575
    %v3662 = vadd.f32 %v3654, %v3579
    %v3663 = vadd.f32 %v3655, %v3583
    %v3664 = vlaneseq
    %v3665 = vshrl.u32 %v3664, 7
    %v3666 = vsub.s32 1, %v3665
    %v3667 = vrot.slane %v3489, %v3666
    %v3668 = vlaneseq
    %v3669 = vshrl.u32 %v3668, 7
    %v3670 = vsub.s32 1, %v3669
    %v3671 = vrot.slane %v3491, %v3670
    %v3672 = vlaneseq
    %v3673 = vshrl.u32 %v3672, 7
    %v3674 = vsub.s32 1, %v3673
    %v3675 = vrot.slane %v3530, %v3674
    %v3676 = vlaneseq
    %v3677 = vshrl.u32 %v3676, 7
    %v3678 = vsub.s32 1, %v3677
    %v3679 = vrot.slane %v3532, %v3678
    %v3680 = vmul.f32 %v3126, %v3667
    %v3681 = vmul.f32 %v3127, %v3671
    %v3682 = vmul.f32 %v3128, %v3675
    %v3683 = vmul.f32 %v3129, %v3679
    %v3684 = vmul.f32 %v3130, %v3667
    %v3685 = vmul.f32 %v3131, %v3671
    %v3686 = vmul.f32 %v3132, %v3675
    %v3687 = vmul.f32 %v3133, %v3679
    %v3688 = vadd.f32 %v3680, %v3656
    %v3689 = vadd.f32 %v3681, %v3657
    %v3690 = vadd.f32 %v3682, %v3658
    %v3691 = vadd.f32 %v3683, %v3659
    %v3692 = vadd.f32 %v3684, %v3660
    %v3693 = vadd.f32 %v3685, %v3661
    %v3694 = vadd.f32 %v3686, %v3662
    %v3695 = vadd.f32 %v3687, %v3663
    %v3696 = vmax.f32 %v3688, 0.0
    %v3697 = vmax.f32 %v3689, 0.0
    %v3698 = vmax.f32 %v3690, 0.0
    %v3699 = vmax.f32 %v3691, 0.0
    %v3700 = vmax.f32 %v3692, 0.0
    %v3701 = vmax.f32 %v3693, 0.0
    %v3702 = vmax.f32 %v3694, 0.0
    %v3703 = vmax.f32 %v3695, 0.0
    %3704 = vst [vmem:[#allocation8 + $0x40] sm:$0xff] %v3696
    %3705 = vst [vmem:[#allocation8 + $0x48] sm:$0xff] %v3697
    %3706 = vst [vmem:[#allocation8 + $0x50] sm:$0xff] %v3698
    %3707 = vst [vmem:[#allocation8 + $0x58] sm:$0xff] %v3699
    %3708 = vst [vmem:[#allocation8 + $0x60] sm:$0xff] %v3700
    %3709 = vst [vmem:[#allocation8 + $0x68] sm:$0xff] %v3701
    %3710 = vst [vmem:[#allocation8 + $0x70] sm:$0xff] %v3702
    %3711 = vst [vmem:[#allocation8 + $0x78] sm:$0xff] %v3703
    // Predicated region
    $region18: #{tpu_custom_call.1} parent=1 // pred_check
      _
    $region19: #{tpu_custom_call.1} parent=1 // pred_check_branch
      %3713 = sbr.rel (0) target = $region21
    $region20: #{tpu_custom_call.1} parent=1 // pred_region
      %s3715 = ssub.s32 2048, 2048
      %3716 = vsyncadd [#allocation7], %s3715
      %s3717 = sshll.u32 [#allocation8], 4
      %s3718 = int_to_ptr.vmem [resolvable:$true] %s3717
      %3723 = dma.vmem_to_hbm [thread:$0]  %s3718, 2048, %s4, [#allocation7], 512, 512, 32
    $region21: #{tpu_custom_call.1} parent=1 // pred_fallthru
      _
    // Predicated region
    $region22: #{tpu_custom_call.1} parent=1 // pred_check
      _
    $region23: #{tpu_custom_call.1} parent=1 // pred_check_branch
      %3725 = sbr.rel (0) target = $region25
    $region24: #{tpu_custom_call.1} parent=1 // pred_region
      %3726 = dma.done [#allocation7], 2048
    $region25: #{tpu_custom_call.1} parent=1 // pred_fallthru
      _
    %3727 = vsyncpa [#allocation6], 1
    %3728 = vsyncpa [#allocation7], 1
  %3729 = vsyncmov [#allocation4]
  %s3730 = vpop.sfrf %3729
  %p3731 = scmp.eq.s32.totalorder %s3730, 0
  %p3732 = pneg %p3731
  %3734 = shalt.err (%p3732)
  %s3735 = scalar_lea.sflag [#allocation4], 1
  %3736 = vsyncmov %s3735
  %s3737 = vpop.sfrf %3736
  %p3738 = scmp.eq.s32.totalorder %s3737, 0
  %p3739 = pneg %p3738
  %3741 = shalt.err (%p3739)

</llo_original>
